<compile_context>
chip_gen: v5e
topology: v5e:2x2
jax: 0.10.0
libtpu: 0.0.40
codegen_flags: <defaults>
</compile_context>

<pallas_src>
import jax
import jax.numpy as jnp
from jax import lax
from jax.experimental import pallas as pl
from jax.experimental.pallas import tpu as pltpu

N, CIN, H, W = 1, 160, 7, 7
COUT = 960
COUT_PAD = 1024          # pad channels so every lane tile is full
CT = 512                 # channels per grid step -> grid=(2,)
SUB = 128                # lane-dense sub-tile handled per unrolled inner iteration
SUBS = CT // SUB         # 4
HW = H * W               # 49 flattened spatial positions
PAD = W + 1              # vertical halo rows: covers all |flat shift| <= W+1
EPS = 1e-5


def fused_kernel(x_ref, w1_ref, gamma_ref, beta_ref, wd_ref, o_ref, zp_ref):
    # Zero the vertical halo rows once per grid step; the activation rows
    # [PAD, PAD+HW) are rewritten by every channel sub-tile below.
    zp_ref[0:PAD, :] = jnp.zeros((PAD, SUB), jnp.float32)
    zp_ref[PAD + HW:PAD + HW + PAD, :] = jnp.zeros((PAD, SUB), jnp.float32)

    # Column-validity masks in OUTPUT coordinates (built once, reused by all
    # sub-tiles): a kw==0 tap reads column w-1 (invalid at w==0); a kw==2 tap
    # reads column w+1 (invalid at w==W-1).
    w_idx = lax.broadcasted_iota(jnp.int32, (HW, SUB), 0) % W
    left_ok = w_idx != 0
    right_ok = w_idx != (W - 1)

    x = x_ref[...]                                            # (49, 160), load once
    inv_n = 1.0 / HW

    for t in range(SUBS):                                     # unrolled sub-tiles
        c0 = t * SUB

        # ---- 1x1 conv on the MXU: (49,160) @ (160,128) -> (49,128) f32 ----
        y = jnp.dot(x, w1_ref[:, c0:c0 + SUB],
                    preferred_element_type=jnp.float32)

        # ---- BatchNorm2d (training-mode biased batch stats), two-pass ----
        mean = jnp.sum(y, axis=0, keepdims=True) * inv_n      # (1,128)
        yc = y - mean
        var = jnp.sum(yc * yc, axis=0, keepdims=True) * inv_n
        scale = gamma_ref[0:1, c0:c0 + SUB] * lax.rsqrt(var + EPS)
        z = yc * scale + beta_ref[0:1, c0:c0 + SUB]

        # ---- ReLU6, parked in the zero-haloed VMEM buffer ----
        zp_ref[PAD:PAD + HW, :] = jnp.clip(z, 0.0, 6.0)

        # ---- depthwise 3x3, stride 1, pad 1: 9 shifted MACs from VMEM ----
        # flat index s = h*W + w; tap (kh, kw) reads activation at s + d,
        # d = (kh-1)*W + (kw-1). Vertical OOB hits the zero halo rows;
        # horizontal wrap is killed by the output-coordinate column masks.
        taps = wd_ref[:, c0:c0 + SUB]                         # (9,128), loaded once
        acc = jnp.zeros((HW, SUB), jnp.float32)
        for kh in range(3):
            for kw in range(3):
                d = (kh - 1) * W + (kw - 1)
                src = zp_ref[PAD + d:PAD + d + HW, :]         # (49,128) VMEM load
                if kw == 0:
                    src = jnp.where(left_ok, src, 0.0)
                elif kw == 2:
                    src = jnp.where(right_ok, src, 0.0)
                acc = acc + src * taps[kh * 3 + kw:kh * 3 + kw + 1, :]
        o_ref[:, c0:c0 + SUB] = acc


def prepare_weights(w1_oihw, gamma, beta, wd_oihw):
    """One-time, offline layout transform (NOT part of the per-call hot path)."""
    pad_c = COUT_PAD - COUT
    w1_p = jnp.pad(w1_oihw.reshape(COUT, CIN).T, ((0, 0), (0, pad_c)))   # (160,1024)
    wd_p = jnp.pad(wd_oihw.reshape(COUT, 9).T, ((0, 0), (0, pad_c)))     # (9,1024)
    gamma_p = jnp.pad(gamma.reshape(1, COUT), ((0, 0), (0, pad_c)))      # (1,1024)
    beta_p = jnp.pad(beta.reshape(1, COUT), ((0, 0), (0, pad_c)))        # (1,1024)
    return w1_p, gamma_p, beta_p, wd_p


@jax.jit
def run_prepared(x_nchw, w1_p, gamma_p, beta_p, wd_p):
    # Hot path: only the unavoidable NCHW <-> flattened-HWC glue + the kernel.
    x_flat = jnp.transpose(x_nchw[0], (1, 2, 0)).reshape(HW, CIN)        # (49,160)

    out_flat = pl.pallas_call(
        fused_kernel,
        out_shape=jax.ShapeDtypeStruct((HW, COUT_PAD), jnp.float32),
        grid_spec=pltpu.PrefetchScalarGridSpec(
            num_scalar_prefetch=0,
            grid=(COUT_PAD // CT,),                         # (2,)
            in_specs=[
                pl.BlockSpec((HW, CIN), lambda j: (0, 0)),  # x reused every step
                pl.BlockSpec((CIN, CT), lambda j: (0, j)),  # 1x1 weight tile
                pl.BlockSpec((1, CT), lambda j: (0, j)),    # gamma tile
                pl.BlockSpec((1, CT), lambda j: (0, j)),    # beta tile
                pl.BlockSpec((9, CT), lambda j: (0, j)),    # depthwise taps tile
            ],
            out_specs=pl.BlockSpec((HW, CT), lambda j: (0, j)),
            scratch_shapes=[pltpu.VMEM((PAD + HW + PAD, SUB), jnp.float32)],
        ),
        compiler_params=pltpu.CompilerParams(
            dimension_semantics=("parallel",)),
    )(x_flat, w1_p, gamma_p, beta_p, wd_p)

    out_hwc = out_flat[:, :COUT].reshape(H, W, COUT)
    return jnp.transpose(out_hwc, (2, 0, 1))[None]           # (1, 960, 7, 7)


def run_module(x_nchw, w1_oihw, gamma, beta, wd_oihw):
    w1_p, gamma_p, beta_p, wd_p = prepare_weights(w1_oihw, gamma, beta, wd_oihw)
    return run_prepared(x_nchw, w1_p, gamma_p, beta_p, wd_p)


def ref_forward(x, w1, gamma, beta, wd):
    # pure-JAX reference mirroring the PyTorch module (training-mode BN)
    y = jax.lax.conv_general_dilated(
        x, w1, (1, 1), "VALID", dimension_numbers=("NCHW", "OIHW", "NCHW"))
    mean = y.mean(axis=(0, 2, 3), keepdims=True)
    var = y.var(axis=(0, 2, 3), keepdims=True)  # biased
    z = gamma[None, :, None, None] * (y - mean) / jnp.sqrt(var + EPS) \
        + beta[None, :, None, None]
    z = jnp.clip(z, 0.0, 6.0)
    return jax.lax.conv_general_dilated(
        z, wd, (1, 1), ((1, 1), (1, 1)),
        dimension_numbers=("NCHW", "OIHW", "NCHW"),
        feature_group_count=COUT)
    # TODO(synk): BatchNorm running_mean/var buffer updates (a module side-effect,
    # not part of the returned tensor) are not reproduced.


if __name__ == "__main__":
    key = jax.random.PRNGKey(0)
    kx, kw1, kg, kb, kwd = jax.random.split(key, 5)

    x = jax.random.normal(kx, (N, CIN, H, W), dtype=jnp.float32)
    w1 = jax.random.normal(kw1, (COUT, CIN, 1, 1), dtype=jnp.float32) * 0.1
    gamma = jax.random.uniform(kg, (COUT,), dtype=jnp.float32, minval=0.5, maxval=1.5)
    beta = jax.random.normal(kb, (COUT,), dtype=jnp.float32) * 0.1
    wd = jax.random.normal(kwd, (COUT, 1, 3, 3), dtype=jnp.float32) * 0.1

    out = jax.block_until_ready(run_module(x, w1, gamma, beta, wd))
    assert out.shape == (1, COUT, H, W), out.shape

    ref = jax.block_until_ready(ref_forward(x, w1, gamma, beta, wd))
    assert jnp.allclose(out, ref, atol=2e-3, rtol=2e-3), \
        float(jnp.max(jnp.abs(out - ref)))

    print("KERNEL_OK")
</pallas_src>

<mosaic_0001>
module attributes {stable_mosaic.version = 11 : i64} {
  func.func @fused_kernel(%arg0: i32, %arg1: memref<49x160xf32, #tpu.memory_space<vmem>>, %arg2: memref<160x512xf32, #tpu.memory_space<vmem>>, %arg3: memref<1x512xf32, #tpu.memory_space<vmem>>, %arg4: memref<1x512xf32, #tpu.memory_space<vmem>>, %arg5: memref<9x512xf32, #tpu.memory_space<vmem>>, %arg6: memref<49x512xf32, #tpu.memory_space<vmem>>, %arg7: memref<65x128xf32, #tpu.memory_space<vmem>>) attributes {dimension_semantics = [#tpu.dimension_semantics<parallel>], iteration_bounds = array<i64: 2>, scalar_prefetch = 0 : i64, scratch_operands = 1 : i64, tpu.core_type = #tpu.core_type<tc>, window_params = [{pipeline_mode = #tpu.pipeline_mode<synchronous>, transform_indices = @transform_0, window_bounds = array<i64: 49, 160>}, {transform_indices = @transform_1, window_bounds = array<i64: 160, 512>}, {transform_indices = @transform_2, window_bounds = array<i64: 1, 512>}, {transform_indices = @transform_3, window_bounds = array<i64: 1, 512>}, {transform_indices = @transform_4, window_bounds = array<i64: 9, 512>}, {transform_indices = @transform_5, window_bounds = array<i64: 49, 512>}]} {
    %cst = arith.constant 0.000000e+00 : f32
    %0 = vector.broadcast %cst : f32 to vector<8x128xf32>
    %c0 = arith.constant 0 : index
    %c0_0 = arith.constant 0 : index
    %1 = vector.load %arg7[%c0, %c0_0] : memref<65x128xf32, #tpu.memory_space<vmem>>, vector<8x128xf32>
    tpu.vector_store %arg7[%c0, %c0_0], %0 {strides = array<i32>} : memref<65x128xf32, #tpu.memory_space<vmem>>, vector<8x128xf32>,
    %cst_1 = arith.constant 0.000000e+00 : f32
    %2 = vector.broadcast %cst_1 : f32 to vector<8x128xf32>
    %c57 = arith.constant 57 : index
    %c0_2 = arith.constant 0 : index
    %3 = vector.load %arg7[%c57, %c0_2] : memref<65x128xf32, #tpu.memory_space<vmem>>, vector<8x128xf32>
    tpu.vector_store %arg7[%c57, %c0_2], %2 {strides = array<i32>} : memref<65x128xf32, #tpu.memory_space<vmem>>, vector<8x128xf32>,
    %4 = tpu.iota {dimensions = array<i32: 0>} : vector<49x128xi32>
    %c7_i32 = arith.constant 7 : i32
    %c0_i32 = arith.constant 0 : i32
    %5 = arith.cmpi eq, %c7_i32, %c0_i32 : i32
    %c1_i32 = arith.constant 1 : i32
    %6 = arith.select %5, %c1_i32, %c7_i32 : i32
    %7 = vector.broadcast %6 : i32 to vector<49x128xi32>
    %8 = arith.remsi %4, %7 : vector<49x128xi32>
    %c0_i32_3 = arith.constant 0 : i32
    %9 = vector.broadcast %c0_i32_3 : i32 to vector<49x128xi32>
    %10 = arith.cmpi ne, %8, %9 : vector<49x128xi32>
    %c0_i32_4 = arith.constant 0 : i32
    %11 = vector.broadcast %c0_i32_4 : i32 to vector<49x128xi32>
    %12 = arith.cmpi slt, %8, %11 : vector<49x128xi32>
    %c0_i32_5 = arith.constant 0 : i32
    %13 = arith.cmpi slt, %6, %c0_i32_5 : i32
    %14 = vector.broadcast %13 : i1 to vector<49x128xi1>
    %15 = vector.broadcast %14 : vector<49x128xi1> to vector<49x128xi1>
    %16 = arith.xori %12, %15 : vector<49x128xi1>
    %17 = arith.andi %16, %10 : vector<49x128xi1>
    %18 = vector.broadcast %6 : i32 to vector<49x128xi32>
    %19 = arith.addi %8, %18 : vector<49x128xi32>
    %20 = arith.select %17, %19, %8 : vector<49x128xi1>, vector<49x128xi32>
    %c0_i32_6 = arith.constant 0 : i32
    %21 = vector.broadcast %c0_i32_6 : i32 to vector<49x128xi32>
    %22 = arith.cmpi ne, %20, %21 : vector<49x128xi32>
    %c6_i32 = arith.constant 6 : i32
    %23 = vector.broadcast %c6_i32 : i32 to vector<49x128xi32>
    %24 = arith.cmpi ne, %20, %23 : vector<49x128xi32>
    %c0_7 = arith.constant 0 : index
    %c0_8 = arith.constant 0 : index
    %25 = vector.load %arg1[%c0_7, %c0_8] : memref<49x160xf32, #tpu.memory_space<vmem>>, vector<49x160xf32>
    %c0_9 = arith.constant 0 : index
    %c0_10 = arith.constant 0 : index
    %26 = vector.load %arg2[%c0_9, %c0_10] : memref<160x512xf32, #tpu.memory_space<vmem>>, vector<160x128xf32>
    %cst_11 = arith.constant dense<0.000000e+00> : vector<49x128xf32>
    %27 = tpu.matmul %25, %26, %cst_11 {dimension_numbers = #tpu.dot_dimension_numbers<[1], [0], [0], [1], [0, 0, 1, 1], [], []>} : vector<49x160xf32>, vector<160x128xf32>, vector<49x128xf32> -> vector<49x128xf32>
    %cst_12 = arith.constant dense<0.000000e+00> : vector<128xf32>
    %28 = vector.multi_reduction <add>, %27, %cst_12 [0] : vector<49x128xf32> to vector<128xf32>
    %29 = vector.shape_cast %28 : vector<128xf32> to vector<1x128xf32>
    %cst_13 = arith.constant 0.0204081628 : f32
    %30 = vector.broadcast %cst_13 : f32 to vector<1x128xf32>
    %31 = arith.mulf %29, %30 : vector<1x128xf32>
    %32 = vector.broadcast %31 : vector<1x128xf32> to vector<49x128xf32>
    %33 = arith.subf %27, %32 : vector<49x128xf32>
    %34 = arith.mulf %33, %33 : vector<49x128xf32>
    %cst_14 = arith.constant dense<0.000000e+00> : vector<128xf32>
    %35 = vector.multi_reduction <add>, %34, %cst_14 [0] : vector<49x128xf32> to vector<128xf32>
    %36 = vector.shape_cast %35 : vector<128xf32> to vector<1x128xf32>
    %cst_15 = arith.constant 0.0204081628 : f32
    %37 = vector.broadcast %cst_15 : f32 to vector<1x128xf32>
    %38 = arith.mulf %36, %37 : vector<1x128xf32>
    %c0_16 = arith.constant 0 : index
    %c0_17 = arith.constant 0 : index
    %39 = vector.load %arg3[%c0_16, %c0_17] : memref<1x512xf32, #tpu.memory_space<vmem>>, vector<1x128xf32>
    %cst_18 = arith.constant 9.99999974E-6 : f32
    %40 = vector.broadcast %cst_18 : f32 to vector<1x128xf32>
    %41 = arith.addf %38, %40 : vector<1x128xf32>
    %42 = math.rsqrt %41 : vector<1x128xf32>
    %43 = arith.mulf %39, %42 : vector<1x128xf32>
    %44 = vector.broadcast %43 : vector<1x128xf32> to vector<49x128xf32>
    %45 = arith.mulf %33, %44 : vector<49x128xf32>
    %c0_19 = arith.constant 0 : index
    %c0_20 = arith.constant 0 : index
    %46 = vector.load %arg4[%c0_19, %c0_20] : memref<1x512xf32, #tpu.memory_space<vmem>>, vector<1x128xf32>
    %47 = vector.broadcast %46 : vector<1x128xf32> to vector<49x128xf32>
    %48 = arith.addf %45, %47 : vector<49x128xf32>
    %cst_21 = arith.constant 0.000000e+00 : f32
    %cst_22 = arith.constant 6.000000e+00 : f32
    %49 = vector.broadcast %cst_21 : f32 to vector<49x128xf32>
    %50 = arith.maximumf %49, %48 : vector<49x128xf32>
    %51 = vector.broadcast %cst_22 : f32 to vector<49x128xf32>
    %52 = arith.minimumf %51, %50 : vector<49x128xf32>
    %c8 = arith.constant 8 : index
    %c0_23 = arith.constant 0 : index
    %53 = vector.load %arg7[%c8, %c0_23] : memref<65x128xf32, #tpu.memory_space<vmem>>, vector<49x128xf32>
    tpu.vector_store %arg7[%c8, %c0_23], %52 {strides = array<i32>} : memref<65x128xf32, #tpu.memory_space<vmem>>, vector<49x128xf32>,
    %c0_24 = arith.constant 0 : index
    %c0_25 = arith.constant 0 : index
    %54 = vector.load %arg5[%c0_24, %c0_25] : memref<9x512xf32, #tpu.memory_space<vmem>>, vector<9x128xf32>
    %cst_26 = arith.constant 0.000000e+00 : f32
    %55 = vector.broadcast %cst_26 : f32 to vector<49x128xf32>
    %c0_27 = arith.constant 0 : index
    %c0_28 = arith.constant 0 : index
    %56 = vector.load %arg7[%c0_27, %c0_28] : memref<65x128xf32, #tpu.memory_space<vmem>>, vector<49x128xf32>
    %cst_29 = arith.constant 0.000000e+00 : f32
    %57 = vector.broadcast %cst_29 : f32 to vector<49x128xf32>
    %58 = arith.select %22, %56, %57 : vector<49x128xi1>, vector<49x128xf32>
    %59 = vector.extract_strided_slice %54 {offsets = [0, 0], sizes = [1, 128], strides = [1, 1]} : vector<9x128xf32> to vector<1x128xf32>
    %60 = vector.broadcast %59 : vector<1x128xf32> to vector<49x128xf32>
    %61 = arith.mulf %58, %60 : vector<49x128xf32>
    %62 = arith.addf %55, %61 : vector<49x128xf32>
    %c1 = arith.constant 1 : index
    %c0_30 = arith.constant 0 : index
    %63 = vector.load %arg7[%c1, %c0_30] : memref<65x128xf32, #tpu.memory_space<vmem>>, vector<49x128xf32>
    %64 = vector.extract_strided_slice %54 {offsets = [1, 0], sizes = [1, 128], strides = [1, 1]} : vector<9x128xf32> to vector<1x128xf32>
    %65 = vector.broadcast %64 : vector<1x128xf32> to vector<49x128xf32>
    %66 = arith.mulf %63, %65 : vector<49x128xf32>
    %67 = arith.addf %62, %66 : vector<49x128xf32>
    %c2 = arith.constant 2 : index
    %c0_31 = arith.constant 0 : index
    %68 = vector.load %arg7[%c2, %c0_31] : memref<65x128xf32, #tpu.memory_space<vmem>>, vector<49x128xf32>
    %cst_32 = arith.constant 0.000000e+00 : f32
    %69 = vector.broadcast %cst_32 : f32 to vector<49x128xf32>
    %70 = arith.select %24, %68, %69 : vector<49x128xi1>, vector<49x128xf32>
    %71 = vector.extract_strided_slice %54 {offsets = [2, 0], sizes = [1, 128], strides = [1, 1]} : vector<9x128xf32> to vector<1x128xf32>
    %72 = vector.broadcast %71 : vector<1x128xf32> to vector<49x128xf32>
    %73 = arith.mulf %70, %72 : vector<49x128xf32>
    %74 = arith.addf %67, %73 : vector<49x128xf32>
    %c7 = arith.constant 7 : index
    %c0_33 = arith.constant 0 : index
    %75 = vector.load %arg7[%c7, %c0_33] : memref<65x128xf32, #tpu.memory_space<vmem>>, vector<49x128xf32>
    %cst_34 = arith.constant 0.000000e+00 : f32
    %76 = vector.broadcast %cst_34 : f32 to vector<49x128xf32>
    %77 = arith.select %22, %75, %76 : vector<49x128xi1>, vector<49x128xf32>
    %78 = vector.extract_strided_slice %54 {offsets = [3, 0], sizes = [1, 128], strides = [1, 1]} : vector<9x128xf32> to vector<1x128xf32>
    %79 = vector.broadcast %78 : vector<1x128xf32> to vector<49x128xf32>
    %80 = arith.mulf %77, %79 : vector<49x128xf32>
    %81 = arith.addf %74, %80 : vector<49x128xf32>
    %c8_35 = arith.constant 8 : index
    %c0_36 = arith.constant 0 : index
    %82 = vector.load %arg7[%c8_35, %c0_36] : memref<65x128xf32, #tpu.memory_space<vmem>>, vector<49x128xf32>
    %83 = vector.extract_strided_slice %54 {offsets = [4, 0], sizes = [1, 128], strides = [1, 1]} : vector<9x128xf32> to vector<1x128xf32>
    %84 = vector.broadcast %83 : vector<1x128xf32> to vector<49x128xf32>
    %85 = arith.mulf %82, %84 : vector<49x128xf32>
    %86 = arith.addf %81, %85 : vector<49x128xf32>
    %c9 = arith.constant 9 : index
    %c0_37 = arith.constant 0 : index
    %87 = vector.load %arg7[%c9, %c0_37] : memref<65x128xf32, #tpu.memory_space<vmem>>, vector<49x128xf32>
    %cst_38 = arith.constant 0.000000e+00 : f32
    %88 = vector.broadcast %cst_38 : f32 to vector<49x128xf32>
    %89 = arith.select %24, %87, %88 : vector<49x128xi1>, vector<49x128xf32>
    %90 = vector.extract_strided_slice %54 {offsets = [5, 0], sizes = [1, 128], strides = [1, 1]} : vector<9x128xf32> to vector<1x128xf32>
    %91 = vector.broadcast %90 : vector<1x128xf32> to vector<49x128xf32>
    %92 = arith.mulf %89, %91 : vector<49x128xf32>
    %93 = arith.addf %86, %92 : vector<49x128xf32>
    %c14 = arith.constant 14 : index
    %c0_39 = arith.constant 0 : index
    %94 = vector.load %arg7[%c14, %c0_39] : memref<65x128xf32, #tpu.memory_space<vmem>>, vector<49x128xf32>
    %cst_40 = arith.constant 0.000000e+00 : f32
    %95 = vector.broadcast %cst_40 : f32 to vector<49x128xf32>
    %96 = arith.select %22, %94, %95 : vector<49x128xi1>, vector<49x128xf32>
    %97 = vector.extract_strided_slice %54 {offsets = [6, 0], sizes = [1, 128], strides = [1, 1]} : vector<9x128xf32> to vector<1x128xf32>
    %98 = vector.broadcast %97 : vector<1x128xf32> to vector<49x128xf32>
    %99 = arith.mulf %96, %98 : vector<49x128xf32>
    %100 = arith.addf %93, %99 : vector<49x128xf32>
    %c15 = arith.constant 15 : index
    %c0_41 = arith.constant 0 : index
    %101 = vector.load %arg7[%c15, %c0_41] : memref<65x128xf32, #tpu.memory_space<vmem>>, vector<49x128xf32>
    %102 = vector.extract_strided_slice %54 {offsets = [7, 0], sizes = [1, 128], strides = [1, 1]} : vector<9x128xf32> to vector<1x128xf32>
    %103 = vector.broadcast %102 : vector<1x128xf32> to vector<49x128xf32>
    %104 = arith.mulf %101, %103 : vector<49x128xf32>
    %105 = arith.addf %100, %104 : vector<49x128xf32>
    %c16 = arith.constant 16 : index
    %c0_42 = arith.constant 0 : index
    %106 = vector.load %arg7[%c16, %c0_42] : memref<65x128xf32, #tpu.memory_space<vmem>>, vector<49x128xf32>
    %cst_43 = arith.constant 0.000000e+00 : f32
    %107 = vector.broadcast %cst_43 : f32 to vector<49x128xf32>
    %108 = arith.select %24, %106, %107 : vector<49x128xi1>, vector<49x128xf32>
    %109 = vector.extract_strided_slice %54 {offsets = [8, 0], sizes = [1, 128], strides = [1, 1]} : vector<9x128xf32> to vector<1x128xf32>
    %110 = vector.broadcast %109 : vector<1x128xf32> to vector<49x128xf32>
    %111 = arith.mulf %108, %110 : vector<49x128xf32>
    %112 = arith.addf %105, %111 : vector<49x128xf32>
    %c0_44 = arith.constant 0 : index
    %c0_45 = arith.constant 0 : index
    %113 = vector.load %arg6[%c0_44, %c0_45] : memref<49x512xf32, #tpu.memory_space<vmem>>, vector<49x128xf32>
    tpu.vector_store %arg6[%c0_44, %c0_45], %112 {strides = array<i32>} : memref<49x512xf32, #tpu.memory_space<vmem>>, vector<49x128xf32>,
    %c0_46 = arith.constant 0 : index
    %c128 = arith.constant 128 : index
    %114 = vector.load %arg2[%c0_46, %c128] : memref<160x512xf32, #tpu.memory_space<vmem>>, vector<160x128xf32>
    %cst_47 = arith.constant dense<0.000000e+00> : vector<49x128xf32>
    %115 = tpu.matmul %25, %114, %cst_47 {dimension_numbers = #tpu.dot_dimension_numbers<[1], [0], [0], [1], [0, 0, 1, 1], [], []>} : vector<49x160xf32>, vector<160x128xf32>, vector<49x128xf32> -> vector<49x128xf32>
    %cst_48 = arith.constant dense<0.000000e+00> : vector<128xf32>
    %116 = vector.multi_reduction <add>, %115, %cst_48 [0] : vector<49x128xf32> to vector<128xf32>
    %117 = vector.shape_cast %116 : vector<128xf32> to vector<1x128xf32>
    %cst_49 = arith.constant 0.0204081628 : f32
    %118 = vector.broadcast %cst_49 : f32 to vector<1x128xf32>
    %119 = arith.mulf %117, %118 : vector<1x128xf32>
    %120 = vector.broadcast %119 : vector<1x128xf32> to vector<49x128xf32>
    %121 = arith.subf %115, %120 : vector<49x128xf32>
    %122 = arith.mulf %121, %121 : vector<49x128xf32>
    %cst_50 = arith.constant dense<0.000000e+00> : vector<128xf32>
    %123 = vector.multi_reduction <add>, %122, %cst_50 [0] : vector<49x128xf32> to vector<128xf32>
    %124 = vector.shape_cast %123 : vector<128xf32> to vector<1x128xf32>
    %cst_51 = arith.constant 0.0204081628 : f32
    %125 = vector.broadcast %cst_51 : f32 to vector<1x128xf32>
    %126 = arith.mulf %124, %125 : vector<1x128xf32>
    %c0_52 = arith.constant 0 : index
    %c128_53 = arith.constant 128 : index
    %127 = vector.load %arg3[%c0_52, %c128_53] : memref<1x512xf32, #tpu.memory_space<vmem>>, vector<1x128xf32>
    %cst_54 = arith.constant 9.99999974E-6 : f32
    %128 = vector.broadcast %cst_54 : f32 to vector<1x128xf32>
    %129 = arith.addf %126, %128 : vector<1x128xf32>
    %130 = math.rsqrt %129 : vector<1x128xf32>
    %131 = arith.mulf %127, %130 : vector<1x128xf32>
    %132 = vector.broadcast %131 : vector<1x128xf32> to vector<49x128xf32>
    %133 = arith.mulf %121, %132 : vector<49x128xf32>
    %c0_55 = arith.constant 0 : index
    %c128_56 = arith.constant 128 : index
    %134 = vector.load %arg4[%c0_55, %c128_56] : memref<1x512xf32, #tpu.memory_space<vmem>>, vector<1x128xf32>
    %135 = vector.broadcast %134 : vector<1x128xf32> to vector<49x128xf32>
    %136 = arith.addf %133, %135 : vector<49x128xf32>
    %cst_57 = arith.constant 0.000000e+00 : f32
    %cst_58 = arith.constant 6.000000e+00 : f32
    %137 = vector.broadcast %cst_57 : f32 to vector<49x128xf32>
    %138 = arith.maximumf %137, %136 : vector<49x128xf32>
    %139 = vector.broadcast %cst_58 : f32 to vector<49x128xf32>
    %140 = arith.minimumf %139, %138 : vector<49x128xf32>
    %c8_59 = arith.constant 8 : index
    %c0_60 = arith.constant 0 : index
    %141 = vector.load %arg7[%c8_59, %c0_60] : memref<65x128xf32, #tpu.memory_space<vmem>>, vector<49x128xf32>
    tpu.vector_store %arg7[%c8_59, %c0_60], %140 {strides = array<i32>} : memref<65x128xf32, #tpu.memory_space<vmem>>, vector<49x128xf32>,
    %c0_61 = arith.constant 0 : index
    %c128_62 = arith.constant 128 : index
    %142 = vector.load %arg5[%c0_61, %c128_62] : memref<9x512xf32, #tpu.memory_space<vmem>>, vector<9x128xf32>
    %cst_63 = arith.constant 0.000000e+00 : f32
    %143 = vector.broadcast %cst_63 : f32 to vector<49x128xf32>
    %c0_64 = arith.constant 0 : index
    %c0_65 = arith.constant 0 : index
    %144 = vector.load %arg7[%c0_64, %c0_65] : memref<65x128xf32, #tpu.memory_space<vmem>>, vector<49x128xf32>
    %cst_66 = arith.constant 0.000000e+00 : f32
    %145 = vector.broadcast %cst_66 : f32 to vector<49x128xf32>
    %146 = arith.select %22, %144, %145 : vector<49x128xi1>, vector<49x128xf32>
    %147 = vector.extract_strided_slice %142 {offsets = [0, 0], sizes = [1, 128], strides = [1, 1]} : vector<9x128xf32> to vector<1x128xf32>
    %148 = vector.broadcast %147 : vector<1x128xf32> to vector<49x128xf32>
    %149 = arith.mulf %146, %148 : vector<49x128xf32>
    %150 = arith.addf %143, %149 : vector<49x128xf32>
    %c1_67 = arith.constant 1 : index
    %c0_68 = arith.constant 0 : index
    %151 = vector.load %arg7[%c1_67, %c0_68] : memref<65x128xf32, #tpu.memory_space<vmem>>, vector<49x128xf32>
    %152 = vector.extract_strided_slice %142 {offsets = [1, 0], sizes = [1, 128], strides = [1, 1]} : vector<9x128xf32> to vector<1x128xf32>
    %153 = vector.broadcast %152 : vector<1x128xf32> to vector<49x128xf32>
    %154 = arith.mulf %151, %153 : vector<49x128xf32>
    %155 = arith.addf %150, %154 : vector<49x128xf32>
    %c2_69 = arith.constant 2 : index
    %c0_70 = arith.constant 0 : index
    %156 = vector.load %arg7[%c2_69, %c0_70] : memref<65x128xf32, #tpu.memory_space<vmem>>, vector<49x128xf32>
    %cst_71 = arith.constant 0.000000e+00 : f32
    %157 = vector.broadcast %cst_71 : f32 to vector<49x128xf32>
    %158 = arith.select %24, %156, %157 : vector<49x128xi1>, vector<49x128xf32>
    %159 = vector.extract_strided_slice %142 {offsets = [2, 0], sizes = [1, 128], strides = [1, 1]} : vector<9x128xf32> to vector<1x128xf32>
    %160 = vector.broadcast %159 : vector<1x128xf32> to vector<49x128xf32>
    %161 = arith.mulf %158, %160 : vector<49x128xf32>
    %162 = arith.addf %155, %161 : vector<49x128xf32>
    %c7_72 = arith.constant 7 : index
    %c0_73 = arith.constant 0 : index
    %163 = vector.load %arg7[%c7_72, %c0_73] : memref<65x128xf32, #tpu.memory_space<vmem>>, vector<49x128xf32>
    %cst_74 = arith.constant 0.000000e+00 : f32
    %164 = vector.broadcast %cst_74 : f32 to vector<49x128xf32>
    %165 = arith.select %22, %163, %164 : vector<49x128xi1>, vector<49x128xf32>
    %166 = vector.extract_strided_slice %142 {offsets = [3, 0], sizes = [1, 128], strides = [1, 1]} : vector<9x128xf32> to vector<1x128xf32>
    %167 = vector.broadcast %166 : vector<1x128xf32> to vector<49x128xf32>
    %168 = arith.mulf %165, %167 : vector<49x128xf32>
    %169 = arith.addf %162, %168 : vector<49x128xf32>
    %c8_75 = arith.constant 8 : index
    %c0_76 = arith.constant 0 : index
    %170 = vector.load %arg7[%c8_75, %c0_76] : memref<65x128xf32, #tpu.memory_space<vmem>>, vector<49x128xf32>
    %171 = vector.extract_strided_slice %142 {offsets = [4, 0], sizes = [1, 128], strides = [1, 1]} : vector<9x128xf32> to vector<1x128xf32>
    %172 = vector.broadcast %171 : vector<1x128xf32> to vector<49x128xf32>
    %173 = arith.mulf %170, %172 : vector<49x128xf32>
    %174 = arith.addf %169, %173 : vector<49x128xf32>
    %c9_77 = arith.constant 9 : index
    %c0_78 = arith.constant 0 : index
    %175 = vector.load %arg7[%c9_77, %c0_78] : memref<65x128xf32, #tpu.memory_space<vmem>>, vector<49x128xf32>
    %cst_79 = arith.constant 0.000000e+00 : f32
    %176 = vector.broadcast %cst_79 : f32 to vector<49x128xf32>
    %177 = arith.select %24, %175, %176 : vector<49x128xi1>, vector<49x128xf32>
    %178 = vector.extract_strided_slice %142 {offsets = [5, 0], sizes = [1, 128], strides = [1, 1]} : vector<9x128xf32> to vector<1x128xf32>
    %179 = vector.broadcast %178 : vector<1x128xf32> to vector<49x128xf32>
    %180 = arith.mulf %177, %179 : vector<49x128xf32>
    %181 = arith.addf %174, %180 : vector<49x128xf32>
    %c14_80 = arith.constant 14 : index
    %c0_81 = arith.constant 0 : index
    %182 = vector.load %arg7[%c14_80, %c0_81] : memref<65x128xf32, #tpu.memory_space<vmem>>, vector<49x128xf32>
    %cst_82 = arith.constant 0.000000e+00 : f32
    %183 = vector.broadcast %cst_82 : f32 to vector<49x128xf32>
    %184 = arith.select %22, %182, %183 : vector<49x128xi1>, vector<49x128xf32>
    %185 = vector.extract_strided_slice %142 {offsets = [6, 0], sizes = [1, 128], strides = [1, 1]} : vector<9x128xf32> to vector<1x128xf32>
    %186 = vector.broadcast %185 : vector<1x128xf32> to vector<49x128xf32>
    %187 = arith.mulf %184, %186 : vector<49x128xf32>
    %188 = arith.addf %181, %187 : vector<49x128xf32>
    %c15_83 = arith.constant 15 : index
    %c0_84 = arith.constant 0 : index
    %189 = vector.load %arg7[%c15_83, %c0_84] : memref<65x128xf32, #tpu.memory_space<vmem>>, vector<49x128xf32>
    %190 = vector.extract_strided_slice %142 {offsets = [7, 0], sizes = [1, 128], strides = [1, 1]} : vector<9x128xf32> to vector<1x128xf32>
    %191 = vector.broadcast %190 : vector<1x128xf32> to vector<49x128xf32>
    %192 = arith.mulf %189, %191 : vector<49x128xf32>
    %193 = arith.addf %188, %192 : vector<49x128xf32>
    %c16_85 = arith.constant 16 : index
    %c0_86 = arith.constant 0 : index
    %194 = vector.load %arg7[%c16_85, %c0_86] : memref<65x128xf32, #tpu.memory_space<vmem>>, vector<49x128xf32>
    %cst_87 = arith.constant 0.000000e+00 : f32
    %195 = vector.broadcast %cst_87 : f32 to vector<49x128xf32>
    %196 = arith.select %24, %194, %195 : vector<49x128xi1>, vector<49x128xf32>
    %197 = vector.extract_strided_slice %142 {offsets = [8, 0], sizes = [1, 128], strides = [1, 1]} : vector<9x128xf32> to vector<1x128xf32>
    %198 = vector.broadcast %197 : vector<1x128xf32> to vector<49x128xf32>
    %199 = arith.mulf %196, %198 : vector<49x128xf32>
    %200 = arith.addf %193, %199 : vector<49x128xf32>
    %c0_88 = arith.constant 0 : index
    %c128_89 = arith.constant 128 : index
    %201 = vector.load %arg6[%c0_88, %c128_89] : memref<49x512xf32, #tpu.memory_space<vmem>>, vector<49x128xf32>
    tpu.vector_store %arg6[%c0_88, %c128_89], %200 {strides = array<i32>} : memref<49x512xf32, #tpu.memory_space<vmem>>, vector<49x128xf32>,
    %c0_90 = arith.constant 0 : index
    %c256 = arith.constant 256 : index
    %202 = vector.load %arg2[%c0_90, %c256] : memref<160x512xf32, #tpu.memory_space<vmem>>, vector<160x128xf32>
    %cst_91 = arith.constant dense<0.000000e+00> : vector<49x128xf32>
    %203 = tpu.matmul %25, %202, %cst_91 {dimension_numbers = #tpu.dot_dimension_numbers<[1], [0], [0], [1], [0, 0, 1, 1], [], []>} : vector<49x160xf32>, vector<160x128xf32>, vector<49x128xf32> -> vector<49x128xf32>
    %cst_92 = arith.constant dense<0.000000e+00> : vector<128xf32>
    %204 = vector.multi_reduction <add>, %203, %cst_92 [0] : vector<49x128xf32> to vector<128xf32>
    %205 = vector.shape_cast %204 : vector<128xf32> to vector<1x128xf32>
    %cst_93 = arith.constant 0.0204081628 : f32
    %206 = vector.broadcast %cst_93 : f32 to vector<1x128xf32>
    %207 = arith.mulf %205, %206 : vector<1x128xf32>
    %208 = vector.broadcast %207 : vector<1x128xf32> to vector<49x128xf32>
    %209 = arith.subf %203, %208 : vector<49x128xf32>
    %210 = arith.mulf %209, %209 : vector<49x128xf32>
    %cst_94 = arith.constant dense<0.000000e+00> : vector<128xf32>
    %211 = vector.multi_reduction <add>, %210, %cst_94 [0] : vector<49x128xf32> to vector<128xf32>
    %212 = vector.shape_cast %211 : vector<128xf32> to vector<1x128xf32>
    %cst_95 = arith.constant 0.0204081628 : f32
    %213 = vector.broadcast %cst_95 : f32 to vector<1x128xf32>
    %214 = arith.mulf %212, %213 : vector<1x128xf32>
    %c0_96 = arith.constant 0 : index
    %c256_97 = arith.constant 256 : index
    %215 = vector.load %arg3[%c0_96, %c256_97] : memref<1x512xf32, #tpu.memory_space<vmem>>, vector<1x128xf32>
    %cst_98 = arith.constant 9.99999974E-6 : f32
    %216 = vector.broadcast %cst_98 : f32 to vector<1x128xf32>
    %217 = arith.addf %214, %216 : vector<1x128xf32>
    %218 = math.rsqrt %217 : vector<1x128xf32>
    %219 = arith.mulf %215, %218 : vector<1x128xf32>
    %220 = vector.broadcast %219 : vector<1x128xf32> to vector<49x128xf32>
    %221 = arith.mulf %209, %220 : vector<49x128xf32>
    %c0_99 = arith.constant 0 : index
    %c256_100 = arith.constant 256 : index
    %222 = vector.load %arg4[%c0_99, %c256_100] : memref<1x512xf32, #tpu.memory_space<vmem>>, vector<1x128xf32>
    %223 = vector.broadcast %222 : vector<1x128xf32> to vector<49x128xf32>
    %224 = arith.addf %221, %223 : vector<49x128xf32>
    %cst_101 = arith.constant 0.000000e+00 : f32
    %cst_102 = arith.constant 6.000000e+00 : f32
    %225 = vector.broadcast %cst_101 : f32 to vector<49x128xf32>
    %226 = arith.maximumf %225, %224 : vector<49x128xf32>
    %227 = vector.broadcast %cst_102 : f32 to vector<49x128xf32>
    %228 = arith.minimumf %227, %226 : vector<49x128xf32>
    %c8_103 = arith.constant 8 : index
    %c0_104 = arith.constant 0 : index
    %229 = vector.load %arg7[%c8_103, %c0_104] : memref<65x128xf32, #tpu.memory_space<vmem>>, vector<49x128xf32>
    tpu.vector_store %arg7[%c8_103, %c0_104], %228 {strides = array<i32>} : memref<65x128xf32, #tpu.memory_space<vmem>>, vector<49x128xf32>,
    %c0_105 = arith.constant 0 : index
    %c256_106 = arith.constant 256 : index
    %230 = vector.load %arg5[%c0_105, %c256_106] : memref<9x512xf32, #tpu.memory_space<vmem>>, vector<9x128xf32>
    %cst_107 = arith.constant 0.000000e+00 : f32
    %231 = vector.broadcast %cst_107 : f32 to vector<49x128xf32>
    %c0_108 = arith.constant 0 : index
    %c0_109 = arith.constant 0 : index
    %232 = vector.load %arg7[%c0_108, %c0_109] : memref<65x128xf32, #tpu.memory_space<vmem>>, vector<49x128xf32>
    %cst_110 = arith.constant 0.000000e+00 : f32
    %233 = vector.broadcast %cst_110 : f32 to vector<49x128xf32>
    %234 = arith.select %22, %232, %233 : vector<49x128xi1>, vector<49x128xf32>
    %235 = vector.extract_strided_slice %230 {offsets = [0, 0], sizes = [1, 128], strides = [1, 1]} : vector<9x128xf32> to vector<1x128xf32>
    %236 = vector.broadcast %235 : vector<1x128xf32> to vector<49x128xf32>
    %237 = arith.mulf %234, %236 : vector<49x128xf32>
    %238 = arith.addf %231, %237 : vector<49x128xf32>
    %c1_111 = arith.constant 1 : index
    %c0_112 = arith.constant 0 : index
    %239 = vector.load %arg7[%c1_111, %c0_112] : memref<65x128xf32, #tpu.memory_space<vmem>>, vector<49x128xf32>
    %240 = vector.extract_strided_slice %230 {offsets = [1, 0], sizes = [1, 128], strides = [1, 1]} : vector<9x128xf32> to vector<1x128xf32>
    %241 = vector.broadcast %240 : vector<1x128xf32> to vector<49x128xf32>
    %242 = arith.mulf %239, %241 : vector<49x128xf32>
    %243 = arith.addf %238, %242 : vector<49x128xf32>
    %c2_113 = arith.constant 2 : index
    %c0_114 = arith.constant 0 : index
    %244 = vector.load %arg7[%c2_113, %c0_114] : memref<65x128xf32, #tpu.memory_space<vmem>>, vector<49x128xf32>
    %cst_115 = arith.constant 0.000000e+00 : f32
    %245 = vector.broadcast %cst_115 : f32 to vector<49x128xf32>
    %246 = arith.select %24, %244, %245 : vector<49x128xi1>, vector<49x128xf32>
    %247 = vector.extract_strided_slice %230 {offsets = [2, 0], sizes = [1, 128], strides = [1, 1]} : vector<9x128xf32> to vector<1x128xf32>
    %248 = vector.broadcast %247 : vector<1x128xf32> to vector<49x128xf32>
    %249 = arith.mulf %246, %248 : vector<49x128xf32>
    %250 = arith.addf %243, %249 : vector<49x128xf32>
    %c7_116 = arith.constant 7 : index
    %c0_117 = arith.constant 0 : index
    %251 = vector.load %arg7[%c7_116, %c0_117] : memref<65x128xf32, #tpu.memory_space<vmem>>, vector<49x128xf32>
    %cst_118 = arith.constant 0.000000e+00 : f32
    %252 = vector.broadcast %cst_118 : f32 to vector<49x128xf32>
    %253 = arith.select %22, %251, %252 : vector<49x128xi1>, vector<49x128xf32>
    %254 = vector.extract_strided_slice %230 {offsets = [3, 0], sizes = [1, 128], strides = [1, 1]} : vector<9x128xf32> to vector<1x128xf32>
    %255 = vector.broadcast %254 : vector<1x128xf32> to vector<49x128xf32>
    %256 = arith.mulf %253, %255 : vector<49x128xf32>
    %257 = arith.addf %250, %256 : vector<49x128xf32>
    %c8_119 = arith.constant 8 : index
    %c0_120 = arith.constant 0 : index
    %258 = vector.load %arg7[%c8_119, %c0_120] : memref<65x128xf32, #tpu.memory_space<vmem>>, vector<49x128xf32>
    %259 = vector.extract_strided_slice %230 {offsets = [4, 0], sizes = [1, 128], strides = [1, 1]} : vector<9x128xf32> to vector<1x128xf32>
    %260 = vector.broadcast %259 : vector<1x128xf32> to vector<49x128xf32>
    %261 = arith.mulf %258, %260 : vector<49x128xf32>
    %262 = arith.addf %257, %261 : vector<49x128xf32>
    %c9_121 = arith.constant 9 : index
    %c0_122 = arith.constant 0 : index
    %263 = vector.load %arg7[%c9_121, %c0_122] : memref<65x128xf32, #tpu.memory_space<vmem>>, vector<49x128xf32>
    %cst_123 = arith.constant 0.000000e+00 : f32
    %264 = vector.broadcast %cst_123 : f32 to vector<49x128xf32>
    %265 = arith.select %24, %263, %264 : vector<49x128xi1>, vector<49x128xf32>
    %266 = vector.extract_strided_slice %230 {offsets = [5, 0], sizes = [1, 128], strides = [1, 1]} : vector<9x128xf32> to vector<1x128xf32>
    %267 = vector.broadcast %266 : vector<1x128xf32> to vector<49x128xf32>
    %268 = arith.mulf %265, %267 : vector<49x128xf32>
    %269 = arith.addf %262, %268 : vector<49x128xf32>
    %c14_124 = arith.constant 14 : index
    %c0_125 = arith.constant 0 : index
    %270 = vector.load %arg7[%c14_124, %c0_125] : memref<65x128xf32, #tpu.memory_space<vmem>>, vector<49x128xf32>
    %cst_126 = arith.constant 0.000000e+00 : f32
    %271 = vector.broadcast %cst_126 : f32 to vector<49x128xf32>
    %272 = arith.select %22, %270, %271 : vector<49x128xi1>, vector<49x128xf32>
    %273 = vector.extract_strided_slice %230 {offsets = [6, 0], sizes = [1, 128], strides = [1, 1]} : vector<9x128xf32> to vector<1x128xf32>
    %274 = vector.broadcast %273 : vector<1x128xf32> to vector<49x128xf32>
    %275 = arith.mulf %272, %274 : vector<49x128xf32>
    %276 = arith.addf %269, %275 : vector<49x128xf32>
    %c15_127 = arith.constant 15 : index
    %c0_128 = arith.constant 0 : index
    %277 = vector.load %arg7[%c15_127, %c0_128] : memref<65x128xf32, #tpu.memory_space<vmem>>, vector<49x128xf32>
    %278 = vector.extract_strided_slice %230 {offsets = [7, 0], sizes = [1, 128], strides = [1, 1]} : vector<9x128xf32> to vector<1x128xf32>
    %279 = vector.broadcast %278 : vector<1x128xf32> to vector<49x128xf32>
    %280 = arith.mulf %277, %279 : vector<49x128xf32>
    %281 = arith.addf %276, %280 : vector<49x128xf32>
    %c16_129 = arith.constant 16 : index
    %c0_130 = arith.constant 0 : index
    %282 = vector.load %arg7[%c16_129, %c0_130] : memref<65x128xf32, #tpu.memory_space<vmem>>, vector<49x128xf32>
    %cst_131 = arith.constant 0.000000e+00 : f32
    %283 = vector.broadcast %cst_131 : f32 to vector<49x128xf32>
    %284 = arith.select %24, %282, %283 : vector<49x128xi1>, vector<49x128xf32>
    %285 = vector.extract_strided_slice %230 {offsets = [8, 0], sizes = [1, 128], strides = [1, 1]} : vector<9x128xf32> to vector<1x128xf32>
    %286 = vector.broadcast %285 : vector<1x128xf32> to vector<49x128xf32>
    %287 = arith.mulf %284, %286 : vector<49x128xf32>
    %288 = arith.addf %281, %287 : vector<49x128xf32>
    %c0_132 = arith.constant 0 : index
    %c256_133 = arith.constant 256 : index
    %289 = vector.load %arg6[%c0_132, %c256_133] : memref<49x512xf32, #tpu.memory_space<vmem>>, vector<49x128xf32>
    tpu.vector_store %arg6[%c0_132, %c256_133], %288 {strides = array<i32>} : memref<49x512xf32, #tpu.memory_space<vmem>>, vector<49x128xf32>,
    %c0_134 = arith.constant 0 : index
    %c384 = arith.constant 384 : index
    %290 = vector.load %arg2[%c0_134, %c384] : memref<160x512xf32, #tpu.memory_space<vmem>>, vector<160x128xf32>
    %cst_135 = arith.constant dense<0.000000e+00> : vector<49x128xf32>
    %291 = tpu.matmul %25, %290, %cst_135 {dimension_numbers = #tpu.dot_dimension_numbers<[1], [0], [0], [1], [0, 0, 1, 1], [], []>} : vector<49x160xf32>, vector<160x128xf32>, vector<49x128xf32> -> vector<49x128xf32>
    %cst_136 = arith.constant dense<0.000000e+00> : vector<128xf32>
    %292 = vector.multi_reduction <add>, %291, %cst_136 [0] : vector<49x128xf32> to vector<128xf32>
    %293 = vector.shape_cast %292 : vector<128xf32> to vector<1x128xf32>
    %cst_137 = arith.constant 0.0204081628 : f32
    %294 = vector.broadcast %cst_137 : f32 to vector<1x128xf32>
    %295 = arith.mulf %293, %294 : vector<1x128xf32>
    %296 = vector.broadcast %295 : vector<1x128xf32> to vector<49x128xf32>
    %297 = arith.subf %291, %296 : vector<49x128xf32>
    %298 = arith.mulf %297, %297 : vector<49x128xf32>
    %cst_138 = arith.constant dense<0.000000e+00> : vector<128xf32>
    %299 = vector.multi_reduction <add>, %298, %cst_138 [0] : vector<49x128xf32> to vector<128xf32>
    %300 = vector.shape_cast %299 : vector<128xf32> to vector<1x128xf32>
    %cst_139 = arith.constant 0.0204081628 : f32
    %301 = vector.broadcast %cst_139 : f32 to vector<1x128xf32>
    %302 = arith.mulf %300, %301 : vector<1x128xf32>
    %c0_140 = arith.constant 0 : index
    %c384_141 = arith.constant 384 : index
    %303 = vector.load %arg3[%c0_140, %c384_141] : memref<1x512xf32, #tpu.memory_space<vmem>>, vector<1x128xf32>
    %cst_142 = arith.constant 9.99999974E-6 : f32
    %304 = vector.broadcast %cst_142 : f32 to vector<1x128xf32>
    %305 = arith.addf %302, %304 : vector<1x128xf32>
    %306 = math.rsqrt %305 : vector<1x128xf32>
    %307 = arith.mulf %303, %306 : vector<1x128xf32>
    %308 = vector.broadcast %307 : vector<1x128xf32> to vector<49x128xf32>
    %309 = arith.mulf %297, %308 : vector<49x128xf32>
    %c0_143 = arith.constant 0 : index
    %c384_144 = arith.constant 384 : index
    %310 = vector.load %arg4[%c0_143, %c384_144] : memref<1x512xf32, #tpu.memory_space<vmem>>, vector<1x128xf32>
    %311 = vector.broadcast %310 : vector<1x128xf32> to vector<49x128xf32>
    %312 = arith.addf %309, %311 : vector<49x128xf32>
    %cst_145 = arith.constant 0.000000e+00 : f32
    %cst_146 = arith.constant 6.000000e+00 : f32
    %313 = vector.broadcast %cst_145 : f32 to vector<49x128xf32>
    %314 = arith.maximumf %313, %312 : vector<49x128xf32>
    %315 = vector.broadcast %cst_146 : f32 to vector<49x128xf32>
    %316 = arith.minimumf %315, %314 : vector<49x128xf32>
    %c8_147 = arith.constant 8 : index
    %c0_148 = arith.constant 0 : index
    %317 = vector.load %arg7[%c8_147, %c0_148] : memref<65x128xf32, #tpu.memory_space<vmem>>, vector<49x128xf32>
    tpu.vector_store %arg7[%c8_147, %c0_148], %316 {strides = array<i32>} : memref<65x128xf32, #tpu.memory_space<vmem>>, vector<49x128xf32>,
    %c0_149 = arith.constant 0 : index
    %c384_150 = arith.constant 384 : index
    %318 = vector.load %arg5[%c0_149, %c384_150] : memref<9x512xf32, #tpu.memory_space<vmem>>, vector<9x128xf32>
    %cst_151 = arith.constant 0.000000e+00 : f32
    %319 = vector.broadcast %cst_151 : f32 to vector<49x128xf32>
    %c0_152 = arith.constant 0 : index
    %c0_153 = arith.constant 0 : index
    %320 = vector.load %arg7[%c0_152, %c0_153] : memref<65x128xf32, #tpu.memory_space<vmem>>, vector<49x128xf32>
    %cst_154 = arith.constant 0.000000e+00 : f32
    %321 = vector.broadcast %cst_154 : f32 to vector<49x128xf32>
    %322 = arith.select %22, %320, %321 : vector<49x128xi1>, vector<49x128xf32>
    %323 = vector.extract_strided_slice %318 {offsets = [0, 0], sizes = [1, 128], strides = [1, 1]} : vector<9x128xf32> to vector<1x128xf32>
    %324 = vector.broadcast %323 : vector<1x128xf32> to vector<49x128xf32>
    %325 = arith.mulf %322, %324 : vector<49x128xf32>
    %326 = arith.addf %319, %325 : vector<49x128xf32>
    %c1_155 = arith.constant 1 : index
    %c0_156 = arith.constant 0 : index
    %327 = vector.load %arg7[%c1_155, %c0_156] : memref<65x128xf32, #tpu.memory_space<vmem>>, vector<49x128xf32>
    %328 = vector.extract_strided_slice %318 {offsets = [1, 0], sizes = [1, 128], strides = [1, 1]} : vector<9x128xf32> to vector<1x128xf32>
    %329 = vector.broadcast %328 : vector<1x128xf32> to vector<49x128xf32>
    %330 = arith.mulf %327, %329 : vector<49x128xf32>
    %331 = arith.addf %326, %330 : vector<49x128xf32>
    %c2_157 = arith.constant 2 : index
    %c0_158 = arith.constant 0 : index
    %332 = vector.load %arg7[%c2_157, %c0_158] : memref<65x128xf32, #tpu.memory_space<vmem>>, vector<49x128xf32>
    %cst_159 = arith.constant 0.000000e+00 : f32
    %333 = vector.broadcast %cst_159 : f32 to vector<49x128xf32>
    %334 = arith.select %24, %332, %333 : vector<49x128xi1>, vector<49x128xf32>
    %335 = vector.extract_strided_slice %318 {offsets = [2, 0], sizes = [1, 128], strides = [1, 1]} : vector<9x128xf32> to vector<1x128xf32>
    %336 = vector.broadcast %335 : vector<1x128xf32> to vector<49x128xf32>
    %337 = arith.mulf %334, %336 : vector<49x128xf32>
    %338 = arith.addf %331, %337 : vector<49x128xf32>
    %c7_160 = arith.constant 7 : index
    %c0_161 = arith.constant 0 : index
    %339 = vector.load %arg7[%c7_160, %c0_161] : memref<65x128xf32, #tpu.memory_space<vmem>>, vector<49x128xf32>
    %cst_162 = arith.constant 0.000000e+00 : f32
    %340 = vector.broadcast %cst_162 : f32 to vector<49x128xf32>
    %341 = arith.select %22, %339, %340 : vector<49x128xi1>, vector<49x128xf32>
    %342 = vector.extract_strided_slice %318 {offsets = [3, 0], sizes = [1, 128], strides = [1, 1]} : vector<9x128xf32> to vector<1x128xf32>
    %343 = vector.broadcast %342 : vector<1x128xf32> to vector<49x128xf32>
    %344 = arith.mulf %341, %343 : vector<49x128xf32>
    %345 = arith.addf %338, %344 : vector<49x128xf32>
    %c8_163 = arith.constant 8 : index
    %c0_164 = arith.constant 0 : index
    %346 = vector.load %arg7[%c8_163, %c0_164] : memref<65x128xf32, #tpu.memory_space<vmem>>, vector<49x128xf32>
    %347 = vector.extract_strided_slice %318 {offsets = [4, 0], sizes = [1, 128], strides = [1, 1]} : vector<9x128xf32> to vector<1x128xf32>
    %348 = vector.broadcast %347 : vector<1x128xf32> to vector<49x128xf32>
    %349 = arith.mulf %346, %348 : vector<49x128xf32>
    %350 = arith.addf %345, %349 : vector<49x128xf32>
    %c9_165 = arith.constant 9 : index
    %c0_166 = arith.constant 0 : index
    %351 = vector.load %arg7[%c9_165, %c0_166] : memref<65x128xf32, #tpu.memory_space<vmem>>, vector<49x128xf32>
    %cst_167 = arith.constant 0.000000e+00 : f32
    %352 = vector.broadcast %cst_167 : f32 to vector<49x128xf32>
    %353 = arith.select %24, %351, %352 : vector<49x128xi1>, vector<49x128xf32>
    %354 = vector.extract_strided_slice %318 {offsets = [5, 0], sizes = [1, 128], strides = [1, 1]} : vector<9x128xf32> to vector<1x128xf32>
    %355 = vector.broadcast %354 : vector<1x128xf32> to vector<49x128xf32>
    %356 = arith.mulf %353, %355 : vector<49x128xf32>
    %357 = arith.addf %350, %356 : vector<49x128xf32>
    %c14_168 = arith.constant 14 : index
    %c0_169 = arith.constant 0 : index
    %358 = vector.load %arg7[%c14_168, %c0_169] : memref<65x128xf32, #tpu.memory_space<vmem>>, vector<49x128xf32>
    %cst_170 = arith.constant 0.000000e+00 : f32
    %359 = vector.broadcast %cst_170 : f32 to vector<49x128xf32>
    %360 = arith.select %22, %358, %359 : vector<49x128xi1>, vector<49x128xf32>
    %361 = vector.extract_strided_slice %318 {offsets = [6, 0], sizes = [1, 128], strides = [1, 1]} : vector<9x128xf32> to vector<1x128xf32>
    %362 = vector.broadcast %361 : vector<1x128xf32> to vector<49x128xf32>
    %363 = arith.mulf %360, %362 : vector<49x128xf32>
    %364 = arith.addf %357, %363 : vector<49x128xf32>
    %c15_171 = arith.constant 15 : index
    %c0_172 = arith.constant 0 : index
    %365 = vector.load %arg7[%c15_171, %c0_172] : memref<65x128xf32, #tpu.memory_space<vmem>>, vector<49x128xf32>
    %366 = vector.extract_strided_slice %318 {offsets = [7, 0], sizes = [1, 128], strides = [1, 1]} : vector<9x128xf32> to vector<1x128xf32>
    %367 = vector.broadcast %366 : vector<1x128xf32> to vector<49x128xf32>
    %368 = arith.mulf %365, %367 : vector<49x128xf32>
    %369 = arith.addf %364, %368 : vector<49x128xf32>
    %c16_173 = arith.constant 16 : index
    %c0_174 = arith.constant 0 : index
    %370 = vector.load %arg7[%c16_173, %c0_174] : memref<65x128xf32, #tpu.memory_space<vmem>>, vector<49x128xf32>
    %cst_175 = arith.constant 0.000000e+00 : f32
    %371 = vector.broadcast %cst_175 : f32 to vector<49x128xf32>
    %372 = arith.select %24, %370, %371 : vector<49x128xi1>, vector<49x128xf32>
    %373 = vector.extract_strided_slice %318 {offsets = [8, 0], sizes = [1, 128], strides = [1, 1]} : vector<9x128xf32> to vector<1x128xf32>
    %374 = vector.broadcast %373 : vector<1x128xf32> to vector<49x128xf32>
    %375 = arith.mulf %372, %374 : vector<49x128xf32>
    %376 = arith.addf %369, %375 : vector<49x128xf32>
    %c0_176 = arith.constant 0 : index
    %c384_177 = arith.constant 384 : index
    %377 = vector.load %arg6[%c0_176, %c384_177] : memref<49x512xf32, #tpu.memory_space<vmem>>, vector<49x128xf32>
    tpu.vector_store %arg6[%c0_176, %c384_177], %376 {strides = array<i32>} : memref<49x512xf32, #tpu.memory_space<vmem>>, vector<49x128xf32>,
    return
  }
  func.func @transform_0(%arg0: i32) -> (i32, i32) {
    %c0_i32 = arith.constant 0 : i32
    %c0_i32_0 = arith.constant 0 : i32
    %c0_i32_1 = arith.constant 0 : i32
    return %c0_i32, %c0_i32_0 : i32, i32
  }
  func.func @transform_1(%arg0: i32) -> (i32, i32) {
    %c0_i32 = arith.constant 0 : i32
    %c0_i32_0 = arith.constant 0 : i32
    return %c0_i32, %arg0 : i32, i32
  }
  func.func @transform_2(%arg0: i32) -> (i32, i32) {
    %c0_i32 = arith.constant 0 : i32
    %c0_i32_0 = arith.constant 0 : i32
    return %c0_i32, %arg0 : i32, i32
  }
  func.func @transform_3(%arg0: i32) -> (i32, i32) {
    %c0_i32 = arith.constant 0 : i32
    %c0_i32_0 = arith.constant 0 : i32
    return %c0_i32, %arg0 : i32, i32
  }
  func.func @transform_4(%arg0: i32) -> (i32, i32) {
    %c0_i32 = arith.constant 0 : i32
    %c0_i32_0 = arith.constant 0 : i32
    return %c0_i32, %arg0 : i32, i32
  }
  func.func @transform_5(%arg0: i32) -> (i32, i32) {
    %c0_i32 = arith.constant 0 : i32
    %c0_i32_0 = arith.constant 0 : i32
    return %c0_i32, %arg0 : i32, i32
  }
}

</mosaic_0001>

<llo_original>
// kernel: run_prepared.1
$region0: #{run_prepared.1}
  #allocation0 [shape = 'u32[]', space=smem, size = 0x4, offset = 0x4, fixed_abs, tag = 'smem constant byte address 0x4 - core index']
  #allocation1 [shape = 'u32[72,128]{1,0:T(1,128)}', space=vmem, size = 0x9000, scoped, tag = 'internal scratch']
  #allocation2 [shape = 'f32[65,128]{1,0:T(8,128)}', space=vmem, size = 0x9000, scoped, tag = 'scratch operand']
  %s0 = inlined_call_operand.vmem [shape: f32[49,160], index: 0, kind: input, shape index: {}]
  %s1 = inlined_call_operand.hbm [shape: f32[160,1024], index: 1, kind: input, shape index: {}]
  %s2 = inlined_call_operand.vmem [shape: f32[1,1024], index: 2, kind: input, shape index: {}]
  %s3 = inlined_call_operand.vmem [shape: f32[1,1024], index: 3, kind: input, shape index: {}]
  %s4 = inlined_call_operand.vmem [shape: f32[9,1024], index: 4, kind: input, shape index: {}]
  %s5 = inlined_call_operand.vmem [shape: f32[49,1024], index: 5, kind: output, shape index: {}]
  %s6 = sld [smem:[#allocation0]]
  $region99: #{run_prepared.1} parent=0
    _
  %s8 = ssub.s32 1, %s6
  %s9 = scalar_select 0, %s8, %s6
  $region1: #{run_prepared.1} parent=0
    #allocation3 [shape = 'u8[655360]{0}', space=vmem, size = 0xa0000, scoped, tag = 'input window, operand 1']
    #allocation4 [shape = 's32[2]{0}', space=sflag, size = 0x8, scoped, tag = 'scoped memory for run_prepared.1']
    #allocation5 [shape = 'u8[65536]{0}', space=vmem, size = 0x10000, scoped, tag = 'input window, operand 4']
    #allocation6 [shape = 'u8[229376]{0}', space=vmem, size = 0x38000, scoped, tag = 'output window, operand 0']
    %10 = vsyncpa [#allocation4], 0
    %s11 = scalar_lea.sflag [#allocation4], 1
    %12 = vsyncpa %s11, 0
    loop: start=0, step=1, limit=4
    $region2: #{run_prepared.1} parent=1 // loop_pre_header
      _
    $region3: #{run_prepared.1} parent=1 // loop_header
      %s14 = sphi 0, %s18
      %p15 = scmp.ge.s32.totalorder %s14, 4
      %s22 = sphi 0, %s22
      %s24 = sphi 0, %s22
      %s25 = sphi 0, %s24
      %s39 = sphi 0, %s25
      %s45 = sphi 0, %s47
      %s48 = sphi 0, %s45
      %s49 = sphi 0, %s48
      %s65 = sphi 0, %s49
      %s71 = sphi 0, %s73
      %s74 = sphi 0, %s71
      %s75 = sphi 0, %s74
      %s91 = sphi 0, %s75
      %s97 = sphi 0, %s99
      %s100 = sphi 0, %s97
      %s101 = sphi 0, %s100
      %s117 = sphi 0, %s101
      %s123 = sphi 0, %s125
      %s126 = sphi 0, %s123
      %s127 = sphi 0, %s126
      %s143 = sphi 0, %s127
      %s149 = sphi 0, %s151
      %s152 = sphi 0, %s149
      %s153 = sphi 0, %s152
      %s169 = sphi 0, %s153
    $region4: #{run_prepared.1} parent=1 // loop_header_branch
      %17 = sbr.rel (%p15) target = $region8
    $region5: #{run_prepared.1} parent=1 // loop_body
      %s19 = ssub.s32 %s14, 1
      %s20 = ssub.s32 %s14, 2
      %s21 = sadd.s32 %s14, 1
      %s23 = sadd.s32 %s22, 1
      %p26 = scmp.eq.s32.totalorder %s14, 1
      %p27 = scmp.ne.s32.totalorder %s22, %s24
      %p28 = scmp.eq.s32.totalorder %s14, 0
      %p29 = por %p27, %p28
      %p30 = scmp.ne.s32.totalorder %s22, %s24
      %p31 = scmp.eq.s32.totalorder %s19, 1
      %p32 = por %p30, %p31
      %p33 = scmp.ne.s32.totalorder %s24, %s25
      %p34 = scmp.eq.s32.totalorder %s19, 0
      %p35 = por %p33, %p34
      %p36 = scmp.ne.s32.totalorder %s24, %s25
      %p37 = scmp.eq.s32.totalorder %s20, 1
      %p38 = por %p36, %p37
      %p40 = scmp.ne.s32.totalorder %s25, %s39
      %p41 = scmp.eq.s32.totalorder %s20, 0
      %p42 = por %p40, %p41
      %s43 = ssub.s32 %s14, %s21
      %p44 = scmp.eq.s32.totalorder %s43, 0
      %s46 = sadd.s32 %s45, 1
      %s47 = scalar_select %p44, %s45, %s46
      %p50 = pneg %p44
      %p51 = scmp.eq.s32.totalorder %s14, 1
      %p52 = por %p50, %p51
      %p53 = scmp.ne.s32.totalorder %s45, %s48
      %p54 = scmp.eq.s32.totalorder %s14, 0
      %p55 = por %p53, %p54
      %p56 = scmp.ne.s32.totalorder %s45, %s48
      %p57 = scmp.eq.s32.totalorder %s19, 1
      %p58 = por %p56, %p57
      %p59 = scmp.ne.s32.totalorder %s48, %s49
      %p60 = scmp.eq.s32.totalorder %s19, 0
      %p61 = por %p59, %p60
      %p62 = scmp.ne.s32.totalorder %s48, %s49
      %p63 = scmp.eq.s32.totalorder %s20, 1
      %p64 = por %p62, %p63
      %p66 = scmp.ne.s32.totalorder %s49, %s65
      %p67 = scmp.eq.s32.totalorder %s20, 0
      %p68 = por %p66, %p67
      %s69 = ssub.s32 %s14, %s21
      %p70 = scmp.eq.s32.totalorder %s69, 0
      %s72 = sadd.s32 %s71, 1
      %s73 = scalar_select %p70, %s71, %s72
      %p76 = pneg %p70
      %p77 = scmp.eq.s32.totalorder %s14, 1
      %p78 = por %p76, %p77
      %p79 = scmp.ne.s32.totalorder %s71, %s74
      %p80 = scmp.eq.s32.totalorder %s14, 0
      %p81 = por %p79, %p80
      %p82 = scmp.ne.s32.totalorder %s71, %s74
      %p83 = scmp.eq.s32.totalorder %s19, 1
      %p84 = por %p82, %p83
      %p85 = scmp.ne.s32.totalorder %s74, %s75
      %p86 = scmp.eq.s32.totalorder %s19, 0
      %p87 = por %p85, %p86
      %p88 = scmp.ne.s32.totalorder %s74, %s75
      %p89 = scmp.eq.s32.totalorder %s20, 1
      %p90 = por %p88, %p89
      %p92 = scmp.ne.s32.totalorder %s75, %s91
      %p93 = scmp.eq.s32.totalorder %s20, 0
      %p94 = por %p92, %p93
      %s95 = ssub.s32 %s14, %s21
      %p96 = scmp.eq.s32.totalorder %s95, 0
      %s98 = sadd.s32 %s97, 1
      %s99 = scalar_select %p96, %s97, %s98
      %p102 = pneg %p96
      %p103 = scmp.eq.s32.totalorder %s14, 1
      %p104 = por %p102, %p103
      %p105 = scmp.ne.s32.totalorder %s97, %s100
      %p106 = scmp.eq.s32.totalorder %s14, 0
      %p107 = por %p105, %p106
      %p108 = scmp.ne.s32.totalorder %s97, %s100
      %p109 = scmp.eq.s32.totalorder %s19, 1
      %p110 = por %p108, %p109
      %p111 = scmp.ne.s32.totalorder %s100, %s101
      %p112 = scmp.eq.s32.totalorder %s19, 0
      %p113 = por %p111, %p112
      %p114 = scmp.ne.s32.totalorder %s100, %s101
      %p115 = scmp.eq.s32.totalorder %s20, 1
      %p116 = por %p114, %p115
      %p118 = scmp.ne.s32.totalorder %s101, %s117
      %p119 = scmp.eq.s32.totalorder %s20, 0
      %p120 = por %p118, %p119
      %s121 = ssub.s32 %s14, %s21
      %p122 = scmp.eq.s32.totalorder %s121, 0
      %s124 = sadd.s32 %s123, 1
      %s125 = scalar_select %p122, %s123, %s124
      %p128 = pneg %p122
      %p129 = scmp.eq.s32.totalorder %s14, 1
      %p130 = por %p128, %p129
      %p131 = scmp.ne.s32.totalorder %s123, %s126
      %p132 = scmp.eq.s32.totalorder %s14, 0
      %p133 = por %p131, %p132
      %p134 = scmp.ne.s32.totalorder %s123, %s126
      %p135 = scmp.eq.s32.totalorder %s19, 1
      %p136 = por %p134, %p135
      %p137 = scmp.ne.s32.totalorder %s126, %s127
      %p138 = scmp.eq.s32.totalorder %s19, 0
      %p139 = por %p137, %p138
      %p140 = scmp.ne.s32.totalorder %s126, %s127
      %p141 = scmp.eq.s32.totalorder %s20, 1
      %p142 = por %p140, %p141
      %p144 = scmp.ne.s32.totalorder %s127, %s143
      %p145 = scmp.eq.s32.totalorder %s20, 0
      %p146 = por %p144, %p145
      %s147 = ssub.s32 %s14, %s21
      %p148 = scmp.eq.s32.totalorder %s147, 0
      %s150 = sadd.s32 %s149, 1
      %s151 = scalar_select %p148, %s149, %s150
      %p154 = pneg %p148
      %p155 = scmp.eq.s32.totalorder %s14, 1
      %p156 = por %p154, %p155
      %p157 = scmp.ne.s32.totalorder %s149, %s152
      %p158 = scmp.eq.s32.totalorder %s14, 0
      %p159 = por %p157, %p158
      %p160 = scmp.ne.s32.totalorder %s149, %s152
      %p161 = scmp.eq.s32.totalorder %s19, 1
      %p162 = por %p160, %p161
      %p163 = scmp.ne.s32.totalorder %s152, %s153
      %p164 = scmp.eq.s32.totalorder %s19, 0
      %p165 = por %p163, %p164
      %p166 = scmp.ne.s32.totalorder %s152, %s153
      %p167 = scmp.eq.s32.totalorder %s20, 1
      %p168 = por %p166, %p167
      %p170 = scmp.ne.s32.totalorder %s153, %s169
      %p171 = scmp.eq.s32.totalorder %s20, 0
      %p172 = por %p170, %p171
      %p173 = scmp.le.s32.totalorder 1, %s14
      %p174 = scmp.lt.s32.totalorder %s14, 3
      %p175 = pnand %p173, %p174
      %p176 = pneg %p175
      // Predicated region
      $region9: #{run_prepared.1} parent=5 // pred_check
        _
      $region10: #{run_prepared.1} parent=5 // pred_check_branch
        %178 = sbr.rel (%p175) target = $region12
      $region11: #{run_prepared.1} parent=5 // pred_region
        %s179 = ssub.s32 %s14, 1
        // Predicated region
        $region13: #{run_prepared.1} parent=11 // pred_check
          %p180 = pneg %p35
        $region14: #{run_prepared.1} parent=11 // pred_check_branch
          %182 = sbr.rel (%p180) target = $region16
        $region15: #{run_prepared.1} parent=11 // pred_region
          _
        $region16: #{run_prepared.1} parent=11 // pred_fallthru
          _
      $region12: #{run_prepared.1} parent=5 // pred_fallthru
        _
      %p183 = scmp.lt.s32.totalorder %s14, 2
      // Predicated region
      $region17: #{run_prepared.1} parent=5 // pred_check
        %p184 = pneg %p183
      $region18: #{run_prepared.1} parent=5 // pred_check_branch
        %186 = sbr.rel (%p184) target = $region20
      $region19: #{run_prepared.1} parent=5 // pred_region
        // Predicated region
        $region21: #{run_prepared.1} parent=19 // pred_check
          %p187 = pneg %p55
        $region22: #{run_prepared.1} parent=19 // pred_check_branch
          %189 = sbr.rel (%p187) target = $region24
        $region23: #{run_prepared.1} parent=19 // pred_region
          %s190 = sand.u32 %s45, 1
          %s191 = scalar_lea.sflag [#allocation4], %s190
          %s192 = sand.u32 %s45, 1
          %s193 = smul.addr %s192, 640
          %s194 = scalar_lea.vmem [#allocation3], %s193
          %s195 = smul.u32 4, %s14
          %197 = vsyncadd %s191, 0
          %s198 = smul.addr %s195, 8
          %s199 = scalar_lea.hbm %s1, %s198
          %s200 = sshll.u32 %s199, 4
          %s201 = int_to_ptr.hbm [resolvable:$true] %s200
          %s202 = sshll.u32 %s194, 4
          %s203 = int_to_ptr.vmem [resolvable:$true] %s202
          %208 = dma.hbm_to_vmem [thread:$0]  %s201, 10240, %s203, %s191, 1024, 512, 32
        $region24: #{run_prepared.1} parent=19 // pred_fallthru
          _
        // Predicated region
        $region25: #{run_prepared.1} parent=19 // pred_check
          %p209 = pneg %p81
        $region26: #{run_prepared.1} parent=19 // pred_check_branch
          %211 = sbr.rel (%p209) target = $region28
        $region27: #{run_prepared.1} parent=19 // pred_region
          %s212 = smul.u32 4, %s14
          %p213 = scmp.lt.s32.totalorder %s212, 7
          %s214 = scalar_select %p213, %s212, 7
          %s215 = scalar_lea.vmem %s2, %s214
          %s216 = smul.u32 4, %s14
        $region28: #{run_prepared.1} parent=19 // pred_fallthru
          _
        // Predicated region
        $region29: #{run_prepared.1} parent=19 // pred_check
          %p217 = pneg %p107
        $region30: #{run_prepared.1} parent=19 // pred_check_branch
          %219 = sbr.rel (%p217) target = $region32
        $region31: #{run_prepared.1} parent=19 // pred_region
          %s220 = smul.u32 4, %s14
          %p221 = scmp.lt.s32.totalorder %s220, 7
          %s222 = scalar_select %p221, %s220, 7
          %s223 = scalar_lea.vmem %s3, %s222
          %s224 = smul.u32 4, %s14
        $region32: #{run_prepared.1} parent=19 // pred_fallthru
          _
        // Predicated region
        $region33: #{run_prepared.1} parent=19 // pred_check
          %p225 = pneg %p133
        $region34: #{run_prepared.1} parent=19 // pred_check_branch
          %227 = sbr.rel (%p225) target = $region36
        $region35: #{run_prepared.1} parent=19 // pred_region
          %s228 = sand.u32 %s123, 1
          %s229 = sand.u32 %s123, 1
          %s230 = smul.addr %s229, 64
          %s231 = scalar_lea.vmem [#allocation5], %s230
          %s232 = smul.u32 4, %s14
          %s233 = smul.addr %s232, 8
          %s234 = scalar_lea.vmem %s4, %s233
          // Predicated region
          $region37: #{run_prepared.1} parent=35 // pred_check
            _
          $region38: #{run_prepared.1} parent=35 // pred_check_branch
            %236 = sbr.rel (0) target = $region40
          $region39: #{run_prepared.1} parent=35 // pred_region
            // Predicated region
            $region41: #{run_prepared.1} parent=39 // pred_check
              _
            $region42: #{run_prepared.1} parent=39 // pred_check_branch
              %238 = sbr.rel (0) target = $region44
            $region43: #{run_prepared.1} parent=39 // pred_region
              loop: start=0, step=1, limit=1
              $region45: #{run_prepared.1} parent=43 // loop_pre_header
                _
              $region46: #{run_prepared.1} parent=43 // loop_header
                %s240 = sphi 0, %s244
                %p241 = scmp.ge.s32.totalorder %s240, 1
                %s245 = sphi %s234, %s234
                %s246 = sphi %s231, %s231
              $region47: #{run_prepared.1} parent=43 // loop_header_branch
                %243 = sbr.rel (%p241) target = $region51
              $region48: #{run_prepared.1} parent=43 // loop_body
                %v247 = vld [vmem:[%s245] sm:$0xff]
                %248 = vst [vmem:[%s246] sm:$0xff] %v247
                %v249 = vld [vmem:[%s245 + $0x8] sm:$0xff]
                %250 = vst [vmem:[%s246 + $0x8] sm:$0xff] %v249
                %v251 = vld [vmem:[%s245 + $0x10] sm:$0xff]
                %252 = vst [vmem:[%s246 + $0x10] sm:$0xff] %v251
                %v253 = vld [vmem:[%s245 + $0x18] sm:$0xff]
                %254 = vst [vmem:[%s246 + $0x18] sm:$0xff] %v253
                %v255 = vld [vmem:[%s245 + $0x40] sm:$0xff]
                %256 = vst [vmem:[%s246 + $0x20] sm:$0xff] %v255
                %v257 = vld [vmem:[%s245 + $0x48] sm:$0xff]
                %258 = vst [vmem:[%s246 + $0x28] sm:$0xff] %v257
                %v259 = vld [vmem:[%s245 + $0x50] sm:$0xff]
                %260 = vst [vmem:[%s246 + $0x30] sm:$0xff] %v259
                %v261 = vld [vmem:[%s245 + $0x58] sm:$0xff]
                %262 = vst [vmem:[%s246 + $0x38] sm:$0xff] %v261
              $region49: #{run_prepared.1} parent=43 // loop_footer
                %s244 = sadd.s32 1, %s240
              $region50: #{run_prepared.1} parent=43 // loop_footer_branch
                %239 = sbr.rel target = $region46
              $region51: #{run_prepared.1} parent=43 // loop_exit
                _
            $region44: #{run_prepared.1} parent=39 // pred_fallthru
              _
            // Predicated region
            $region52: #{run_prepared.1} parent=39 // pred_check
              _
            $region53: #{run_prepared.1} parent=39 // pred_check_branch
              %264 = sbr.rel target = $region55
            $region54: #{run_prepared.1} parent=39 // pred_region
              _
            $region55: #{run_prepared.1} parent=39 // pred_fallthru
              _
          $region40: #{run_prepared.1} parent=35 // pred_fallthru
            _
          %265 = vnop
        $region36: #{run_prepared.1} parent=19 // pred_fallthru
          _
      $region20: #{run_prepared.1} parent=5 // pred_fallthru
        _
      %p266 = scmp.le.s32.totalorder 1, %s14
      %p267 = scmp.lt.s32.totalorder %s14, 3
      %p268 = pnand %p266, %p267
      %p269 = pneg %p268
      // Predicated region
      $region56: #{run_prepared.1} parent=5 // pred_check
        _
      $region57: #{run_prepared.1} parent=5 // pred_check_branch
        %271 = sbr.rel (%p268) target = $region59
      $region58: #{run_prepared.1} parent=5 // pred_region
        %s272 = ssub.s32 %s14, 1
        %s273 = sand.u32 %s48, 1
        %s274 = scalar_lea.sflag [#allocation4], %s273
        %s275 = sand.u32 %s48, 1
        %s276 = smul.addr %s275, 640
        %s277 = scalar_lea.vmem [#allocation3], %s276
        // Predicated region
        $region60: #{run_prepared.1} parent=58 // pred_check
          %p278 = pneg %p61
        $region61: #{run_prepared.1} parent=58 // pred_check_branch
          %280 = sbr.rel (%p278) target = $region63
        $region62: #{run_prepared.1} parent=58 // pred_region
          %282 = dma.done %s274, 10240
        $region63: #{run_prepared.1} parent=58 // pred_fallthru
          _
        %s283 = sand.u32 %s126, 1
        %s284 = sand.u32 %s126, 1
        %s285 = smul.addr %s284, 64
        %s286 = scalar_lea.vmem [#allocation5], %s285
        // Predicated region
        $region64: #{run_prepared.1} parent=58 // pred_check
          %p287 = pneg %p139
        $region65: #{run_prepared.1} parent=58 // pred_check_branch
          %289 = sbr.rel (%p287) target = $region67
        $region66: #{run_prepared.1} parent=58 // pred_region
          _
        $region67: #{run_prepared.1} parent=58 // pred_fallthru
          _
        %p290 = pneg %p35
        %p291 = pneg %p32
        %s292 = sand.u32 %s48, 1
        %s293 = scalar_lea.sflag [#allocation4], %s292
        %s294 = sand.u32 %s48, 1
        %s295 = smul.addr %s294, 640
        %s296 = scalar_lea.vmem [#allocation3], %s295
        %p297 = pneg %p61
        %p298 = pneg %p58
        %s299 = smul.u32 4, %s19
        %p300 = scmp.lt.s32.totalorder %s299, 7
        %s301 = scalar_select %p300, %s299, 7
        %s302 = scalar_lea.vmem %s2, %s301
        %p303 = pneg %p87
        %p304 = pneg %p84
        %s305 = smul.u32 4, %s19
        %p306 = scmp.lt.s32.totalorder %s305, 7
        %s307 = scalar_select %p306, %s305, 7
        %s308 = scalar_lea.vmem %s3, %s307
        %p309 = pneg %p113
        %p310 = pneg %p110
        %s311 = sand.u32 %s126, 1
        %s312 = sand.u32 %s126, 1
        %s313 = smul.addr %s312, 64
        %s314 = scalar_lea.vmem [#allocation5], %s313
        %p315 = pneg %p139
        %p316 = pneg %p136
        %p317 = pneg %p165
        %p318 = pneg %p162
        %s319 = sand.u32 %s152, 1
        %s320 = sand.u32 %s152, 1
        %s321 = smul.addr %s320, 224
        %s322 = scalar_lea.vmem [#allocation6], %s321
        %s323 = smul.u32 4, %s19
        %s324 = smul.u32 4, %s19
        %p325 = scmp.lt.s32.totalorder %s324, 7
        %s326 = scalar_select %p325, %s324, 7
        %s327 = scalar_lea.vmem %s2, %s326
        %s328 = smul.u32 4, %s19
        %s329 = smul.u32 4, %s19
        %p330 = scmp.lt.s32.totalorder %s329, 7
        %s331 = scalar_select %p330, %s329, 7
        %s332 = scalar_lea.vmem %s3, %s331
        %s333 = smul.u32 4, %s19
        %s334 = smul.u32 4, %s19
        %s335 = smul.u32 4, %s19
        %336 = vst [vmem:[#allocation2] sm:$0xff] 0.0
        %337 = vst [vmem:[#allocation2 + $0x39] sm:$0xff] 0.0
        %v338 = vlaneseq
        %v339 = vshrl.u32 %v338, 7
        %v340 = vadd.s32 %v339, 8
        %v341 = vadd.s32 %v339, 16
        %v342 = vadd.s32 %v339, 24
        %v343 = vadd.s32 %v339, 32
        %v344 = vadd.s32 %v339, 40
        %v345 = vadd.s32 %v339, 48
        %vm346 = vcmp.lt.s32.totalorder %v339, 0
        %v347 = vsub.s32 0, %v339
        %v348 = vsel %vm346, %v347, %v339
        %v349 = vand.u32 %v348, 65535
        %v350 = vshrl.u32 %v348, 16
        %v352 = vmul.u32 %v349, 9362
        %v353 = vmul.u32 %v349, 37449
        %v354 = vmul.u32 %v350, 9362
        %v355 = vmul.u32 %v350, 37449
        %v356 = vshll.u32 %v353, 16
        %v357 = vshrl.u32 %v353, 16
        %v358 = vshll.u32 %v354, 16
        %v359 = vshrl.u32 %v354, 16
        %vm360 = vc.u32 %v352, %v356
        %v361 = vsel %vm360, 1, 0
        %v362 = vadd.s32 %v352, %v356
        %v363 = vadd.s32 %v355, %v361
        %vm364 = vc.u32 %v362, %v358
        %v365 = vsel %vm364, 1, 0
        %v366 = vadd.s32 %v362, %v358
        %v367 = vadd.s32 %v363, %v365
        %v368 = vadd.s32 %v367, %v357
        %v369 = vadd.s32 %v368, %v359
        %vm370 = vc.u32 %v366, 2454267026
        %v371 = vsel %vm370, 1, 0
        %v372 = vadd.s32 %v369, %v371
        %v373 = vshrl.u32 %v372, 2
        %v374 = vmul.u32 %v373, 7
        %v375 = vsub.s32 %v348, %v374
        %v376 = vsub.s32 0, %v375
        %v377 = vsel %vm346, %v376, %v375
        %vm378 = vcmp.lt.s32.totalorder %v340, 0
        %v379 = vsub.s32 0, %v340
        %v380 = vsel %vm378, %v379, %v340
        %v381 = vand.u32 %v380, 65535
        %v382 = vshrl.u32 %v380, 16
        %v384 = vmul.u32 %v381, 9362
        %v385 = vmul.u32 %v381, 37449
        %v386 = vmul.u32 %v382, 9362
        %v387 = vmul.u32 %v382, 37449
        %v388 = vshll.u32 %v385, 16
        %v389 = vshrl.u32 %v385, 16
        %v390 = vshll.u32 %v386, 16
        %v391 = vshrl.u32 %v386, 16
        %vm392 = vc.u32 %v384, %v388
        %v393 = vsel %vm392, 1, 0
        %v394 = vadd.s32 %v384, %v388
        %v395 = vadd.s32 %v387, %v393
        %vm396 = vc.u32 %v394, %v390
        %v397 = vsel %vm396, 1, 0
        %v398 = vadd.s32 %v394, %v390
        %v399 = vadd.s32 %v395, %v397
        %v400 = vadd.s32 %v399, %v389
        %v401 = vadd.s32 %v400, %v391
        %vm402 = vc.u32 %v398, 2454267026
        %v403 = vsel %vm402, 1, 0
        %v404 = vadd.s32 %v401, %v403
        %v405 = vshrl.u32 %v404, 2
        %v406 = vmul.u32 %v405, 7
        %v407 = vsub.s32 %v380, %v406
        %v408 = vsub.s32 0, %v407
        %v409 = vsel %vm378, %v408, %v407
        %vm410 = vcmp.lt.s32.totalorder %v341, 0
        %v411 = vsub.s32 0, %v341
        %v412 = vsel %vm410, %v411, %v341
        %v413 = vand.u32 %v412, 65535
        %v414 = vshrl.u32 %v412, 16
        %v416 = vmul.u32 %v413, 9362
        %v417 = vmul.u32 %v413, 37449
        %v418 = vmul.u32 %v414, 9362
        %v419 = vmul.u32 %v414, 37449
        %v420 = vshll.u32 %v417, 16
        %v421 = vshrl.u32 %v417, 16
        %v422 = vshll.u32 %v418, 16
        %v423 = vshrl.u32 %v418, 16
        %vm424 = vc.u32 %v416, %v420
        %v425 = vsel %vm424, 1, 0
        %v426 = vadd.s32 %v416, %v420
        %v427 = vadd.s32 %v419, %v425
        %vm428 = vc.u32 %v426, %v422
        %v429 = vsel %vm428, 1, 0
        %v430 = vadd.s32 %v426, %v422
        %v431 = vadd.s32 %v427, %v429
        %v432 = vadd.s32 %v431, %v421
        %v433 = vadd.s32 %v432, %v423
        %vm434 = vc.u32 %v430, 2454267026
        %v435 = vsel %vm434, 1, 0
        %v436 = vadd.s32 %v433, %v435
        %v437 = vshrl.u32 %v436, 2
        %v438 = vmul.u32 %v437, 7
        %v439 = vsub.s32 %v412, %v438
        %v440 = vsub.s32 0, %v439
        %v441 = vsel %vm410, %v440, %v439
        %vm442 = vcmp.lt.s32.totalorder %v342, 0
        %v443 = vsub.s32 0, %v342
        %v444 = vsel %vm442, %v443, %v342
        %v445 = vand.u32 %v444, 65535
        %v446 = vshrl.u32 %v444, 16
        %v448 = vmul.u32 %v445, 9362
        %v449 = vmul.u32 %v445, 37449
        %v450 = vmul.u32 %v446, 9362
        %v451 = vmul.u32 %v446, 37449
        %v452 = vshll.u32 %v449, 16
        %v453 = vshrl.u32 %v449, 16
        %v454 = vshll.u32 %v450, 16
        %v455 = vshrl.u32 %v450, 16
        %vm456 = vc.u32 %v448, %v452
        %v457 = vsel %vm456, 1, 0
        %v458 = vadd.s32 %v448, %v452
        %v459 = vadd.s32 %v451, %v457
        %vm460 = vc.u32 %v458, %v454
        %v461 = vsel %vm460, 1, 0
        %v462 = vadd.s32 %v458, %v454
        %v463 = vadd.s32 %v459, %v461
        %v464 = vadd.s32 %v463, %v453
        %v465 = vadd.s32 %v464, %v455
        %vm466 = vc.u32 %v462, 2454267026
        %v467 = vsel %vm466, 1, 0
        %v468 = vadd.s32 %v465, %v467
        %v469 = vshrl.u32 %v468, 2
        %v470 = vmul.u32 %v469, 7
        %v471 = vsub.s32 %v444, %v470
        %v472 = vsub.s32 0, %v471
        %v473 = vsel %vm442, %v472, %v471
        %vm474 = vcmp.lt.s32.totalorder %v343, 0
        %v475 = vsub.s32 0, %v343
        %v476 = vsel %vm474, %v475, %v343
        %v477 = vand.u32 %v476, 65535
        %v478 = vshrl.u32 %v476, 16
        %v480 = vmul.u32 %v477, 9362
        %v481 = vmul.u32 %v477, 37449
        %v482 = vmul.u32 %v478, 9362
        %v483 = vmul.u32 %v478, 37449
        %v484 = vshll.u32 %v481, 16
        %v485 = vshrl.u32 %v481, 16
        %v486 = vshll.u32 %v482, 16
        %v487 = vshrl.u32 %v482, 16
        %vm488 = vc.u32 %v480, %v484
        %v489 = vsel %vm488, 1, 0
        %v490 = vadd.s32 %v480, %v484
        %v491 = vadd.s32 %v483, %v489
        %vm492 = vc.u32 %v490, %v486
        %v493 = vsel %vm492, 1, 0
        %v494 = vadd.s32 %v490, %v486
        %v495 = vadd.s32 %v491, %v493
        %v496 = vadd.s32 %v495, %v485
        %v497 = vadd.s32 %v496, %v487
        %vm498 = vc.u32 %v494, 2454267026
        %v499 = vsel %vm498, 1, 0
        %v500 = vadd.s32 %v497, %v499
        %v501 = vshrl.u32 %v500, 2
        %v502 = vmul.u32 %v501, 7
        %v503 = vsub.s32 %v476, %v502
        %v504 = vsub.s32 0, %v503
        %v505 = vsel %vm474, %v504, %v503
        %vm506 = vcmp.lt.s32.totalorder %v344, 0
        %v507 = vsub.s32 0, %v344
        %v508 = vsel %vm506, %v507, %v344
        %v509 = vand.u32 %v508, 65535
        %v510 = vshrl.u32 %v508, 16
        %v512 = vmul.u32 %v509, 9362
        %v513 = vmul.u32 %v509, 37449
        %v514 = vmul.u32 %v510, 9362
        %v515 = vmul.u32 %v510, 37449
        %v516 = vshll.u32 %v513, 16
        %v517 = vshrl.u32 %v513, 16
        %v518 = vshll.u32 %v514, 16
        %v519 = vshrl.u32 %v514, 16
        %vm520 = vc.u32 %v512, %v516
        %v521 = vsel %vm520, 1, 0
        %v522 = vadd.s32 %v512, %v516
        %v523 = vadd.s32 %v515, %v521
        %vm524 = vc.u32 %v522, %v518
        %v525 = vsel %vm524, 1, 0
        %v526 = vadd.s32 %v522, %v518
        %v527 = vadd.s32 %v523, %v525
        %v528 = vadd.s32 %v527, %v517
        %v529 = vadd.s32 %v528, %v519
        %vm530 = vc.u32 %v526, 2454267026
        %v531 = vsel %vm530, 1, 0
        %v532 = vadd.s32 %v529, %v531
        %v533 = vshrl.u32 %v532, 2
        %v534 = vmul.u32 %v533, 7
        %v535 = vsub.s32 %v508, %v534
        %v536 = vsub.s32 0, %v535
        %v537 = vsel %vm506, %v536, %v535
        %vm538 = vcmp.lt.s32.totalorder %v345, 0
        %v539 = vsub.s32 0, %v345
        %v540 = vsel %vm538, %v539, %v345
        %v541 = vand.u32 %v540, 65535
        %v542 = vshrl.u32 %v540, 16
        %v544 = vmul.u32 %v541, 9362
        %v545 = vmul.u32 %v541, 37449
        %v546 = vmul.u32 %v542, 9362
        %v547 = vmul.u32 %v542, 37449
        %v548 = vshll.u32 %v545, 16
        %v549 = vshrl.u32 %v545, 16
        %v550 = vshll.u32 %v546, 16
        %v551 = vshrl.u32 %v546, 16
        %vm552 = vc.u32 %v544, %v548
        %v553 = vsel %vm552, 1, 0
        %v554 = vadd.s32 %v544, %v548
        %v555 = vadd.s32 %v547, %v553
        %vm556 = vc.u32 %v554, %v550
        %v557 = vsel %vm556, 1, 0
        %v558 = vadd.s32 %v554, %v550
        %v559 = vadd.s32 %v555, %v557
        %v560 = vadd.s32 %v559, %v549
        %v561 = vadd.s32 %v560, %v551
        %vm562 = vc.u32 %v558, 2454267026
        %v563 = vsel %vm562, 1, 0
        %v564 = vadd.s32 %v561, %v563
        %v565 = vshrl.u32 %v564, 2
        %v566 = vmul.u32 %v565, 7
        %v567 = vsub.s32 %v540, %v566
        %v568 = vsub.s32 0, %v567
        %v569 = vsel %vm538, %v568, %v567
        %vm570 = vcmp.ne.s32.totalorder %v377, 0
        %vm571 = vcmp.ne.s32.totalorder %v409, 0
        %vm572 = vcmp.ne.s32.totalorder %v441, 0
        %vm573 = vcmp.ne.s32.totalorder %v473, 0
        %vm574 = vcmp.ne.s32.totalorder %v505, 0
        %vm575 = vcmp.ne.s32.totalorder %v537, 0
        %vm576 = vcmp.ne.s32.totalorder %v569, 0
        %vm577 = vcmp.lt.s32.totalorder %v377, 0
        %vm578 = vcmp.lt.s32.totalorder %v409, 0
        %vm579 = vcmp.lt.s32.totalorder %v441, 0
        %vm580 = vcmp.lt.s32.totalorder %v473, 0
        %vm581 = vcmp.lt.s32.totalorder %v505, 0
        %vm582 = vcmp.lt.s32.totalorder %v537, 0
        %vm583 = vcmp.lt.s32.totalorder %v569, 0
        %vm584 = vmand %vm577, %vm570
        %vm585 = vmand %vm578, %vm571
        %vm586 = vmand %vm579, %vm572
        %vm587 = vmand %vm580, %vm573
        %vm588 = vmand %vm581, %vm574
        %vm589 = vmand %vm582, %vm575
        %vm590 = vmand %vm583, %vm576
        %v591 = vadd.s32 %v377, 7
        %v592 = vadd.s32 %v409, 7
        %v593 = vadd.s32 %v441, 7
        %v594 = vadd.s32 %v473, 7
        %v595 = vadd.s32 %v505, 7
        %v596 = vadd.s32 %v537, 7
        %v597 = vadd.s32 %v569, 7
        %v598 = vsel %vm584, %v591, %v377
        %v599 = vsel %vm585, %v592, %v409
        %v600 = vsel %vm586, %v593, %v441
        %v601 = vsel %vm587, %v594, %v473
        %v602 = vsel %vm588, %v595, %v505
        %v603 = vsel %vm589, %v596, %v537
        %v604 = vsel %vm590, %v597, %v569
        %vm605 = vcmp.ne.s32.totalorder %v598, 0
        %vm606 = vcmp.ne.s32.totalorder %v599, 0
        %vm607 = vcmp.ne.s32.totalorder %v600, 0
        %vm608 = vcmp.ne.s32.totalorder %v601, 0
        %vm609 = vcmp.ne.s32.totalorder %v602, 0
        %vm610 = vcmp.ne.s32.totalorder %v603, 0
        %vm611 = vcmp.ne.s32.totalorder %v604, 0
        %vm612 = vcmp.ne.s32.totalorder %v598, 6
        %vm613 = vcmp.ne.s32.totalorder %v599, 6
        %vm614 = vcmp.ne.s32.totalorder %v600, 6
        %vm615 = vcmp.ne.s32.totalorder %v601, 6
        %vm616 = vcmp.ne.s32.totalorder %v602, 6
        %vm617 = vcmp.ne.s32.totalorder %v603, 6
        %vm618 = vcmp.ne.s32.totalorder %v604, 6
        %v619 = vld [vmem:[%s0] sm:$0xff]
        %v620 = vld [vmem:[%s0 + $0x8] sm:$0xff]
        %v621 = vld [vmem:[%s0 + $0x10] sm:$0xff]
        %v622 = vld [vmem:[%s0 + $0x18] sm:$0xff]
        %v623 = vld [vmem:[%s0 + $0x20] sm:$0xff]
        %v624 = vld [vmem:[%s0 + $0x28] sm:$0xff]
        %v625 = vld [vmem:[%s0 + $0x30] sm:$0xff]
        %v626 = vld [vmem:[%s0 + $0x38] sm:$0xff]
        %v627 = vld [vmem:[%s0 + $0x40] sm:$0xff]
        %v628 = vld [vmem:[%s0 + $0x48] sm:$0xff]
        %v629 = vld [vmem:[%s0 + $0x50] sm:$0xff]
        %v630 = vld [vmem:[%s0 + $0x58] sm:$0xff]
        %v631 = vld [vmem:[%s0 + $0x60] sm:$0x1]
        %v632 = vld [vmem:[%s0 + $0x68] sm:$0x1]
        %v633 = vld [vmem:[%s277] sm:$0xff]
        %v634 = vld [vmem:[%s277 + $0x20] sm:$0xff]
        %v635 = vld [vmem:[%s277 + $0x40] sm:$0xff]
        %v636 = vld [vmem:[%s277 + $0x60] sm:$0xff]
        %v637 = vld [vmem:[%s277 + $0x80] sm:$0xff]
        %v638 = vld [vmem:[%s277 + $0xa0] sm:$0xff]
        %v639 = vld [vmem:[%s277 + $0xc0] sm:$0xff]
        %v640 = vld [vmem:[%s277 + $0xe0] sm:$0xff]
        %v641 = vld [vmem:[%s277 + $0x100] sm:$0xff]
        %v642 = vld [vmem:[%s277 + $0x120] sm:$0xff]
        %v643 = vld [vmem:[%s277 + $0x140] sm:$0xff]
        %v644 = vld [vmem:[%s277 + $0x160] sm:$0xff]
        %v645 = vld [vmem:[%s277 + $0x180] sm:$0xff]
        %v646 = vld [vmem:[%s277 + $0x1a0] sm:$0xff]
        %v647 = vld [vmem:[%s277 + $0x1c0] sm:$0xff]
        %v648 = vld [vmem:[%s277 + $0x1e0] sm:$0xff]
        %v649 = vld [vmem:[%s277 + $0x200] sm:$0xff]
        %v650 = vld [vmem:[%s277 + $0x220] sm:$0xff]
        %v651 = vld [vmem:[%s277 + $0x240] sm:$0xff]
        %v652 = vld [vmem:[%s277 + $0x260] sm:$0xff]
        %vm653 = vcmask 261120
        %v655 = vsel %vm653, %v620, 0
        %v658 = vsel %vm653, %v622, 0
        %v661 = vsel %vm653, %v624, 0
        %v664 = vsel %vm653, %v626, 0
        %v667 = vsel %vm653, %v628, 0
        %v670 = vsel %vm653, %v630, 0
        %v673 = vsel %vm653, %v632, 0
        %675 = vmatpush.msra.mxu0 %v648
        %676 = vmatpush.msra.mxu0 %v647
        %677 = vmatpush.msra.mxu0 %v646
        %678 = vmatpush.msra.mxu0 %v645
        %679 = vmatpush.msra.mxu0 %v644
        %680 = vmatpush.msra.mxu0 %v643
        %681 = vmatpush.msra.mxu0 %v642
        %682 = vmatpush.msra.mxu0 %v641
        %683 = vmatpush.msra.mxu0 %v640
        %684 = vmatpush.msra.mxu0 %v639
        %685 = vmatpush.msra.mxu0 %v638
        %686 = vmatpush.msra.mxu0 %v637
        %687 = vmatpush.msra.mxu0 %v636
        %688 = vmatpush.msra.mxu0 %v635
        %689 = vmatpush.msra.mxu0 %v634
        %690 = vmatpush.msra.mxu0 %v633
        %691 = vmatmul.f32.gmra.mxu0 %v619
        %v692 = vpop.f32.mrf.mxu0
        %v693 = vadd.f32 0.0, %v692
        %694 = vmatmul.f32.gmra.mxu0 %v621
        %v695 = vpop.f32.mrf.mxu0
        %v696 = vadd.f32 0.0, %v695
        %697 = vmatmul.f32.gmra.mxu0 %v623
        %v698 = vpop.f32.mrf.mxu0
        %v699 = vadd.f32 0.0, %v698
        %700 = vmatmul.f32.gmra.mxu0 %v625
        %v701 = vpop.f32.mrf.mxu0
        %v702 = vadd.f32 0.0, %v701
        %703 = vmatmul.f32.gmra.mxu0 %v627
        %v704 = vpop.f32.mrf.mxu0
        %v705 = vadd.f32 0.0, %v704
        %706 = vmatmul.f32.gmra.mxu0 %v629
        %v707 = vpop.f32.mrf.mxu0
        %v708 = vadd.f32 0.0, %v707
        %709 = vmatmul.f32.gmra.mxu0 %v631
        %v710 = vpop.f32.mrf.mxu0
        %v711 = vadd.f32 0.0, %v710
        %712 = vdwg.mxu0
        %713 = vmatpush.msra.mxu0 0.0
        %714 = vmatpush.msra.mxu0 0.0
        %715 = vmatpush.msra.mxu0 0.0
        %716 = vmatpush.msra.mxu0 0.0
        %717 = vmatpush.msra.mxu0 0.0
        %718 = vmatpush.msra.mxu0 0.0
        %719 = vmatpush.msra.mxu0 0.0
        %720 = vmatpush.msra.mxu0 0.0
        %721 = vmatpush.msra.mxu0 0.0
        %722 = vmatpush.msra.mxu0 0.0
        %723 = vmatpush.msra.mxu0 0.0
        %724 = vmatpush.msra.mxu0 0.0
        %725 = vmatpush.msra.mxu0 %v652
        %726 = vmatpush.msra.mxu0 %v651
        %727 = vmatpush.msra.mxu0 %v650
        %728 = vmatpush.msra.mxu0 %v649
        %729 = vmatmul.f32.gmra.mxu0 %v655
        %v730 = vpop.f32.mrf.mxu0
        %v731 = vadd.f32 %v693, %v730
        %732 = vmatmul.f32.gmra.mxu0 %v658
        %v733 = vpop.f32.mrf.mxu0
        %v734 = vadd.f32 %v696, %v733
        %735 = vmatmul.f32.gmra.mxu0 %v661
        %v736 = vpop.f32.mrf.mxu0
        %v737 = vadd.f32 %v699, %v736
        %738 = vmatmul.f32.gmra.mxu0 %v664
        %v739 = vpop.f32.mrf.mxu0
        %v740 = vadd.f32 %v702, %v739
        %741 = vmatmul.f32.gmra.mxu0 %v667
        %v742 = vpop.f32.mrf.mxu0
        %v743 = vadd.f32 %v705, %v742
        %744 = vmatmul.f32.gmra.mxu0 %v670
        %v745 = vpop.f32.mrf.mxu0
        %v746 = vadd.f32 %v708, %v745
        %747 = vmatmul.f32.gmra.mxu0 %v673
        %v748 = vpop.f32.mrf.mxu0
        %v749 = vadd.f32 %v711, %v748
        %750 = vdwg.mxu0
        %v751 = vadd.f32 %v731, %v734
        %v752 = vadd.f32 %v751, %v737
        %v753 = vadd.f32 %v752, %v740
        %v754 = vadd.f32 %v753, %v743
        %v755 = vadd.f32 %v754, %v746
        %vm756 = vcmask 1040384
        %v757 = vsel %vm756, %v749, 0.0
        %v758 = vadd.f32 %v755, %v757
        %v759 = vrot.slane %v758, 4
        %v760 = vadd.f32 %v758, %v759
        %v761 = vrot.slane %v760, 2
        %v762 = vadd.f32 %v760, %v761
        %v763 = vrot.slane %v762, 1
        %v764 = vadd.f32 %v762, %v763
        %v765 = vmul.f32 %v764, 0.020408163
        %v766 = vsub.f32 %v731, %v765
        %v767 = vsub.f32 %v734, %v765
        %v768 = vsub.f32 %v737, %v765
        %v769 = vsub.f32 %v740, %v765
        %v770 = vsub.f32 %v743, %v765
        %v771 = vsub.f32 %v746, %v765
        %v772 = vsub.f32 %v749, %v765
        %v773 = vmul.f32 %v766, %v766
        %v774 = vmul.f32 %v767, %v767
        %v775 = vmul.f32 %v768, %v768
        %v776 = vmul.f32 %v769, %v769
        %v777 = vmul.f32 %v770, %v770
        %v778 = vmul.f32 %v771, %v771
        %v779 = vmul.f32 %v772, %v772
        %v780 = vadd.f32 %v773, %v774
        %v781 = vadd.f32 %v780, %v775
        %v782 = vadd.f32 %v781, %v776
        %v783 = vadd.f32 %v782, %v777
        %v784 = vadd.f32 %v783, %v778
        %v785 = vsel %vm756, %v779, 0.0
        %v786 = vadd.f32 %v784, %v785
        %v787 = vrot.slane %v786, 4
        %v788 = vadd.f32 %v786, %v787
        %v789 = vrot.slane %v788, 2
        %v790 = vadd.f32 %v788, %v789
        %v791 = vrot.slane %v790, 1
        %v792 = vadd.f32 %v790, %v791
        %v793 = vmul.f32 %v792, 0.020408163
        %v794 = vld [vmem:[%s327] sm:$0x1]
        %v795 = vadd.f32 %v793, 1e-05
        %v796 = vrsqrt.pop %v795
        %v797 = vmul.f32 %v796, %v795
        %v798 = vmul.f32 %v797, %v796
        %v799 = vmul.f32 0.5, %v798
        %v800 = vsub.f32 1.5, %v799
        %v801 = vmul.f32 %v796, %v800
        %vm802 = vweird.f32 %v795
        %vm803 = vweird.f32 %v796
        %vm804 = vmor %vm802, %vm803
        %v805 = vsel %vm804, %v796, %v801
        %v806 = vmul.f32 %v794, %v805
        %v808 = vperm.slane %v806, 0
        %v810 = vmul.f32 %v766, %v808
        %v811 = vmul.f32 %v767, %v808
        %v812 = vmul.f32 %v768, %v808
        %v813 = vmul.f32 %v769, %v808
        %v814 = vmul.f32 %v770, %v808
        %v815 = vmul.f32 %v771, %v808
        %v816 = vmul.f32 %v772, %v808
        %v817 = vld [vmem:[%s332] sm:$0x1]
        %v819 = vperm.slane %v817, 0
        %v821 = vadd.f32 %v810, %v819
        %v822 = vadd.f32 %v811, %v819
        %v823 = vadd.f32 %v812, %v819
        %v824 = vadd.f32 %v813, %v819
        %v825 = vadd.f32 %v814, %v819
        %v826 = vadd.f32 %v815, %v819
        %v827 = vadd.f32 %v816, %v819
        %v828 = vmax.f32 %v821, 0.0
        %v829 = vmax.f32 %v822, 0.0
        %v830 = vmax.f32 %v823, 0.0
        %v831 = vmax.f32 %v824, 0.0
        %v832 = vmax.f32 %v825, 0.0
        %v833 = vmax.f32 %v826, 0.0
        %v834 = vmax.f32 %v827, 0.0
        %v835 = vmin.f32 %v828, 6.0
        %v836 = vmin.f32 %v829, 6.0
        %v837 = vmin.f32 %v830, 6.0
        %v838 = vmin.f32 %v831, 6.0
        %v839 = vmin.f32 %v832, 6.0
        %v840 = vmin.f32 %v833, 6.0
        %v841 = vmin.f32 %v834, 6.0
        %842 = vst [vmem:[#allocation2 + $0x8] sm:$0xff] %v835
        %843 = vst [vmem:[#allocation2 + $0x10] sm:$0xff] %v836
        %844 = vst [vmem:[#allocation2 + $0x18] sm:$0xff] %v837
        %845 = vst [vmem:[#allocation2 + $0x20] sm:$0xff] %v838
        %846 = vst [vmem:[#allocation2 + $0x28] sm:$0xff] %v839
        %847 = vst [vmem:[#allocation2 + $0x30] sm:$0xff] %v840
        %848 = vst [vmem:[#allocation2 + $0x38] sm:$0x1] %v841
        %v849 = vld [vmem:[%s286] sm:$0xff]
        %v850 = vld [vmem:[%s286 + $0x20] sm:$0x1]
        %v851 = vld [vmem:[#allocation2] sm:$0xff]
        %v852 = vld [vmem:[#allocation2 + $0x8] sm:$0xff]
        %v853 = vld [vmem:[#allocation2 + $0x10] sm:$0xff]
        %v854 = vld [vmem:[#allocation2 + $0x18] sm:$0xff]
        %v855 = vld [vmem:[#allocation2 + $0x20] sm:$0xff]
        %v856 = vld [vmem:[#allocation2 + $0x28] sm:$0xff]
        %v857 = vld [vmem:[#allocation2 + $0x30] sm:$0x1]
        %v858 = vsel %vm605, %v851, 0.0
        %v859 = vsel %vm606, %v852, 0.0
        %v860 = vsel %vm607, %v853, 0.0
        %v861 = vsel %vm608, %v854, 0.0
        %v862 = vsel %vm609, %v855, 0.0
        %v863 = vsel %vm610, %v856, 0.0
        %v864 = vsel %vm611, %v857, 0.0
        %v865 = vperm.slane %v849, 0
        %v866 = vmul.f32 %v858, %v865
        %v867 = vmul.f32 %v859, %v865
        %v868 = vmul.f32 %v860, %v865
        %v869 = vmul.f32 %v861, %v865
        %v870 = vmul.f32 %v862, %v865
        %v871 = vmul.f32 %v863, %v865
        %v872 = vmul.f32 %v864, %v865
        %v873 = vadd.f32 %v866, 0.0
        %v874 = vadd.f32 %v867, 0.0
        %v875 = vadd.f32 %v868, 0.0
        %v876 = vadd.f32 %v869, 0.0
        %v877 = vadd.f32 %v870, 0.0
        %v878 = vadd.f32 %v871, 0.0
        %v879 = vadd.f32 %v872, 0.0
        %v880 = vld [vmem:[#allocation2 + $0x1] sm:$0xff]
        %v881 = vld [vmem:[#allocation2 + $0x9] sm:$0xff]
        %v882 = vld [vmem:[#allocation2 + $0x11] sm:$0xff]
        %v883 = vld [vmem:[#allocation2 + $0x19] sm:$0xff]
        %v884 = vld [vmem:[#allocation2 + $0x21] sm:$0xff]
        %v885 = vld [vmem:[#allocation2 + $0x29] sm:$0xff]
        %v886 = vld [vmem:[#allocation2 + $0x31] sm:$0x1]
        %v887 = vperm.slane %v849, 1
        %v888 = vmul.f32 %v880, %v887
        %v889 = vmul.f32 %v881, %v887
        %v890 = vmul.f32 %v882, %v887
        %v891 = vmul.f32 %v883, %v887
        %v892 = vmul.f32 %v884, %v887
        %v893 = vmul.f32 %v885, %v887
        %v894 = vmul.f32 %v886, %v887
        %v895 = vadd.f32 %v873, %v888
        %v896 = vadd.f32 %v874, %v889
        %v897 = vadd.f32 %v875, %v890
        %v898 = vadd.f32 %v876, %v891
        %v899 = vadd.f32 %v877, %v892
        %v900 = vadd.f32 %v878, %v893
        %v901 = vadd.f32 %v879, %v894
        %v902 = vld [vmem:[#allocation2 + $0x2] sm:$0xff]
        %v903 = vld [vmem:[#allocation2 + $0xa] sm:$0xff]
        %v904 = vld [vmem:[#allocation2 + $0x12] sm:$0xff]
        %v905 = vld [vmem:[#allocation2 + $0x1a] sm:$0xff]
        %v906 = vld [vmem:[#allocation2 + $0x22] sm:$0xff]
        %v907 = vld [vmem:[#allocation2 + $0x2a] sm:$0xff]
        %v908 = vld [vmem:[#allocation2 + $0x32] sm:$0x1]
        %v909 = vsel %vm612, %v902, 0.0
        %v910 = vsel %vm613, %v903, 0.0
        %v911 = vsel %vm614, %v904, 0.0
        %v912 = vsel %vm615, %v905, 0.0
        %v913 = vsel %vm616, %v906, 0.0
        %v914 = vsel %vm617, %v907, 0.0
        %v915 = vsel %vm618, %v908, 0.0
        %v916 = vperm.slane %v849, 2
        %v917 = vmul.f32 %v909, %v916
        %v918 = vmul.f32 %v910, %v916
        %v919 = vmul.f32 %v911, %v916
        %v920 = vmul.f32 %v912, %v916
        %v921 = vmul.f32 %v913, %v916
        %v922 = vmul.f32 %v914, %v916
        %v923 = vmul.f32 %v915, %v916
        %v924 = vadd.f32 %v895, %v917
        %v925 = vadd.f32 %v896, %v918
        %v926 = vadd.f32 %v897, %v919
        %v927 = vadd.f32 %v898, %v920
        %v928 = vadd.f32 %v899, %v921
        %v929 = vadd.f32 %v900, %v922
        %v930 = vadd.f32 %v901, %v923
        %v931 = vld [vmem:[#allocation2 + $0x7] sm:$0xff]
        %v932 = vld [vmem:[#allocation2 + $0xf] sm:$0xff]
        %v933 = vld [vmem:[#allocation2 + $0x17] sm:$0xff]
        %v934 = vld [vmem:[#allocation2 + $0x1f] sm:$0xff]
        %v935 = vld [vmem:[#allocation2 + $0x27] sm:$0xff]
        %v936 = vld [vmem:[#allocation2 + $0x2f] sm:$0xff]
        %v937 = vld [vmem:[#allocation2 + $0x37] sm:$0x1]
        %v938 = vsel %vm605, %v931, 0.0
        %v939 = vsel %vm606, %v932, 0.0
        %v940 = vsel %vm607, %v933, 0.0
        %v941 = vsel %vm608, %v934, 0.0
        %v942 = vsel %vm609, %v935, 0.0
        %v943 = vsel %vm610, %v936, 0.0
        %v944 = vsel %vm611, %v937, 0.0
        %v945 = vperm.slane %v849, 3
        %v946 = vmul.f32 %v938, %v945
        %v947 = vmul.f32 %v939, %v945
        %v948 = vmul.f32 %v940, %v945
        %v949 = vmul.f32 %v941, %v945
        %v950 = vmul.f32 %v942, %v945
        %v951 = vmul.f32 %v943, %v945
        %v952 = vmul.f32 %v944, %v945
        %v953 = vadd.f32 %v924, %v946
        %v954 = vadd.f32 %v925, %v947
        %v955 = vadd.f32 %v926, %v948
        %v956 = vadd.f32 %v927, %v949
        %v957 = vadd.f32 %v928, %v950
        %v958 = vadd.f32 %v929, %v951
        %v959 = vadd.f32 %v930, %v952
        %v960 = vld [vmem:[#allocation2 + $0x30] sm:$0xff]
        %v961 = vld [vmem:[#allocation2 + $0x38] sm:$0x1]
        %v962 = vperm.slane %v849, 4
        %v963 = vmul.f32 %v852, %v962
        %v964 = vmul.f32 %v853, %v962
        %v965 = vmul.f32 %v854, %v962
        %v966 = vmul.f32 %v855, %v962
        %v967 = vmul.f32 %v856, %v962
        %v968 = vmul.f32 %v960, %v962
        %v969 = vmul.f32 %v961, %v962
        %v970 = vadd.f32 %v953, %v963
        %v971 = vadd.f32 %v954, %v964
        %v972 = vadd.f32 %v955, %v965
        %v973 = vadd.f32 %v956, %v966
        %v974 = vadd.f32 %v957, %v967
        %v975 = vadd.f32 %v958, %v968
        %v976 = vadd.f32 %v959, %v969
        %v977 = vld [vmem:[#allocation2 + $0x31] sm:$0xff]
        %v978 = vld [vmem:[#allocation2 + $0x39] sm:$0x1]
        %v979 = vsel %vm612, %v881, 0.0
        %v980 = vsel %vm613, %v882, 0.0
        %v981 = vsel %vm614, %v883, 0.0
        %v982 = vsel %vm615, %v884, 0.0
        %v983 = vsel %vm616, %v885, 0.0
        %v984 = vsel %vm617, %v977, 0.0
        %v985 = vsel %vm618, %v978, 0.0
        %v986 = vperm.slane %v849, 5
        %v987 = vmul.f32 %v979, %v986
        %v988 = vmul.f32 %v980, %v986
        %v989 = vmul.f32 %v981, %v986
        %v990 = vmul.f32 %v982, %v986
        %v991 = vmul.f32 %v983, %v986
        %v992 = vmul.f32 %v984, %v986
        %v993 = vmul.f32 %v985, %v986
        %v994 = vadd.f32 %v970, %v987
        %v995 = vadd.f32 %v971, %v988
        %v996 = vadd.f32 %v972, %v989
        %v997 = vadd.f32 %v973, %v990
        %v998 = vadd.f32 %v974, %v991
        %v999 = vadd.f32 %v975, %v992
        %v1000 = vadd.f32 %v976, %v993
        %v1001 = vld [vmem:[#allocation2 + $0xe] sm:$0xff]
        %v1002 = vld [vmem:[#allocation2 + $0x16] sm:$0xff]
        %v1003 = vld [vmem:[#allocation2 + $0x1e] sm:$0xff]
        %v1004 = vld [vmem:[#allocation2 + $0x26] sm:$0xff]
        %v1005 = vld [vmem:[#allocation2 + $0x2e] sm:$0xff]
        %v1006 = vld [vmem:[#allocation2 + $0x36] sm:$0xff]
        %v1007 = vld [vmem:[#allocation2 + $0x3e] sm:$0x1]
        %v1008 = vsel %vm605, %v1001, 0.0
        %v1009 = vsel %vm606, %v1002, 0.0
        %v1010 = vsel %vm607, %v1003, 0.0
        %v1011 = vsel %vm608, %v1004, 0.0
        %v1012 = vsel %vm609, %v1005, 0.0
        %v1013 = vsel %vm610, %v1006, 0.0
        %v1014 = vsel %vm611, %v1007, 0.0
        %v1015 = vperm.slane %v849, 6
        %v1016 = vmul.f32 %v1008, %v1015
        %v1017 = vmul.f32 %v1009, %v1015
        %v1018 = vmul.f32 %v1010, %v1015
        %v1019 = vmul.f32 %v1011, %v1015
        %v1020 = vmul.f32 %v1012, %v1015
        %v1021 = vmul.f32 %v1013, %v1015
        %v1022 = vmul.f32 %v1014, %v1015
        %v1023 = vadd.f32 %v994, %v1016
        %v1024 = vadd.f32 %v995, %v1017
        %v1025 = vadd.f32 %v996, %v1018
        %v1026 = vadd.f32 %v997, %v1019
        %v1027 = vadd.f32 %v998, %v1020
        %v1028 = vadd.f32 %v999, %v1021
        %v1029 = vadd.f32 %v1000, %v1022
        %v1030 = vld [vmem:[#allocation2 + $0x37] sm:$0xff]
        %v1031 = vld [vmem:[#allocation2 + $0x3f] sm:$0x1]
        %v1032 = vperm.slane %v849, 7
        %v1033 = vmul.f32 %v932, %v1032
        %v1034 = vmul.f32 %v933, %v1032
        %v1035 = vmul.f32 %v934, %v1032
        %v1036 = vmul.f32 %v935, %v1032
        %v1037 = vmul.f32 %v936, %v1032
        %v1038 = vmul.f32 %v1030, %v1032
        %v1039 = vmul.f32 %v1031, %v1032
        %v1040 = vadd.f32 %v1023, %v1033
        %v1041 = vadd.f32 %v1024, %v1034
        %v1042 = vadd.f32 %v1025, %v1035
        %v1043 = vadd.f32 %v1026, %v1036
        %v1044 = vadd.f32 %v1027, %v1037
        %v1045 = vadd.f32 %v1028, %v1038
        %v1046 = vadd.f32 %v1029, %v1039
        %v1047 = vld [vmem:[#allocation2 + $0x10] sm:$0xff]
        %v1048 = vld [vmem:[#allocation2 + $0x18] sm:$0xff]
        %v1049 = vld [vmem:[#allocation2 + $0x20] sm:$0xff]
        %v1050 = vld [vmem:[#allocation2 + $0x28] sm:$0xff]
        %v1051 = vld [vmem:[#allocation2 + $0x30] sm:$0xff]
        %v1052 = vld [vmem:[#allocation2 + $0x38] sm:$0xff]
        %v1053 = vld [vmem:[#allocation2 + $0x40] sm:$0x1]
        %v1054 = vsel %vm612, %v1047, 0.0
        %v1055 = vsel %vm613, %v1048, 0.0
        %v1056 = vsel %vm614, %v1049, 0.0
        %v1057 = vsel %vm615, %v1050, 0.0
        %v1058 = vsel %vm616, %v1051, 0.0
        %v1059 = vsel %vm617, %v1052, 0.0
        %v1060 = vsel %vm618, %v1053, 0.0
        %v1061 = vperm.slane %v850, 0
        %v1062 = vmul.f32 %v1054, %v1061
        %v1063 = vmul.f32 %v1055, %v1061
        %v1064 = vmul.f32 %v1056, %v1061
        %v1065 = vmul.f32 %v1057, %v1061
        %v1066 = vmul.f32 %v1058, %v1061
        %v1067 = vmul.f32 %v1059, %v1061
        %v1068 = vmul.f32 %v1060, %v1061
        %v1069 = vadd.f32 %v1040, %v1062
        %v1070 = vadd.f32 %v1041, %v1063
        %v1071 = vadd.f32 %v1042, %v1064
        %v1072 = vadd.f32 %v1043, %v1065
        %v1073 = vadd.f32 %v1044, %v1066
        %v1074 = vadd.f32 %v1045, %v1067
        %v1075 = vadd.f32 %v1046, %v1068
        %1076 = vst [vmem:[%s322] sm:$0xff] %v1069
        %1077 = vst [vmem:[%s322 + $0x20] sm:$0xff] %v1070
        %1078 = vst [vmem:[%s322 + $0x40] sm:$0xff] %v1071
        %1079 = vst [vmem:[%s322 + $0x60] sm:$0xff] %v1072
        %1080 = vst [vmem:[%s322 + $0x80] sm:$0xff] %v1073
        %1081 = vst [vmem:[%s322 + $0xa0] sm:$0xff] %v1074
        %1082 = vst [vmem:[%s322 + $0xc0] sm:$0x1] %v1075
        %v1083 = vld [vmem:[%s277 + $0x8] sm:$0xff]
        %v1084 = vld [vmem:[%s277 + $0x28] sm:$0xff]
        %v1085 = vld [vmem:[%s277 + $0x48] sm:$0xff]
        %v1086 = vld [vmem:[%s277 + $0x68] sm:$0xff]
        %v1087 = vld [vmem:[%s277 + $0x88] sm:$0xff]
        %v1088 = vld [vmem:[%s277 + $0xa8] sm:$0xff]
        %v1089 = vld [vmem:[%s277 + $0xc8] sm:$0xff]
        %v1090 = vld [vmem:[%s277 + $0xe8] sm:$0xff]
        %v1091 = vld [vmem:[%s277 + $0x108] sm:$0xff]
        %v1092 = vld [vmem:[%s277 + $0x128] sm:$0xff]
        %v1093 = vld [vmem:[%s277 + $0x148] sm:$0xff]
        %v1094 = vld [vmem:[%s277 + $0x168] sm:$0xff]
        %v1095 = vld [vmem:[%s277 + $0x188] sm:$0xff]
        %v1096 = vld [vmem:[%s277 + $0x1a8] sm:$0xff]
        %v1097 = vld [vmem:[%s277 + $0x1c8] sm:$0xff]
        %v1098 = vld [vmem:[%s277 + $0x1e8] sm:$0xff]
        %v1099 = vld [vmem:[%s277 + $0x208] sm:$0xff]
        %v1100 = vld [vmem:[%s277 + $0x228] sm:$0xff]
        %v1101 = vld [vmem:[%s277 + $0x248] sm:$0xff]
        %v1102 = vld [vmem:[%s277 + $0x268] sm:$0xff]
        %1103 = vmatpush.msra.mxu0 %v1098
        %1104 = vmatpush.msra.mxu0 %v1097
        %1105 = vmatpush.msra.mxu0 %v1096
        %1106 = vmatpush.msra.mxu0 %v1095
        %1107 = vmatpush.msra.mxu0 %v1094
        %1108 = vmatpush.msra.mxu0 %v1093
        %1109 = vmatpush.msra.mxu0 %v1092
        %1110 = vmatpush.msra.mxu0 %v1091
        %1111 = vmatpush.msra.mxu0 %v1090
        %1112 = vmatpush.msra.mxu0 %v1089
        %1113 = vmatpush.msra.mxu0 %v1088
        %1114 = vmatpush.msra.mxu0 %v1087
        %1115 = vmatpush.msra.mxu0 %v1086
        %1116 = vmatpush.msra.mxu0 %v1085
        %1117 = vmatpush.msra.mxu0 %v1084
        %1118 = vmatpush.msra.mxu0 %v1083
        %1119 = vmatmul.f32.gmra.mxu0 %v619
        %v1120 = vpop.f32.mrf.mxu0
        %v1121 = vadd.f32 0.0, %v1120
        %1122 = vmatmul.f32.gmra.mxu0 %v621
        %v1123 = vpop.f32.mrf.mxu0
        %v1124 = vadd.f32 0.0, %v1123
        %1125 = vmatmul.f32.gmra.mxu0 %v623
        %v1126 = vpop.f32.mrf.mxu0
        %v1127 = vadd.f32 0.0, %v1126
        %1128 = vmatmul.f32.gmra.mxu0 %v625
        %v1129 = vpop.f32.mrf.mxu0
        %v1130 = vadd.f32 0.0, %v1129
        %1131 = vmatmul.f32.gmra.mxu0 %v627
        %v1132 = vpop.f32.mrf.mxu0
        %v1133 = vadd.f32 0.0, %v1132
        %1134 = vmatmul.f32.gmra.mxu0 %v629
        %v1135 = vpop.f32.mrf.mxu0
        %v1136 = vadd.f32 0.0, %v1135
        %1137 = vmatmul.f32.gmra.mxu0 %v631
        %v1138 = vpop.f32.mrf.mxu0
        %v1139 = vadd.f32 0.0, %v1138
        %1140 = vdwg.mxu0
        %1141 = vmatpush.msra.mxu0 0.0
        %1142 = vmatpush.msra.mxu0 0.0
        %1143 = vmatpush.msra.mxu0 0.0
        %1144 = vmatpush.msra.mxu0 0.0
        %1145 = vmatpush.msra.mxu0 0.0
        %1146 = vmatpush.msra.mxu0 0.0
        %1147 = vmatpush.msra.mxu0 0.0
        %1148 = vmatpush.msra.mxu0 0.0
        %1149 = vmatpush.msra.mxu0 0.0
        %1150 = vmatpush.msra.mxu0 0.0
        %1151 = vmatpush.msra.mxu0 0.0
        %1152 = vmatpush.msra.mxu0 0.0
        %1153 = vmatpush.msra.mxu0 %v1102
        %1154 = vmatpush.msra.mxu0 %v1101
        %1155 = vmatpush.msra.mxu0 %v1100
        %1156 = vmatpush.msra.mxu0 %v1099
        %1157 = vmatmul.f32.gmra.mxu0 %v655
        %v1158 = vpop.f32.mrf.mxu0
        %v1159 = vadd.f32 %v1121, %v1158
        %1160 = vmatmul.f32.gmra.mxu0 %v658
        %v1161 = vpop.f32.mrf.mxu0
        %v1162 = vadd.f32 %v1124, %v1161
        %1163 = vmatmul.f32.gmra.mxu0 %v661
        %v1164 = vpop.f32.mrf.mxu0
        %v1165 = vadd.f32 %v1127, %v1164
        %1166 = vmatmul.f32.gmra.mxu0 %v664
        %v1167 = vpop.f32.mrf.mxu0
        %v1168 = vadd.f32 %v1130, %v1167
        %1169 = vmatmul.f32.gmra.mxu0 %v667
        %v1170 = vpop.f32.mrf.mxu0
        %v1171 = vadd.f32 %v1133, %v1170
        %1172 = vmatmul.f32.gmra.mxu0 %v670
        %v1173 = vpop.f32.mrf.mxu0
        %v1174 = vadd.f32 %v1136, %v1173
        %1175 = vmatmul.f32.gmra.mxu0 %v673
        %v1176 = vpop.f32.mrf.mxu0
        %v1177 = vadd.f32 %v1139, %v1176
        %1178 = vdwg.mxu0
        %v1179 = vadd.f32 %v1159, %v1162
        %v1180 = vadd.f32 %v1179, %v1165
        %v1181 = vadd.f32 %v1180, %v1168
        %v1182 = vadd.f32 %v1181, %v1171
        %v1183 = vadd.f32 %v1182, %v1174
        %v1184 = vsel %vm756, %v1177, 0.0
        %v1185 = vadd.f32 %v1183, %v1184
        %v1186 = vrot.slane %v1185, 4
        %v1187 = vadd.f32 %v1185, %v1186
        %v1188 = vrot.slane %v1187, 2
        %v1189 = vadd.f32 %v1187, %v1188
        %v1190 = vrot.slane %v1189, 1
        %v1191 = vadd.f32 %v1189, %v1190
        %v1192 = vmul.f32 %v1191, 0.020408163
        %v1193 = vsub.f32 %v1159, %v1192
        %v1194 = vsub.f32 %v1162, %v1192
        %v1195 = vsub.f32 %v1165, %v1192
        %v1196 = vsub.f32 %v1168, %v1192
        %v1197 = vsub.f32 %v1171, %v1192
        %v1198 = vsub.f32 %v1174, %v1192
        %v1199 = vsub.f32 %v1177, %v1192
        %v1200 = vmul.f32 %v1193, %v1193
        %v1201 = vmul.f32 %v1194, %v1194
        %v1202 = vmul.f32 %v1195, %v1195
        %v1203 = vmul.f32 %v1196, %v1196
        %v1204 = vmul.f32 %v1197, %v1197
        %v1205 = vmul.f32 %v1198, %v1198
        %v1206 = vmul.f32 %v1199, %v1199
        %v1207 = vadd.f32 %v1200, %v1201
        %v1208 = vadd.f32 %v1207, %v1202
        %v1209 = vadd.f32 %v1208, %v1203
        %v1210 = vadd.f32 %v1209, %v1204
        %v1211 = vadd.f32 %v1210, %v1205
        %v1212 = vsel %vm756, %v1206, 0.0
        %v1213 = vadd.f32 %v1211, %v1212
        %v1214 = vrot.slane %v1213, 4
        %v1215 = vadd.f32 %v1213, %v1214
        %v1216 = vrot.slane %v1215, 2
        %v1217 = vadd.f32 %v1215, %v1216
        %v1218 = vrot.slane %v1217, 1
        %v1219 = vadd.f32 %v1217, %v1218
        %v1220 = vmul.f32 %v1219, 0.020408163
        %v1221 = vld [vmem:[%s327 + $0x1] sm:$0x1]
        %v1222 = vadd.f32 %v1220, 1e-05
        %v1223 = vrsqrt.pop %v1222
        %v1224 = vmul.f32 %v1223, %v1222
        %v1225 = vmul.f32 %v1224, %v1223
        %v1226 = vmul.f32 0.5, %v1225
        %v1227 = vsub.f32 1.5, %v1226
        %v1228 = vmul.f32 %v1223, %v1227
        %vm1229 = vweird.f32 %v1222
        %vm1230 = vweird.f32 %v1223
        %vm1231 = vmor %vm1229, %vm1230
        %v1232 = vsel %vm1231, %v1223, %v1228
        %v1233 = vmul.f32 %v1221, %v1232
        %v1235 = vperm.slane %v1233, 0
        %v1237 = vmul.f32 %v1193, %v1235
        %v1238 = vmul.f32 %v1194, %v1235
        %v1239 = vmul.f32 %v1195, %v1235
        %v1240 = vmul.f32 %v1196, %v1235
        %v1241 = vmul.f32 %v1197, %v1235
        %v1242 = vmul.f32 %v1198, %v1235
        %v1243 = vmul.f32 %v1199, %v1235
        %v1244 = vld [vmem:[%s332 + $0x1] sm:$0x1]
        %v1246 = vperm.slane %v1244, 0
        %v1248 = vadd.f32 %v1237, %v1246
        %v1249 = vadd.f32 %v1238, %v1246
        %v1250 = vadd.f32 %v1239, %v1246
        %v1251 = vadd.f32 %v1240, %v1246
        %v1252 = vadd.f32 %v1241, %v1246
        %v1253 = vadd.f32 %v1242, %v1246
        %v1254 = vadd.f32 %v1243, %v1246
        %v1255 = vmax.f32 %v1248, 0.0
        %v1256 = vmax.f32 %v1249, 0.0
        %v1257 = vmax.f32 %v1250, 0.0
        %v1258 = vmax.f32 %v1251, 0.0
        %v1259 = vmax.f32 %v1252, 0.0
        %v1260 = vmax.f32 %v1253, 0.0
        %v1261 = vmax.f32 %v1254, 0.0
        %v1262 = vmin.f32 %v1255, 6.0
        %v1263 = vmin.f32 %v1256, 6.0
        %v1264 = vmin.f32 %v1257, 6.0
        %v1265 = vmin.f32 %v1258, 6.0
        %v1266 = vmin.f32 %v1259, 6.0
        %v1267 = vmin.f32 %v1260, 6.0
        %v1268 = vmin.f32 %v1261, 6.0
        %1269 = vst [vmem:[#allocation2 + $0x8] sm:$0xff] %v1262
        %1270 = vst [vmem:[#allocation2 + $0x10] sm:$0xff] %v1263
        %1271 = vst [vmem:[#allocation2 + $0x18] sm:$0xff] %v1264
        %1272 = vst [vmem:[#allocation2 + $0x20] sm:$0xff] %v1265
        %1273 = vst [vmem:[#allocation2 + $0x28] sm:$0xff] %v1266
        %1274 = vst [vmem:[#allocation2 + $0x30] sm:$0xff] %v1267
        %1275 = vst [vmem:[#allocation2 + $0x38] sm:$0x1] %v1268
        %v1276 = vld [vmem:[%s286 + $0x8] sm:$0xff]
        %v1277 = vld [vmem:[%s286 + $0x28] sm:$0x1]
        %v1278 = vld [vmem:[#allocation2] sm:$0xff]
        %v1279 = vld [vmem:[#allocation2 + $0x8] sm:$0xff]
        %v1280 = vld [vmem:[#allocation2 + $0x10] sm:$0xff]
        %v1281 = vld [vmem:[#allocation2 + $0x18] sm:$0xff]
        %v1282 = vld [vmem:[#allocation2 + $0x20] sm:$0xff]
        %v1283 = vld [vmem:[#allocation2 + $0x28] sm:$0xff]
        %v1284 = vld [vmem:[#allocation2 + $0x30] sm:$0x1]
        %v1285 = vsel %vm605, %v1278, 0.0
        %v1286 = vsel %vm606, %v1279, 0.0
        %v1287 = vsel %vm607, %v1280, 0.0
        %v1288 = vsel %vm608, %v1281, 0.0
        %v1289 = vsel %vm609, %v1282, 0.0
        %v1290 = vsel %vm610, %v1283, 0.0
        %v1291 = vsel %vm611, %v1284, 0.0
        %v1292 = vperm.slane %v1276, 0
        %v1293 = vmul.f32 %v1285, %v1292
        %v1294 = vmul.f32 %v1286, %v1292
        %v1295 = vmul.f32 %v1287, %v1292
        %v1296 = vmul.f32 %v1288, %v1292
        %v1297 = vmul.f32 %v1289, %v1292
        %v1298 = vmul.f32 %v1290, %v1292
        %v1299 = vmul.f32 %v1291, %v1292
        %v1300 = vadd.f32 %v1293, 0.0
        %v1301 = vadd.f32 %v1294, 0.0
        %v1302 = vadd.f32 %v1295, 0.0
        %v1303 = vadd.f32 %v1296, 0.0
        %v1304 = vadd.f32 %v1297, 0.0
        %v1305 = vadd.f32 %v1298, 0.0
        %v1306 = vadd.f32 %v1299, 0.0
        %v1307 = vld [vmem:[#allocation2 + $0x1] sm:$0xff]
        %v1308 = vld [vmem:[#allocation2 + $0x9] sm:$0xff]
        %v1309 = vld [vmem:[#allocation2 + $0x11] sm:$0xff]
        %v1310 = vld [vmem:[#allocation2 + $0x19] sm:$0xff]
        %v1311 = vld [vmem:[#allocation2 + $0x21] sm:$0xff]
        %v1312 = vld [vmem:[#allocation2 + $0x29] sm:$0xff]
        %v1313 = vld [vmem:[#allocation2 + $0x31] sm:$0x1]
        %v1314 = vperm.slane %v1276, 1
        %v1315 = vmul.f32 %v1307, %v1314
        %v1316 = vmul.f32 %v1308, %v1314
        %v1317 = vmul.f32 %v1309, %v1314
        %v1318 = vmul.f32 %v1310, %v1314
        %v1319 = vmul.f32 %v1311, %v1314
        %v1320 = vmul.f32 %v1312, %v1314
        %v1321 = vmul.f32 %v1313, %v1314
        %v1322 = vadd.f32 %v1300, %v1315
        %v1323 = vadd.f32 %v1301, %v1316
        %v1324 = vadd.f32 %v1302, %v1317
        %v1325 = vadd.f32 %v1303, %v1318
        %v1326 = vadd.f32 %v1304, %v1319
        %v1327 = vadd.f32 %v1305, %v1320
        %v1328 = vadd.f32 %v1306, %v1321
        %v1329 = vld [vmem:[#allocation2 + $0x2] sm:$0xff]
        %v1330 = vld [vmem:[#allocation2 + $0xa] sm:$0xff]
        %v1331 = vld [vmem:[#allocation2 + $0x12] sm:$0xff]
        %v1332 = vld [vmem:[#allocation2 + $0x1a] sm:$0xff]
        %v1333 = vld [vmem:[#allocation2 + $0x22] sm:$0xff]
        %v1334 = vld [vmem:[#allocation2 + $0x2a] sm:$0xff]
        %v1335 = vld [vmem:[#allocation2 + $0x32] sm:$0x1]
        %v1336 = vsel %vm612, %v1329, 0.0
        %v1337 = vsel %vm613, %v1330, 0.0
        %v1338 = vsel %vm614, %v1331, 0.0
        %v1339 = vsel %vm615, %v1332, 0.0
        %v1340 = vsel %vm616, %v1333, 0.0
        %v1341 = vsel %vm617, %v1334, 0.0
        %v1342 = vsel %vm618, %v1335, 0.0
        %v1343 = vperm.slane %v1276, 2
        %v1344 = vmul.f32 %v1336, %v1343
        %v1345 = vmul.f32 %v1337, %v1343
        %v1346 = vmul.f32 %v1338, %v1343
        %v1347 = vmul.f32 %v1339, %v1343
        %v1348 = vmul.f32 %v1340, %v1343
        %v1349 = vmul.f32 %v1341, %v1343
        %v1350 = vmul.f32 %v1342, %v1343
        %v1351 = vadd.f32 %v1322, %v1344
        %v1352 = vadd.f32 %v1323, %v1345
        %v1353 = vadd.f32 %v1324, %v1346
        %v1354 = vadd.f32 %v1325, %v1347
        %v1355 = vadd.f32 %v1326, %v1348
        %v1356 = vadd.f32 %v1327, %v1349
        %v1357 = vadd.f32 %v1328, %v1350
        %v1358 = vld [vmem:[#allocation2 + $0x7] sm:$0xff]
        %v1359 = vld [vmem:[#allocation2 + $0xf] sm:$0xff]
        %v1360 = vld [vmem:[#allocation2 + $0x17] sm:$0xff]
        %v1361 = vld [vmem:[#allocation2 + $0x1f] sm:$0xff]
        %v1362 = vld [vmem:[#allocation2 + $0x27] sm:$0xff]
        %v1363 = vld [vmem:[#allocation2 + $0x2f] sm:$0xff]
        %v1364 = vld [vmem:[#allocation2 + $0x37] sm:$0x1]
        %v1365 = vsel %vm605, %v1358, 0.0
        %v1366 = vsel %vm606, %v1359, 0.0
        %v1367 = vsel %vm607, %v1360, 0.0
        %v1368 = vsel %vm608, %v1361, 0.0
        %v1369 = vsel %vm609, %v1362, 0.0
        %v1370 = vsel %vm610, %v1363, 0.0
        %v1371 = vsel %vm611, %v1364, 0.0
        %v1372 = vperm.slane %v1276, 3
        %v1373 = vmul.f32 %v1365, %v1372
        %v1374 = vmul.f32 %v1366, %v1372
        %v1375 = vmul.f32 %v1367, %v1372
        %v1376 = vmul.f32 %v1368, %v1372
        %v1377 = vmul.f32 %v1369, %v1372
        %v1378 = vmul.f32 %v1370, %v1372
        %v1379 = vmul.f32 %v1371, %v1372
        %v1380 = vadd.f32 %v1351, %v1373
        %v1381 = vadd.f32 %v1352, %v1374
        %v1382 = vadd.f32 %v1353, %v1375
        %v1383 = vadd.f32 %v1354, %v1376
        %v1384 = vadd.f32 %v1355, %v1377
        %v1385 = vadd.f32 %v1356, %v1378
        %v1386 = vadd.f32 %v1357, %v1379
        %v1387 = vld [vmem:[#allocation2 + $0x30] sm:$0xff]
        %v1388 = vld [vmem:[#allocation2 + $0x38] sm:$0x1]
        %v1389 = vperm.slane %v1276, 4
        %v1390 = vmul.f32 %v1279, %v1389
        %v1391 = vmul.f32 %v1280, %v1389
        %v1392 = vmul.f32 %v1281, %v1389
        %v1393 = vmul.f32 %v1282, %v1389
        %v1394 = vmul.f32 %v1283, %v1389
        %v1395 = vmul.f32 %v1387, %v1389
        %v1396 = vmul.f32 %v1388, %v1389
        %v1397 = vadd.f32 %v1380, %v1390
        %v1398 = vadd.f32 %v1381, %v1391
        %v1399 = vadd.f32 %v1382, %v1392
        %v1400 = vadd.f32 %v1383, %v1393
        %v1401 = vadd.f32 %v1384, %v1394
        %v1402 = vadd.f32 %v1385, %v1395
        %v1403 = vadd.f32 %v1386, %v1396
        %v1404 = vld [vmem:[#allocation2 + $0x31] sm:$0xff]
        %v1405 = vld [vmem:[#allocation2 + $0x39] sm:$0x1]
        %v1406 = vsel %vm612, %v1308, 0.0
        %v1407 = vsel %vm613, %v1309, 0.0
        %v1408 = vsel %vm614, %v1310, 0.0
        %v1409 = vsel %vm615, %v1311, 0.0
        %v1410 = vsel %vm616, %v1312, 0.0
        %v1411 = vsel %vm617, %v1404, 0.0
        %v1412 = vsel %vm618, %v1405, 0.0
        %v1413 = vperm.slane %v1276, 5
        %v1414 = vmul.f32 %v1406, %v1413
        %v1415 = vmul.f32 %v1407, %v1413
        %v1416 = vmul.f32 %v1408, %v1413
        %v1417 = vmul.f32 %v1409, %v1413
        %v1418 = vmul.f32 %v1410, %v1413
        %v1419 = vmul.f32 %v1411, %v1413
        %v1420 = vmul.f32 %v1412, %v1413
        %v1421 = vadd.f32 %v1397, %v1414
        %v1422 = vadd.f32 %v1398, %v1415
        %v1423 = vadd.f32 %v1399, %v1416
        %v1424 = vadd.f32 %v1400, %v1417
        %v1425 = vadd.f32 %v1401, %v1418
        %v1426 = vadd.f32 %v1402, %v1419
        %v1427 = vadd.f32 %v1403, %v1420
        %v1428 = vld [vmem:[#allocation2 + $0xe] sm:$0xff]
        %v1429 = vld [vmem:[#allocation2 + $0x16] sm:$0xff]
        %v1430 = vld [vmem:[#allocation2 + $0x1e] sm:$0xff]
        %v1431 = vld [vmem:[#allocation2 + $0x26] sm:$0xff]
        %v1432 = vld [vmem:[#allocation2 + $0x2e] sm:$0xff]
        %v1433 = vld [vmem:[#allocation2 + $0x36] sm:$0xff]
        %v1434 = vld [vmem:[#allocation2 + $0x3e] sm:$0x1]
        %v1435 = vsel %vm605, %v1428, 0.0
        %v1436 = vsel %vm606, %v1429, 0.0
        %v1437 = vsel %vm607, %v1430, 0.0
        %v1438 = vsel %vm608, %v1431, 0.0
        %v1439 = vsel %vm609, %v1432, 0.0
        %v1440 = vsel %vm610, %v1433, 0.0
        %v1441 = vsel %vm611, %v1434, 0.0
        %v1442 = vperm.slane %v1276, 6
        %v1443 = vmul.f32 %v1435, %v1442
        %v1444 = vmul.f32 %v1436, %v1442
        %v1445 = vmul.f32 %v1437, %v1442
        %v1446 = vmul.f32 %v1438, %v1442
        %v1447 = vmul.f32 %v1439, %v1442
        %v1448 = vmul.f32 %v1440, %v1442
        %v1449 = vmul.f32 %v1441, %v1442
        %v1450 = vadd.f32 %v1421, %v1443
        %v1451 = vadd.f32 %v1422, %v1444
        %v1452 = vadd.f32 %v1423, %v1445
        %v1453 = vadd.f32 %v1424, %v1446
        %v1454 = vadd.f32 %v1425, %v1447
        %v1455 = vadd.f32 %v1426, %v1448
        %v1456 = vadd.f32 %v1427, %v1449
        %v1457 = vld [vmem:[#allocation2 + $0x37] sm:$0xff]
        %v1458 = vld [vmem:[#allocation2 + $0x3f] sm:$0x1]
        %v1459 = vperm.slane %v1276, 7
        %v1460 = vmul.f32 %v1359, %v1459
        %v1461 = vmul.f32 %v1360, %v1459
        %v1462 = vmul.f32 %v1361, %v1459
        %v1463 = vmul.f32 %v1362, %v1459
        %v1464 = vmul.f32 %v1363, %v1459
        %v1465 = vmul.f32 %v1457, %v1459
        %v1466 = vmul.f32 %v1458, %v1459
        %v1467 = vadd.f32 %v1450, %v1460
        %v1468 = vadd.f32 %v1451, %v1461
        %v1469 = vadd.f32 %v1452, %v1462
        %v1470 = vadd.f32 %v1453, %v1463
        %v1471 = vadd.f32 %v1454, %v1464
        %v1472 = vadd.f32 %v1455, %v1465
        %v1473 = vadd.f32 %v1456, %v1466
        %v1474 = vld [vmem:[#allocation2 + $0x10] sm:$0xff]
        %v1475 = vld [vmem:[#allocation2 + $0x18] sm:$0xff]
        %v1476 = vld [vmem:[#allocation2 + $0x20] sm:$0xff]
        %v1477 = vld [vmem:[#allocation2 + $0x28] sm:$0xff]
        %v1478 = vld [vmem:[#allocation2 + $0x30] sm:$0xff]
        %v1479 = vld [vmem:[#allocation2 + $0x38] sm:$0xff]
        %v1480 = vld [vmem:[#allocation2 + $0x40] sm:$0x1]
        %v1481 = vsel %vm612, %v1474, 0.0
        %v1482 = vsel %vm613, %v1475, 0.0
        %v1483 = vsel %vm614, %v1476, 0.0
        %v1484 = vsel %vm615, %v1477, 0.0
        %v1485 = vsel %vm616, %v1478, 0.0
        %v1486 = vsel %vm617, %v1479, 0.0
        %v1487 = vsel %vm618, %v1480, 0.0
        %v1488 = vperm.slane %v1277, 0
        %v1489 = vmul.f32 %v1481, %v1488
        %v1490 = vmul.f32 %v1482, %v1488
        %v1491 = vmul.f32 %v1483, %v1488
        %v1492 = vmul.f32 %v1484, %v1488
        %v1493 = vmul.f32 %v1485, %v1488
        %v1494 = vmul.f32 %v1486, %v1488
        %v1495 = vmul.f32 %v1487, %v1488
        %v1496 = vadd.f32 %v1467, %v1489
        %v1497 = vadd.f32 %v1468, %v1490
        %v1498 = vadd.f32 %v1469, %v1491
        %v1499 = vadd.f32 %v1470, %v1492
        %v1500 = vadd.f32 %v1471, %v1493
        %v1501 = vadd.f32 %v1472, %v1494
        %v1502 = vadd.f32 %v1473, %v1495
        %1503 = vst [vmem:[%s322 + $0x8] sm:$0xff] %v1496
        %1504 = vst [vmem:[%s322 + $0x28] sm:$0xff] %v1497
        %1505 = vst [vmem:[%s322 + $0x48] sm:$0xff] %v1498
        %1506 = vst [vmem:[%s322 + $0x68] sm:$0xff] %v1499
        %1507 = vst [vmem:[%s322 + $0x88] sm:$0xff] %v1500
        %1508 = vst [vmem:[%s322 + $0xa8] sm:$0xff] %v1501
        %1509 = vst [vmem:[%s322 + $0xc8] sm:$0x1] %v1502
        %v1510 = vld [vmem:[%s277 + $0x10] sm:$0xff]
        %v1511 = vld [vmem:[%s277 + $0x30] sm:$0xff]
        %v1512 = vld [vmem:[%s277 + $0x50] sm:$0xff]
        %v1513 = vld [vmem:[%s277 + $0x70] sm:$0xff]
        %v1514 = vld [vmem:[%s277 + $0x90] sm:$0xff]
        %v1515 = vld [vmem:[%s277 + $0xb0] sm:$0xff]
        %v1516 = vld [vmem:[%s277 + $0xd0] sm:$0xff]
        %v1517 = vld [vmem:[%s277 + $0xf0] sm:$0xff]
        %v1518 = vld [vmem:[%s277 + $0x110] sm:$0xff]
        %v1519 = vld [vmem:[%s277 + $0x130] sm:$0xff]
        %v1520 = vld [vmem:[%s277 + $0x150] sm:$0xff]
        %v1521 = vld [vmem:[%s277 + $0x170] sm:$0xff]
        %v1522 = vld [vmem:[%s277 + $0x190] sm:$0xff]
        %v1523 = vld [vmem:[%s277 + $0x1b0] sm:$0xff]
        %v1524 = vld [vmem:[%s277 + $0x1d0] sm:$0xff]
        %v1525 = vld [vmem:[%s277 + $0x1f0] sm:$0xff]
        %v1526 = vld [vmem:[%s277 + $0x210] sm:$0xff]
        %v1527 = vld [vmem:[%s277 + $0x230] sm:$0xff]
        %v1528 = vld [vmem:[%s277 + $0x250] sm:$0xff]
        %v1529 = vld [vmem:[%s277 + $0x270] sm:$0xff]
        %1530 = vmatpush.msra.mxu0 %v1525
        %1531 = vmatpush.msra.mxu0 %v1524
        %1532 = vmatpush.msra.mxu0 %v1523
        %1533 = vmatpush.msra.mxu0 %v1522
        %1534 = vmatpush.msra.mxu0 %v1521
        %1535 = vmatpush.msra.mxu0 %v1520
        %1536 = vmatpush.msra.mxu0 %v1519
        %1537 = vmatpush.msra.mxu0 %v1518
        %1538 = vmatpush.msra.mxu0 %v1517
        %1539 = vmatpush.msra.mxu0 %v1516
        %1540 = vmatpush.msra.mxu0 %v1515
        %1541 = vmatpush.msra.mxu0 %v1514
        %1542 = vmatpush.msra.mxu0 %v1513
        %1543 = vmatpush.msra.mxu0 %v1512
        %1544 = vmatpush.msra.mxu0 %v1511
        %1545 = vmatpush.msra.mxu0 %v1510
        %1546 = vmatmul.f32.gmra.mxu0 %v619
        %v1547 = vpop.f32.mrf.mxu0
        %v1548 = vadd.f32 0.0, %v1547
        %1549 = vmatmul.f32.gmra.mxu0 %v621
        %v1550 = vpop.f32.mrf.mxu0
        %v1551 = vadd.f32 0.0, %v1550
        %1552 = vmatmul.f32.gmra.mxu0 %v623
        %v1553 = vpop.f32.mrf.mxu0
        %v1554 = vadd.f32 0.0, %v1553
        %1555 = vmatmul.f32.gmra.mxu0 %v625
        %v1556 = vpop.f32.mrf.mxu0
        %v1557 = vadd.f32 0.0, %v1556
        %1558 = vmatmul.f32.gmra.mxu0 %v627
        %v1559 = vpop.f32.mrf.mxu0
        %v1560 = vadd.f32 0.0, %v1559
        %1561 = vmatmul.f32.gmra.mxu0 %v629
        %v1562 = vpop.f32.mrf.mxu0
        %v1563 = vadd.f32 0.0, %v1562
        %1564 = vmatmul.f32.gmra.mxu0 %v631
        %v1565 = vpop.f32.mrf.mxu0
        %v1566 = vadd.f32 0.0, %v1565
        %1567 = vdwg.mxu0
        %1568 = vmatpush.msra.mxu0 0.0
        %1569 = vmatpush.msra.mxu0 0.0
        %1570 = vmatpush.msra.mxu0 0.0
        %1571 = vmatpush.msra.mxu0 0.0
        %1572 = vmatpush.msra.mxu0 0.0
        %1573 = vmatpush.msra.mxu0 0.0
        %1574 = vmatpush.msra.mxu0 0.0
        %1575 = vmatpush.msra.mxu0 0.0
        %1576 = vmatpush.msra.mxu0 0.0
        %1577 = vmatpush.msra.mxu0 0.0
        %1578 = vmatpush.msra.mxu0 0.0
        %1579 = vmatpush.msra.mxu0 0.0
        %1580 = vmatpush.msra.mxu0 %v1529
        %1581 = vmatpush.msra.mxu0 %v1528
        %1582 = vmatpush.msra.mxu0 %v1527
        %1583 = vmatpush.msra.mxu0 %v1526
        %1584 = vmatmul.f32.gmra.mxu0 %v655
        %v1585 = vpop.f32.mrf.mxu0
        %v1586 = vadd.f32 %v1548, %v1585
        %1587 = vmatmul.f32.gmra.mxu0 %v658
        %v1588 = vpop.f32.mrf.mxu0
        %v1589 = vadd.f32 %v1551, %v1588
        %1590 = vmatmul.f32.gmra.mxu0 %v661
        %v1591 = vpop.f32.mrf.mxu0
        %v1592 = vadd.f32 %v1554, %v1591
        %1593 = vmatmul.f32.gmra.mxu0 %v664
        %v1594 = vpop.f32.mrf.mxu0
        %v1595 = vadd.f32 %v1557, %v1594
        %1596 = vmatmul.f32.gmra.mxu0 %v667
        %v1597 = vpop.f32.mrf.mxu0
        %v1598 = vadd.f32 %v1560, %v1597
        %1599 = vmatmul.f32.gmra.mxu0 %v670
        %v1600 = vpop.f32.mrf.mxu0
        %v1601 = vadd.f32 %v1563, %v1600
        %1602 = vmatmul.f32.gmra.mxu0 %v673
        %v1603 = vpop.f32.mrf.mxu0
        %v1604 = vadd.f32 %v1566, %v1603
        %1605 = vdwg.mxu0
        %v1606 = vadd.f32 %v1586, %v1589
        %v1607 = vadd.f32 %v1606, %v1592
        %v1608 = vadd.f32 %v1607, %v1595
        %v1609 = vadd.f32 %v1608, %v1598
        %v1610 = vadd.f32 %v1609, %v1601
        %v1611 = vsel %vm756, %v1604, 0.0
        %v1612 = vadd.f32 %v1610, %v1611
        %v1613 = vrot.slane %v1612, 4
        %v1614 = vadd.f32 %v1612, %v1613
        %v1615 = vrot.slane %v1614, 2
        %v1616 = vadd.f32 %v1614, %v1615
        %v1617 = vrot.slane %v1616, 1
        %v1618 = vadd.f32 %v1616, %v1617
        %v1619 = vmul.f32 %v1618, 0.020408163
        %v1620 = vsub.f32 %v1586, %v1619
        %v1621 = vsub.f32 %v1589, %v1619
        %v1622 = vsub.f32 %v1592, %v1619
        %v1623 = vsub.f32 %v1595, %v1619
        %v1624 = vsub.f32 %v1598, %v1619
        %v1625 = vsub.f32 %v1601, %v1619
        %v1626 = vsub.f32 %v1604, %v1619
        %v1627 = vmul.f32 %v1620, %v1620
        %v1628 = vmul.f32 %v1621, %v1621
        %v1629 = vmul.f32 %v1622, %v1622
        %v1630 = vmul.f32 %v1623, %v1623
        %v1631 = vmul.f32 %v1624, %v1624
        %v1632 = vmul.f32 %v1625, %v1625
        %v1633 = vmul.f32 %v1626, %v1626
        %v1634 = vadd.f32 %v1627, %v1628
        %v1635 = vadd.f32 %v1634, %v1629
        %v1636 = vadd.f32 %v1635, %v1630
        %v1637 = vadd.f32 %v1636, %v1631
        %v1638 = vadd.f32 %v1637, %v1632
        %v1639 = vsel %vm756, %v1633, 0.0
        %v1640 = vadd.f32 %v1638, %v1639
        %v1641 = vrot.slane %v1640, 4
        %v1642 = vadd.f32 %v1640, %v1641
        %v1643 = vrot.slane %v1642, 2
        %v1644 = vadd.f32 %v1642, %v1643
        %v1645 = vrot.slane %v1644, 1
        %v1646 = vadd.f32 %v1644, %v1645
        %v1647 = vmul.f32 %v1646, 0.020408163
        %v1648 = vld [vmem:[%s327 + $0x2] sm:$0x1]
        %v1649 = vadd.f32 %v1647, 1e-05
        %v1650 = vrsqrt.pop %v1649
        %v1651 = vmul.f32 %v1650, %v1649
        %v1652 = vmul.f32 %v1651, %v1650
        %v1653 = vmul.f32 0.5, %v1652
        %v1654 = vsub.f32 1.5, %v1653
        %v1655 = vmul.f32 %v1650, %v1654
        %vm1656 = vweird.f32 %v1649
        %vm1657 = vweird.f32 %v1650
        %vm1658 = vmor %vm1656, %vm1657
        %v1659 = vsel %vm1658, %v1650, %v1655
        %v1660 = vmul.f32 %v1648, %v1659
        %v1662 = vperm.slane %v1660, 0
        %v1664 = vmul.f32 %v1620, %v1662
        %v1665 = vmul.f32 %v1621, %v1662
        %v1666 = vmul.f32 %v1622, %v1662
        %v1667 = vmul.f32 %v1623, %v1662
        %v1668 = vmul.f32 %v1624, %v1662
        %v1669 = vmul.f32 %v1625, %v1662
        %v1670 = vmul.f32 %v1626, %v1662
        %v1671 = vld [vmem:[%s332 + $0x2] sm:$0x1]
        %v1673 = vperm.slane %v1671, 0
        %v1675 = vadd.f32 %v1664, %v1673
        %v1676 = vadd.f32 %v1665, %v1673
        %v1677 = vadd.f32 %v1666, %v1673
        %v1678 = vadd.f32 %v1667, %v1673
        %v1679 = vadd.f32 %v1668, %v1673
        %v1680 = vadd.f32 %v1669, %v1673
        %v1681 = vadd.f32 %v1670, %v1673
        %v1682 = vmax.f32 %v1675, 0.0
        %v1683 = vmax.f32 %v1676, 0.0
        %v1684 = vmax.f32 %v1677, 0.0
        %v1685 = vmax.f32 %v1678, 0.0
        %v1686 = vmax.f32 %v1679, 0.0
        %v1687 = vmax.f32 %v1680, 0.0
        %v1688 = vmax.f32 %v1681, 0.0
        %v1689 = vmin.f32 %v1682, 6.0
        %v1690 = vmin.f32 %v1683, 6.0
        %v1691 = vmin.f32 %v1684, 6.0
        %v1692 = vmin.f32 %v1685, 6.0
        %v1693 = vmin.f32 %v1686, 6.0
        %v1694 = vmin.f32 %v1687, 6.0
        %v1695 = vmin.f32 %v1688, 6.0
        %1696 = vst [vmem:[#allocation2 + $0x8] sm:$0xff] %v1689
        %1697 = vst [vmem:[#allocation2 + $0x10] sm:$0xff] %v1690
        %1698 = vst [vmem:[#allocation2 + $0x18] sm:$0xff] %v1691
        %1699 = vst [vmem:[#allocation2 + $0x20] sm:$0xff] %v1692
        %1700 = vst [vmem:[#allocation2 + $0x28] sm:$0xff] %v1693
        %1701 = vst [vmem:[#allocation2 + $0x30] sm:$0xff] %v1694
        %1702 = vst [vmem:[#allocation2 + $0x38] sm:$0x1] %v1695
        %v1703 = vld [vmem:[%s286 + $0x10] sm:$0xff]
        %v1704 = vld [vmem:[%s286 + $0x30] sm:$0x1]
        %v1705 = vld [vmem:[#allocation2] sm:$0xff]
        %v1706 = vld [vmem:[#allocation2 + $0x8] sm:$0xff]
        %v1707 = vld [vmem:[#allocation2 + $0x10] sm:$0xff]
        %v1708 = vld [vmem:[#allocation2 + $0x18] sm:$0xff]
        %v1709 = vld [vmem:[#allocation2 + $0x20] sm:$0xff]
        %v1710 = vld [vmem:[#allocation2 + $0x28] sm:$0xff]
        %v1711 = vld [vmem:[#allocation2 + $0x30] sm:$0x1]
        %v1712 = vsel %vm605, %v1705, 0.0
        %v1713 = vsel %vm606, %v1706, 0.0
        %v1714 = vsel %vm607, %v1707, 0.0
        %v1715 = vsel %vm608, %v1708, 0.0
        %v1716 = vsel %vm609, %v1709, 0.0
        %v1717 = vsel %vm610, %v1710, 0.0
        %v1718 = vsel %vm611, %v1711, 0.0
        %v1719 = vperm.slane %v1703, 0
        %v1720 = vmul.f32 %v1712, %v1719
        %v1721 = vmul.f32 %v1713, %v1719
        %v1722 = vmul.f32 %v1714, %v1719
        %v1723 = vmul.f32 %v1715, %v1719
        %v1724 = vmul.f32 %v1716, %v1719
        %v1725 = vmul.f32 %v1717, %v1719
        %v1726 = vmul.f32 %v1718, %v1719
        %v1727 = vadd.f32 %v1720, 0.0
        %v1728 = vadd.f32 %v1721, 0.0
        %v1729 = vadd.f32 %v1722, 0.0
        %v1730 = vadd.f32 %v1723, 0.0
        %v1731 = vadd.f32 %v1724, 0.0
        %v1732 = vadd.f32 %v1725, 0.0
        %v1733 = vadd.f32 %v1726, 0.0
        %v1734 = vld [vmem:[#allocation2 + $0x1] sm:$0xff]
        %v1735 = vld [vmem:[#allocation2 + $0x9] sm:$0xff]
        %v1736 = vld [vmem:[#allocation2 + $0x11] sm:$0xff]
        %v1737 = vld [vmem:[#allocation2 + $0x19] sm:$0xff]
        %v1738 = vld [vmem:[#allocation2 + $0x21] sm:$0xff]
        %v1739 = vld [vmem:[#allocation2 + $0x29] sm:$0xff]
        %v1740 = vld [vmem:[#allocation2 + $0x31] sm:$0x1]
        %v1741 = vperm.slane %v1703, 1
        %v1742 = vmul.f32 %v1734, %v1741
        %v1743 = vmul.f32 %v1735, %v1741
        %v1744 = vmul.f32 %v1736, %v1741
        %v1745 = vmul.f32 %v1737, %v1741
        %v1746 = vmul.f32 %v1738, %v1741
        %v1747 = vmul.f32 %v1739, %v1741
        %v1748 = vmul.f32 %v1740, %v1741
        %v1749 = vadd.f32 %v1727, %v1742
        %v1750 = vadd.f32 %v1728, %v1743
        %v1751 = vadd.f32 %v1729, %v1744
        %v1752 = vadd.f32 %v1730, %v1745
        %v1753 = vadd.f32 %v1731, %v1746
        %v1754 = vadd.f32 %v1732, %v1747
        %v1755 = vadd.f32 %v1733, %v1748
        %v1756 = vld [vmem:[#allocation2 + $0x2] sm:$0xff]
        %v1757 = vld [vmem:[#allocation2 + $0xa] sm:$0xff]
        %v1758 = vld [vmem:[#allocation2 + $0x12] sm:$0xff]
        %v1759 = vld [vmem:[#allocation2 + $0x1a] sm:$0xff]
        %v1760 = vld [vmem:[#allocation2 + $0x22] sm:$0xff]
        %v1761 = vld [vmem:[#allocation2 + $0x2a] sm:$0xff]
        %v1762 = vld [vmem:[#allocation2 + $0x32] sm:$0x1]
        %v1763 = vsel %vm612, %v1756, 0.0
        %v1764 = vsel %vm613, %v1757, 0.0
        %v1765 = vsel %vm614, %v1758, 0.0
        %v1766 = vsel %vm615, %v1759, 0.0
        %v1767 = vsel %vm616, %v1760, 0.0
        %v1768 = vsel %vm617, %v1761, 0.0
        %v1769 = vsel %vm618, %v1762, 0.0
        %v1770 = vperm.slane %v1703, 2
        %v1771 = vmul.f32 %v1763, %v1770
        %v1772 = vmul.f32 %v1764, %v1770
        %v1773 = vmul.f32 %v1765, %v1770
        %v1774 = vmul.f32 %v1766, %v1770
        %v1775 = vmul.f32 %v1767, %v1770
        %v1776 = vmul.f32 %v1768, %v1770
        %v1777 = vmul.f32 %v1769, %v1770
        %v1778 = vadd.f32 %v1749, %v1771
        %v1779 = vadd.f32 %v1750, %v1772
        %v1780 = vadd.f32 %v1751, %v1773
        %v1781 = vadd.f32 %v1752, %v1774
        %v1782 = vadd.f32 %v1753, %v1775
        %v1783 = vadd.f32 %v1754, %v1776
        %v1784 = vadd.f32 %v1755, %v1777
        %v1785 = vld [vmem:[#allocation2 + $0x7] sm:$0xff]
        %v1786 = vld [vmem:[#allocation2 + $0xf] sm:$0xff]
        %v1787 = vld [vmem:[#allocation2 + $0x17] sm:$0xff]
        %v1788 = vld [vmem:[#allocation2 + $0x1f] sm:$0xff]
        %v1789 = vld [vmem:[#allocation2 + $0x27] sm:$0xff]
        %v1790 = vld [vmem:[#allocation2 + $0x2f] sm:$0xff]
        %v1791 = vld [vmem:[#allocation2 + $0x37] sm:$0x1]
        %v1792 = vsel %vm605, %v1785, 0.0
        %v1793 = vsel %vm606, %v1786, 0.0
        %v1794 = vsel %vm607, %v1787, 0.0
        %v1795 = vsel %vm608, %v1788, 0.0
        %v1796 = vsel %vm609, %v1789, 0.0
        %v1797 = vsel %vm610, %v1790, 0.0
        %v1798 = vsel %vm611, %v1791, 0.0
        %v1799 = vperm.slane %v1703, 3
        %v1800 = vmul.f32 %v1792, %v1799
        %v1801 = vmul.f32 %v1793, %v1799
        %v1802 = vmul.f32 %v1794, %v1799
        %v1803 = vmul.f32 %v1795, %v1799
        %v1804 = vmul.f32 %v1796, %v1799
        %v1805 = vmul.f32 %v1797, %v1799
        %v1806 = vmul.f32 %v1798, %v1799
        %v1807 = vadd.f32 %v1778, %v1800
        %v1808 = vadd.f32 %v1779, %v1801
        %v1809 = vadd.f32 %v1780, %v1802
        %v1810 = vadd.f32 %v1781, %v1803
        %v1811 = vadd.f32 %v1782, %v1804
        %v1812 = vadd.f32 %v1783, %v1805
        %v1813 = vadd.f32 %v1784, %v1806
        %v1814 = vld [vmem:[#allocation2 + $0x30] sm:$0xff]
        %v1815 = vld [vmem:[#allocation2 + $0x38] sm:$0x1]
        %v1816 = vperm.slane %v1703, 4
        %v1817 = vmul.f32 %v1706, %v1816
        %v1818 = vmul.f32 %v1707, %v1816
        %v1819 = vmul.f32 %v1708, %v1816
        %v1820 = vmul.f32 %v1709, %v1816
        %v1821 = vmul.f32 %v1710, %v1816
        %v1822 = vmul.f32 %v1814, %v1816
        %v1823 = vmul.f32 %v1815, %v1816
        %v1824 = vadd.f32 %v1807, %v1817
        %v1825 = vadd.f32 %v1808, %v1818
        %v1826 = vadd.f32 %v1809, %v1819
        %v1827 = vadd.f32 %v1810, %v1820
        %v1828 = vadd.f32 %v1811, %v1821
        %v1829 = vadd.f32 %v1812, %v1822
        %v1830 = vadd.f32 %v1813, %v1823
        %v1831 = vld [vmem:[#allocation2 + $0x31] sm:$0xff]
        %v1832 = vld [vmem:[#allocation2 + $0x39] sm:$0x1]
        %v1833 = vsel %vm612, %v1735, 0.0
        %v1834 = vsel %vm613, %v1736, 0.0
        %v1835 = vsel %vm614, %v1737, 0.0
        %v1836 = vsel %vm615, %v1738, 0.0
        %v1837 = vsel %vm616, %v1739, 0.0
        %v1838 = vsel %vm617, %v1831, 0.0
        %v1839 = vsel %vm618, %v1832, 0.0
        %v1840 = vperm.slane %v1703, 5
        %v1841 = vmul.f32 %v1833, %v1840
        %v1842 = vmul.f32 %v1834, %v1840
        %v1843 = vmul.f32 %v1835, %v1840
        %v1844 = vmul.f32 %v1836, %v1840
        %v1845 = vmul.f32 %v1837, %v1840
        %v1846 = vmul.f32 %v1838, %v1840
        %v1847 = vmul.f32 %v1839, %v1840
        %v1848 = vadd.f32 %v1824, %v1841
        %v1849 = vadd.f32 %v1825, %v1842
        %v1850 = vadd.f32 %v1826, %v1843
        %v1851 = vadd.f32 %v1827, %v1844
        %v1852 = vadd.f32 %v1828, %v1845
        %v1853 = vadd.f32 %v1829, %v1846
        %v1854 = vadd.f32 %v1830, %v1847
        %v1855 = vld [vmem:[#allocation2 + $0xe] sm:$0xff]
        %v1856 = vld [vmem:[#allocation2 + $0x16] sm:$0xff]
        %v1857 = vld [vmem:[#allocation2 + $0x1e] sm:$0xff]
        %v1858 = vld [vmem:[#allocation2 + $0x26] sm:$0xff]
        %v1859 = vld [vmem:[#allocation2 + $0x2e] sm:$0xff]
        %v1860 = vld [vmem:[#allocation2 + $0x36] sm:$0xff]
        %v1861 = vld [vmem:[#allocation2 + $0x3e] sm:$0x1]
        %v1862 = vsel %vm605, %v1855, 0.0
        %v1863 = vsel %vm606, %v1856, 0.0
        %v1864 = vsel %vm607, %v1857, 0.0
        %v1865 = vsel %vm608, %v1858, 0.0
        %v1866 = vsel %vm609, %v1859, 0.0
        %v1867 = vsel %vm610, %v1860, 0.0
        %v1868 = vsel %vm611, %v1861, 0.0
        %v1869 = vperm.slane %v1703, 6
        %v1870 = vmul.f32 %v1862, %v1869
        %v1871 = vmul.f32 %v1863, %v1869
        %v1872 = vmul.f32 %v1864, %v1869
        %v1873 = vmul.f32 %v1865, %v1869
        %v1874 = vmul.f32 %v1866, %v1869
        %v1875 = vmul.f32 %v1867, %v1869
        %v1876 = vmul.f32 %v1868, %v1869
        %v1877 = vadd.f32 %v1848, %v1870
        %v1878 = vadd.f32 %v1849, %v1871
        %v1879 = vadd.f32 %v1850, %v1872
        %v1880 = vadd.f32 %v1851, %v1873
        %v1881 = vadd.f32 %v1852, %v1874
        %v1882 = vadd.f32 %v1853, %v1875
        %v1883 = vadd.f32 %v1854, %v1876
        %v1884 = vld [vmem:[#allocation2 + $0x37] sm:$0xff]
        %v1885 = vld [vmem:[#allocation2 + $0x3f] sm:$0x1]
        %v1886 = vperm.slane %v1703, 7
        %v1887 = vmul.f32 %v1786, %v1886
        %v1888 = vmul.f32 %v1787, %v1886
        %v1889 = vmul.f32 %v1788, %v1886
        %v1890 = vmul.f32 %v1789, %v1886
        %v1891 = vmul.f32 %v1790, %v1886
        %v1892 = vmul.f32 %v1884, %v1886
        %v1893 = vmul.f32 %v1885, %v1886
        %v1894 = vadd.f32 %v1877, %v1887
        %v1895 = vadd.f32 %v1878, %v1888
        %v1896 = vadd.f32 %v1879, %v1889
        %v1897 = vadd.f32 %v1880, %v1890
        %v1898 = vadd.f32 %v1881, %v1891
        %v1899 = vadd.f32 %v1882, %v1892
        %v1900 = vadd.f32 %v1883, %v1893
        %v1901 = vld [vmem:[#allocation2 + $0x10] sm:$0xff]
        %v1902 = vld [vmem:[#allocation2 + $0x18] sm:$0xff]
        %v1903 = vld [vmem:[#allocation2 + $0x20] sm:$0xff]
        %v1904 = vld [vmem:[#allocation2 + $0x28] sm:$0xff]
        %v1905 = vld [vmem:[#allocation2 + $0x30] sm:$0xff]
        %v1906 = vld [vmem:[#allocation2 + $0x38] sm:$0xff]
        %v1907 = vld [vmem:[#allocation2 + $0x40] sm:$0x1]
        %v1908 = vsel %vm612, %v1901, 0.0
        %v1909 = vsel %vm613, %v1902, 0.0
        %v1910 = vsel %vm614, %v1903, 0.0
        %v1911 = vsel %vm615, %v1904, 0.0
        %v1912 = vsel %vm616, %v1905, 0.0
        %v1913 = vsel %vm617, %v1906, 0.0
        %v1914 = vsel %vm618, %v1907, 0.0
        %v1915 = vperm.slane %v1704, 0
        %v1916 = vmul.f32 %v1908, %v1915
        %v1917 = vmul.f32 %v1909, %v1915
        %v1918 = vmul.f32 %v1910, %v1915
        %v1919 = vmul.f32 %v1911, %v1915
        %v1920 = vmul.f32 %v1912, %v1915
        %v1921 = vmul.f32 %v1913, %v1915
        %v1922 = vmul.f32 %v1914, %v1915
        %v1923 = vadd.f32 %v1894, %v1916
        %v1924 = vadd.f32 %v1895, %v1917
        %v1925 = vadd.f32 %v1896, %v1918
        %v1926 = vadd.f32 %v1897, %v1919
        %v1927 = vadd.f32 %v1898, %v1920
        %v1928 = vadd.f32 %v1899, %v1921
        %v1929 = vadd.f32 %v1900, %v1922
        %1930 = vst [vmem:[%s322 + $0x10] sm:$0xff] %v1923
        %1931 = vst [vmem:[%s322 + $0x30] sm:$0xff] %v1924
        %1932 = vst [vmem:[%s322 + $0x50] sm:$0xff] %v1925
        %1933 = vst [vmem:[%s322 + $0x70] sm:$0xff] %v1926
        %1934 = vst [vmem:[%s322 + $0x90] sm:$0xff] %v1927
        %1935 = vst [vmem:[%s322 + $0xb0] sm:$0xff] %v1928
        %1936 = vst [vmem:[%s322 + $0xd0] sm:$0x1] %v1929
        %v1937 = vld [vmem:[%s277 + $0x18] sm:$0xff]
        %v1938 = vld [vmem:[%s277 + $0x38] sm:$0xff]
        %v1939 = vld [vmem:[%s277 + $0x58] sm:$0xff]
        %v1940 = vld [vmem:[%s277 + $0x78] sm:$0xff]
        %v1941 = vld [vmem:[%s277 + $0x98] sm:$0xff]
        %v1942 = vld [vmem:[%s277 + $0xb8] sm:$0xff]
        %v1943 = vld [vmem:[%s277 + $0xd8] sm:$0xff]
        %v1944 = vld [vmem:[%s277 + $0xf8] sm:$0xff]
        %v1945 = vld [vmem:[%s277 + $0x118] sm:$0xff]
        %v1946 = vld [vmem:[%s277 + $0x138] sm:$0xff]
        %v1947 = vld [vmem:[%s277 + $0x158] sm:$0xff]
        %v1948 = vld [vmem:[%s277 + $0x178] sm:$0xff]
        %v1949 = vld [vmem:[%s277 + $0x198] sm:$0xff]
        %v1950 = vld [vmem:[%s277 + $0x1b8] sm:$0xff]
        %v1951 = vld [vmem:[%s277 + $0x1d8] sm:$0xff]
        %v1952 = vld [vmem:[%s277 + $0x1f8] sm:$0xff]
        %v1953 = vld [vmem:[%s277 + $0x218] sm:$0xff]
        %v1954 = vld [vmem:[%s277 + $0x238] sm:$0xff]
        %v1955 = vld [vmem:[%s277 + $0x258] sm:$0xff]
        %v1956 = vld [vmem:[%s277 + $0x278] sm:$0xff]
        %1957 = vmatpush.msra.mxu0 %v1952
        %1958 = vmatpush.msra.mxu0 %v1951
        %1959 = vmatpush.msra.mxu0 %v1950
        %1960 = vmatpush.msra.mxu0 %v1949
        %1961 = vmatpush.msra.mxu0 %v1948
        %1962 = vmatpush.msra.mxu0 %v1947
        %1963 = vmatpush.msra.mxu0 %v1946
        %1964 = vmatpush.msra.mxu0 %v1945
        %1965 = vmatpush.msra.mxu0 %v1944
        %1966 = vmatpush.msra.mxu0 %v1943
        %1967 = vmatpush.msra.mxu0 %v1942
        %1968 = vmatpush.msra.mxu0 %v1941
        %1969 = vmatpush.msra.mxu0 %v1940
        %1970 = vmatpush.msra.mxu0 %v1939
        %1971 = vmatpush.msra.mxu0 %v1938
        %1972 = vmatpush.msra.mxu0 %v1937
        %1973 = vmatmul.f32.gmra.mxu0 %v619
        %v1974 = vpop.f32.mrf.mxu0
        %v1975 = vadd.f32 0.0, %v1974
        %1976 = vmatmul.f32.gmra.mxu0 %v621
        %v1977 = vpop.f32.mrf.mxu0
        %v1978 = vadd.f32 0.0, %v1977
        %1979 = vmatmul.f32.gmra.mxu0 %v623
        %v1980 = vpop.f32.mrf.mxu0
        %v1981 = vadd.f32 0.0, %v1980
        %1982 = vmatmul.f32.gmra.mxu0 %v625
        %v1983 = vpop.f32.mrf.mxu0
        %v1984 = vadd.f32 0.0, %v1983
        %1985 = vmatmul.f32.gmra.mxu0 %v627
        %v1986 = vpop.f32.mrf.mxu0
        %v1987 = vadd.f32 0.0, %v1986
        %1988 = vmatmul.f32.gmra.mxu0 %v629
        %v1989 = vpop.f32.mrf.mxu0
        %v1990 = vadd.f32 0.0, %v1989
        %1991 = vmatmul.f32.gmra.mxu0 %v631
        %v1992 = vpop.f32.mrf.mxu0
        %v1993 = vadd.f32 0.0, %v1992
        %1994 = vdwg.mxu0
        %1995 = vmatpush.msra.mxu0 0.0
        %1996 = vmatpush.msra.mxu0 0.0
        %1997 = vmatpush.msra.mxu0 0.0
        %1998 = vmatpush.msra.mxu0 0.0
        %1999 = vmatpush.msra.mxu0 0.0
        %2000 = vmatpush.msra.mxu0 0.0
        %2001 = vmatpush.msra.mxu0 0.0
        %2002 = vmatpush.msra.mxu0 0.0
        %2003 = vmatpush.msra.mxu0 0.0
        %2004 = vmatpush.msra.mxu0 0.0
        %2005 = vmatpush.msra.mxu0 0.0
        %2006 = vmatpush.msra.mxu0 0.0
        %2007 = vmatpush.msra.mxu0 %v1956
        %2008 = vmatpush.msra.mxu0 %v1955
        %2009 = vmatpush.msra.mxu0 %v1954
        %2010 = vmatpush.msra.mxu0 %v1953
        %2011 = vmatmul.f32.gmra.mxu0 %v655
        %v2012 = vpop.f32.mrf.mxu0
        %v2013 = vadd.f32 %v1975, %v2012
        %2014 = vmatmul.f32.gmra.mxu0 %v658
        %v2015 = vpop.f32.mrf.mxu0
        %v2016 = vadd.f32 %v1978, %v2015
        %2017 = vmatmul.f32.gmra.mxu0 %v661
        %v2018 = vpop.f32.mrf.mxu0
        %v2019 = vadd.f32 %v1981, %v2018
        %2020 = vmatmul.f32.gmra.mxu0 %v664
        %v2021 = vpop.f32.mrf.mxu0
        %v2022 = vadd.f32 %v1984, %v2021
        %2023 = vmatmul.f32.gmra.mxu0 %v667
        %v2024 = vpop.f32.mrf.mxu0
        %v2025 = vadd.f32 %v1987, %v2024
        %2026 = vmatmul.f32.gmra.mxu0 %v670
        %v2027 = vpop.f32.mrf.mxu0
        %v2028 = vadd.f32 %v1990, %v2027
        %2029 = vmatmul.f32.gmra.mxu0 %v673
        %v2030 = vpop.f32.mrf.mxu0
        %v2031 = vadd.f32 %v1993, %v2030
        %2032 = vdwg.mxu0
        %v2033 = vadd.f32 %v2013, %v2016
        %v2034 = vadd.f32 %v2033, %v2019
        %v2035 = vadd.f32 %v2034, %v2022
        %v2036 = vadd.f32 %v2035, %v2025
        %v2037 = vadd.f32 %v2036, %v2028
        %v2038 = vsel %vm756, %v2031, 0.0
        %v2039 = vadd.f32 %v2037, %v2038
        %v2040 = vrot.slane %v2039, 4
        %v2041 = vadd.f32 %v2039, %v2040
        %v2042 = vrot.slane %v2041, 2
        %v2043 = vadd.f32 %v2041, %v2042
        %v2044 = vrot.slane %v2043, 1
        %v2045 = vadd.f32 %v2043, %v2044
        %v2046 = vmul.f32 %v2045, 0.020408163
        %v2047 = vsub.f32 %v2013, %v2046
        %v2048 = vsub.f32 %v2016, %v2046
        %v2049 = vsub.f32 %v2019, %v2046
        %v2050 = vsub.f32 %v2022, %v2046
        %v2051 = vsub.f32 %v2025, %v2046
        %v2052 = vsub.f32 %v2028, %v2046
        %v2053 = vsub.f32 %v2031, %v2046
        %v2054 = vmul.f32 %v2047, %v2047
        %v2055 = vmul.f32 %v2048, %v2048
        %v2056 = vmul.f32 %v2049, %v2049
        %v2057 = vmul.f32 %v2050, %v2050
        %v2058 = vmul.f32 %v2051, %v2051
        %v2059 = vmul.f32 %v2052, %v2052
        %v2060 = vmul.f32 %v2053, %v2053
        %v2061 = vadd.f32 %v2054, %v2055
        %v2062 = vadd.f32 %v2061, %v2056
        %v2063 = vadd.f32 %v2062, %v2057
        %v2064 = vadd.f32 %v2063, %v2058
        %v2065 = vadd.f32 %v2064, %v2059
        %v2066 = vsel %vm756, %v2060, 0.0
        %v2067 = vadd.f32 %v2065, %v2066
        %v2068 = vrot.slane %v2067, 4
        %v2069 = vadd.f32 %v2067, %v2068
        %v2070 = vrot.slane %v2069, 2
        %v2071 = vadd.f32 %v2069, %v2070
        %v2072 = vrot.slane %v2071, 1
        %v2073 = vadd.f32 %v2071, %v2072
        %v2074 = vmul.f32 %v2073, 0.020408163
        %v2075 = vld [vmem:[%s327 + $0x3] sm:$0x1]
        %v2076 = vadd.f32 %v2074, 1e-05
        %v2077 = vrsqrt.pop %v2076
        %v2078 = vmul.f32 %v2077, %v2076
        %v2079 = vmul.f32 %v2078, %v2077
        %v2080 = vmul.f32 0.5, %v2079
        %v2081 = vsub.f32 1.5, %v2080
        %v2082 = vmul.f32 %v2077, %v2081
        %vm2083 = vweird.f32 %v2076
        %vm2084 = vweird.f32 %v2077
        %vm2085 = vmor %vm2083, %vm2084
        %v2086 = vsel %vm2085, %v2077, %v2082
        %v2087 = vmul.f32 %v2075, %v2086
        %v2089 = vperm.slane %v2087, 0
        %v2091 = vmul.f32 %v2047, %v2089
        %v2092 = vmul.f32 %v2048, %v2089
        %v2093 = vmul.f32 %v2049, %v2089
        %v2094 = vmul.f32 %v2050, %v2089
        %v2095 = vmul.f32 %v2051, %v2089
        %v2096 = vmul.f32 %v2052, %v2089
        %v2097 = vmul.f32 %v2053, %v2089
        %v2098 = vld [vmem:[%s332 + $0x3] sm:$0x1]
        %v2100 = vperm.slane %v2098, 0
        %v2102 = vadd.f32 %v2091, %v2100
        %v2103 = vadd.f32 %v2092, %v2100
        %v2104 = vadd.f32 %v2093, %v2100
        %v2105 = vadd.f32 %v2094, %v2100
        %v2106 = vadd.f32 %v2095, %v2100
        %v2107 = vadd.f32 %v2096, %v2100
        %v2108 = vadd.f32 %v2097, %v2100
        %v2109 = vmax.f32 %v2102, 0.0
        %v2110 = vmax.f32 %v2103, 0.0
        %v2111 = vmax.f32 %v2104, 0.0
        %v2112 = vmax.f32 %v2105, 0.0
        %v2113 = vmax.f32 %v2106, 0.0
        %v2114 = vmax.f32 %v2107, 0.0
        %v2115 = vmax.f32 %v2108, 0.0
        %v2116 = vmin.f32 %v2109, 6.0
        %v2117 = vmin.f32 %v2110, 6.0
        %v2118 = vmin.f32 %v2111, 6.0
        %v2119 = vmin.f32 %v2112, 6.0
        %v2120 = vmin.f32 %v2113, 6.0
        %v2121 = vmin.f32 %v2114, 6.0
        %v2122 = vmin.f32 %v2115, 6.0
        %2123 = vst [vmem:[#allocation2 + $0x8] sm:$0xff] %v2116
        %2124 = vst [vmem:[#allocation2 + $0x10] sm:$0xff] %v2117
        %2125 = vst [vmem:[#allocation2 + $0x18] sm:$0xff] %v2118
        %2126 = vst [vmem:[#allocation2 + $0x20] sm:$0xff] %v2119
        %2127 = vst [vmem:[#allocation2 + $0x28] sm:$0xff] %v2120
        %2128 = vst [vmem:[#allocation2 + $0x30] sm:$0xff] %v2121
        %2129 = vst [vmem:[#allocation2 + $0x38] sm:$0x1] %v2122
        %v2130 = vld [vmem:[%s286 + $0x18] sm:$0xff]
        %v2131 = vld [vmem:[%s286 + $0x38] sm:$0x1]
        %v2132 = vld [vmem:[#allocation2] sm:$0xff]
        %v2133 = vld [vmem:[#allocation2 + $0x8] sm:$0xff]
        %v2134 = vld [vmem:[#allocation2 + $0x10] sm:$0xff]
        %v2135 = vld [vmem:[#allocation2 + $0x18] sm:$0xff]
        %v2136 = vld [vmem:[#allocation2 + $0x20] sm:$0xff]
        %v2137 = vld [vmem:[#allocation2 + $0x28] sm:$0xff]
        %v2138 = vld [vmem:[#allocation2 + $0x30] sm:$0x1]
        %v2139 = vsel %vm605, %v2132, 0.0
        %v2140 = vsel %vm606, %v2133, 0.0
        %v2141 = vsel %vm607, %v2134, 0.0
        %v2142 = vsel %vm608, %v2135, 0.0
        %v2143 = vsel %vm609, %v2136, 0.0
        %v2144 = vsel %vm610, %v2137, 0.0
        %v2145 = vsel %vm611, %v2138, 0.0
        %v2146 = vperm.slane %v2130, 0
        %v2147 = vmul.f32 %v2139, %v2146
        %v2148 = vmul.f32 %v2140, %v2146
        %v2149 = vmul.f32 %v2141, %v2146
        %v2150 = vmul.f32 %v2142, %v2146
        %v2151 = vmul.f32 %v2143, %v2146
        %v2152 = vmul.f32 %v2144, %v2146
        %v2153 = vmul.f32 %v2145, %v2146
        %v2154 = vadd.f32 %v2147, 0.0
        %v2155 = vadd.f32 %v2148, 0.0
        %v2156 = vadd.f32 %v2149, 0.0
        %v2157 = vadd.f32 %v2150, 0.0
        %v2158 = vadd.f32 %v2151, 0.0
        %v2159 = vadd.f32 %v2152, 0.0
        %v2160 = vadd.f32 %v2153, 0.0
        %v2161 = vld [vmem:[#allocation2 + $0x1] sm:$0xff]
        %v2162 = vld [vmem:[#allocation2 + $0x9] sm:$0xff]
        %v2163 = vld [vmem:[#allocation2 + $0x11] sm:$0xff]
        %v2164 = vld [vmem:[#allocation2 + $0x19] sm:$0xff]
        %v2165 = vld [vmem:[#allocation2 + $0x21] sm:$0xff]
        %v2166 = vld [vmem:[#allocation2 + $0x29] sm:$0xff]
        %v2167 = vld [vmem:[#allocation2 + $0x31] sm:$0x1]
        %v2168 = vperm.slane %v2130, 1
        %v2169 = vmul.f32 %v2161, %v2168
        %v2170 = vmul.f32 %v2162, %v2168
        %v2171 = vmul.f32 %v2163, %v2168
        %v2172 = vmul.f32 %v2164, %v2168
        %v2173 = vmul.f32 %v2165, %v2168
        %v2174 = vmul.f32 %v2166, %v2168
        %v2175 = vmul.f32 %v2167, %v2168
        %v2176 = vadd.f32 %v2154, %v2169
        %v2177 = vadd.f32 %v2155, %v2170
        %v2178 = vadd.f32 %v2156, %v2171
        %v2179 = vadd.f32 %v2157, %v2172
        %v2180 = vadd.f32 %v2158, %v2173
        %v2181 = vadd.f32 %v2159, %v2174
        %v2182 = vadd.f32 %v2160, %v2175
        %v2183 = vld [vmem:[#allocation2 + $0x2] sm:$0xff]
        %v2184 = vld [vmem:[#allocation2 + $0xa] sm:$0xff]
        %v2185 = vld [vmem:[#allocation2 + $0x12] sm:$0xff]
        %v2186 = vld [vmem:[#allocation2 + $0x1a] sm:$0xff]
        %v2187 = vld [vmem:[#allocation2 + $0x22] sm:$0xff]
        %v2188 = vld [vmem:[#allocation2 + $0x2a] sm:$0xff]
        %v2189 = vld [vmem:[#allocation2 + $0x32] sm:$0x1]
        %v2190 = vsel %vm612, %v2183, 0.0
        %v2191 = vsel %vm613, %v2184, 0.0
        %v2192 = vsel %vm614, %v2185, 0.0
        %v2193 = vsel %vm615, %v2186, 0.0
        %v2194 = vsel %vm616, %v2187, 0.0
        %v2195 = vsel %vm617, %v2188, 0.0
        %v2196 = vsel %vm618, %v2189, 0.0
        %v2197 = vperm.slane %v2130, 2
        %v2198 = vmul.f32 %v2190, %v2197
        %v2199 = vmul.f32 %v2191, %v2197
        %v2200 = vmul.f32 %v2192, %v2197
        %v2201 = vmul.f32 %v2193, %v2197
        %v2202 = vmul.f32 %v2194, %v2197
        %v2203 = vmul.f32 %v2195, %v2197
        %v2204 = vmul.f32 %v2196, %v2197
        %v2205 = vadd.f32 %v2176, %v2198
        %v2206 = vadd.f32 %v2177, %v2199
        %v2207 = vadd.f32 %v2178, %v2200
        %v2208 = vadd.f32 %v2179, %v2201
        %v2209 = vadd.f32 %v2180, %v2202
        %v2210 = vadd.f32 %v2181, %v2203
        %v2211 = vadd.f32 %v2182, %v2204
        %v2212 = vld [vmem:[#allocation2 + $0x7] sm:$0xff]
        %v2213 = vld [vmem:[#allocation2 + $0xf] sm:$0xff]
        %v2214 = vld [vmem:[#allocation2 + $0x17] sm:$0xff]
        %v2215 = vld [vmem:[#allocation2 + $0x1f] sm:$0xff]
        %v2216 = vld [vmem:[#allocation2 + $0x27] sm:$0xff]
        %v2217 = vld [vmem:[#allocation2 + $0x2f] sm:$0xff]
        %v2218 = vld [vmem:[#allocation2 + $0x37] sm:$0x1]
        %v2219 = vsel %vm605, %v2212, 0.0
        %v2220 = vsel %vm606, %v2213, 0.0
        %v2221 = vsel %vm607, %v2214, 0.0
        %v2222 = vsel %vm608, %v2215, 0.0
        %v2223 = vsel %vm609, %v2216, 0.0
        %v2224 = vsel %vm610, %v2217, 0.0
        %v2225 = vsel %vm611, %v2218, 0.0
        %v2226 = vperm.slane %v2130, 3
        %v2227 = vmul.f32 %v2219, %v2226
        %v2228 = vmul.f32 %v2220, %v2226
        %v2229 = vmul.f32 %v2221, %v2226
        %v2230 = vmul.f32 %v2222, %v2226
        %v2231 = vmul.f32 %v2223, %v2226
        %v2232 = vmul.f32 %v2224, %v2226
        %v2233 = vmul.f32 %v2225, %v2226
        %v2234 = vadd.f32 %v2205, %v2227
        %v2235 = vadd.f32 %v2206, %v2228
        %v2236 = vadd.f32 %v2207, %v2229
        %v2237 = vadd.f32 %v2208, %v2230
        %v2238 = vadd.f32 %v2209, %v2231
        %v2239 = vadd.f32 %v2210, %v2232
        %v2240 = vadd.f32 %v2211, %v2233
        %v2241 = vld [vmem:[#allocation2 + $0x30] sm:$0xff]
        %v2242 = vld [vmem:[#allocation2 + $0x38] sm:$0x1]
        %v2243 = vperm.slane %v2130, 4
        %v2244 = vmul.f32 %v2133, %v2243
        %v2245 = vmul.f32 %v2134, %v2243
        %v2246 = vmul.f32 %v2135, %v2243
        %v2247 = vmul.f32 %v2136, %v2243
        %v2248 = vmul.f32 %v2137, %v2243
        %v2249 = vmul.f32 %v2241, %v2243
        %v2250 = vmul.f32 %v2242, %v2243
        %v2251 = vadd.f32 %v2234, %v2244
        %v2252 = vadd.f32 %v2235, %v2245
        %v2253 = vadd.f32 %v2236, %v2246
        %v2254 = vadd.f32 %v2237, %v2247
        %v2255 = vadd.f32 %v2238, %v2248
        %v2256 = vadd.f32 %v2239, %v2249
        %v2257 = vadd.f32 %v2240, %v2250
        %v2258 = vld [vmem:[#allocation2 + $0x31] sm:$0xff]
        %v2259 = vld [vmem:[#allocation2 + $0x39] sm:$0x1]
        %v2260 = vsel %vm612, %v2162, 0.0
        %v2261 = vsel %vm613, %v2163, 0.0
        %v2262 = vsel %vm614, %v2164, 0.0
        %v2263 = vsel %vm615, %v2165, 0.0
        %v2264 = vsel %vm616, %v2166, 0.0
        %v2265 = vsel %vm617, %v2258, 0.0
        %v2266 = vsel %vm618, %v2259, 0.0
        %v2267 = vperm.slane %v2130, 5
        %v2268 = vmul.f32 %v2260, %v2267
        %v2269 = vmul.f32 %v2261, %v2267
        %v2270 = vmul.f32 %v2262, %v2267
        %v2271 = vmul.f32 %v2263, %v2267
        %v2272 = vmul.f32 %v2264, %v2267
        %v2273 = vmul.f32 %v2265, %v2267
        %v2274 = vmul.f32 %v2266, %v2267
        %v2275 = vadd.f32 %v2251, %v2268
        %v2276 = vadd.f32 %v2252, %v2269
        %v2277 = vadd.f32 %v2253, %v2270
        %v2278 = vadd.f32 %v2254, %v2271
        %v2279 = vadd.f32 %v2255, %v2272
        %v2280 = vadd.f32 %v2256, %v2273
        %v2281 = vadd.f32 %v2257, %v2274
        %v2282 = vld [vmem:[#allocation2 + $0xe] sm:$0xff]
        %v2283 = vld [vmem:[#allocation2 + $0x16] sm:$0xff]
        %v2284 = vld [vmem:[#allocation2 + $0x1e] sm:$0xff]
        %v2285 = vld [vmem:[#allocation2 + $0x26] sm:$0xff]
        %v2286 = vld [vmem:[#allocation2 + $0x2e] sm:$0xff]
        %v2287 = vld [vmem:[#allocation2 + $0x36] sm:$0xff]
        %v2288 = vld [vmem:[#allocation2 + $0x3e] sm:$0x1]
        %v2289 = vsel %vm605, %v2282, 0.0
        %v2290 = vsel %vm606, %v2283, 0.0
        %v2291 = vsel %vm607, %v2284, 0.0
        %v2292 = vsel %vm608, %v2285, 0.0
        %v2293 = vsel %vm609, %v2286, 0.0
        %v2294 = vsel %vm610, %v2287, 0.0
        %v2295 = vsel %vm611, %v2288, 0.0
        %v2296 = vperm.slane %v2130, 6
        %v2297 = vmul.f32 %v2289, %v2296
        %v2298 = vmul.f32 %v2290, %v2296
        %v2299 = vmul.f32 %v2291, %v2296
        %v2300 = vmul.f32 %v2292, %v2296
        %v2301 = vmul.f32 %v2293, %v2296
        %v2302 = vmul.f32 %v2294, %v2296
        %v2303 = vmul.f32 %v2295, %v2296
        %v2304 = vadd.f32 %v2275, %v2297
        %v2305 = vadd.f32 %v2276, %v2298
        %v2306 = vadd.f32 %v2277, %v2299
        %v2307 = vadd.f32 %v2278, %v2300
        %v2308 = vadd.f32 %v2279, %v2301
        %v2309 = vadd.f32 %v2280, %v2302
        %v2310 = vadd.f32 %v2281, %v2303
        %v2311 = vld [vmem:[#allocation2 + $0x37] sm:$0xff]
        %v2312 = vld [vmem:[#allocation2 + $0x3f] sm:$0x1]
        %v2313 = vperm.slane %v2130, 7
        %v2314 = vmul.f32 %v2213, %v2313
        %v2315 = vmul.f32 %v2214, %v2313
        %v2316 = vmul.f32 %v2215, %v2313
        %v2317 = vmul.f32 %v2216, %v2313
        %v2318 = vmul.f32 %v2217, %v2313
        %v2319 = vmul.f32 %v2311, %v2313
        %v2320 = vmul.f32 %v2312, %v2313
        %v2321 = vadd.f32 %v2304, %v2314
        %v2322 = vadd.f32 %v2305, %v2315
        %v2323 = vadd.f32 %v2306, %v2316
        %v2324 = vadd.f32 %v2307, %v2317
        %v2325 = vadd.f32 %v2308, %v2318
        %v2326 = vadd.f32 %v2309, %v2319
        %v2327 = vadd.f32 %v2310, %v2320
        %v2328 = vld [vmem:[#allocation2 + $0x10] sm:$0xff]
        %v2329 = vld [vmem:[#allocation2 + $0x18] sm:$0xff]
        %v2330 = vld [vmem:[#allocation2 + $0x20] sm:$0xff]
        %v2331 = vld [vmem:[#allocation2 + $0x28] sm:$0xff]
        %v2332 = vld [vmem:[#allocation2 + $0x30] sm:$0xff]
        %v2333 = vld [vmem:[#allocation2 + $0x38] sm:$0xff]
        %v2334 = vld [vmem:[#allocation2 + $0x40] sm:$0x1]
        %v2335 = vsel %vm612, %v2328, 0.0
        %v2336 = vsel %vm613, %v2329, 0.0
        %v2337 = vsel %vm614, %v2330, 0.0
        %v2338 = vsel %vm615, %v2331, 0.0
        %v2339 = vsel %vm616, %v2332, 0.0
        %v2340 = vsel %vm617, %v2333, 0.0
        %v2341 = vsel %vm618, %v2334, 0.0
        %v2342 = vperm.slane %v2131, 0
        %v2343 = vmul.f32 %v2335, %v2342
        %v2344 = vmul.f32 %v2336, %v2342
        %v2345 = vmul.f32 %v2337, %v2342
        %v2346 = vmul.f32 %v2338, %v2342
        %v2347 = vmul.f32 %v2339, %v2342
        %v2348 = vmul.f32 %v2340, %v2342
        %v2349 = vmul.f32 %v2341, %v2342
        %v2350 = vadd.f32 %v2321, %v2343
        %v2351 = vadd.f32 %v2322, %v2344
        %v2352 = vadd.f32 %v2323, %v2345
        %v2353 = vadd.f32 %v2324, %v2346
        %v2354 = vadd.f32 %v2325, %v2347
        %v2355 = vadd.f32 %v2326, %v2348
        %v2356 = vadd.f32 %v2327, %v2349
        %2357 = vst [vmem:[%s322 + $0x18] sm:$0xff] %v2350
        %2358 = vst [vmem:[%s322 + $0x38] sm:$0xff] %v2351
        %2359 = vst [vmem:[%s322 + $0x58] sm:$0xff] %v2352
        %2360 = vst [vmem:[%s322 + $0x78] sm:$0xff] %v2353
        %2361 = vst [vmem:[%s322 + $0x98] sm:$0xff] %v2354
        %2362 = vst [vmem:[%s322 + $0xb8] sm:$0xff] %v2355
        %2363 = vst [vmem:[%s322 + $0xd8] sm:$0x1] %v2356
        %s2364 = sand.u32 %s152, 1
        %s2365 = sand.u32 %s152, 1
        %s2366 = smul.addr %s2365, 224
        %s2367 = scalar_lea.vmem [#allocation6], %s2366
        // Predicated region
        $region68: #{run_prepared.1} parent=58 // pred_check
          %p2368 = pneg %p162
        $region69: #{run_prepared.1} parent=58 // pred_check_branch
          %2370 = sbr.rel (%p2368) target = $region71
        $region70: #{run_prepared.1} parent=58 // pred_region
          %s2371 = smul.u32 4, %s19
          %s2372 = smul.addr %s2371, 8
          %s2373 = scalar_lea.vmem %s5, %s2372
          // Predicated region
          $region72: #{run_prepared.1} parent=70 // pred_check
            _
          $region73: #{run_prepared.1} parent=70 // pred_check_branch
            %2375 = sbr.rel (0) target = $region75
          $region74: #{run_prepared.1} parent=70 // pred_region
            // Predicated region
            $region76: #{run_prepared.1} parent=74 // pred_check
              _
            $region77: #{run_prepared.1} parent=74 // pred_check_branch
              %2377 = sbr.rel (0) target = $region79
            $region78: #{run_prepared.1} parent=74 // pred_region
              loop: start=0, step=1, limit=1
              $region80: #{run_prepared.1} parent=78 // loop_pre_header
                _
              $region81: #{run_prepared.1} parent=78 // loop_header
                %s2379 = sphi 0, %s2383
                %p2380 = scmp.ge.s32.totalorder %s2379, 1
                %s2384 = sphi %s2367, %s2367
                %s2385 = sphi %s2373, %s2373
              $region82: #{run_prepared.1} parent=78 // loop_header_branch
                %2382 = sbr.rel (%p2380) target = $region86
              $region83: #{run_prepared.1} parent=78 // loop_body
                %v2386 = vld [vmem:[%s2384] sm:$0xff]
                %2387 = vst [vmem:[%s2385] sm:$0xff] %v2386
                %v2388 = vld [vmem:[%s2384 + $0x8] sm:$0xff]
                %2389 = vst [vmem:[%s2385 + $0x8] sm:$0xff] %v2388
                %v2390 = vld [vmem:[%s2384 + $0x10] sm:$0xff]
                %2391 = vst [vmem:[%s2385 + $0x10] sm:$0xff] %v2390
                %v2392 = vld [vmem:[%s2384 + $0x18] sm:$0xff]
                %2393 = vst [vmem:[%s2385 + $0x18] sm:$0xff] %v2392
                %v2394 = vld [vmem:[%s2384 + $0x20] sm:$0xff]
                %2395 = vst [vmem:[%s2385 + $0x40] sm:$0xff] %v2394
                %v2396 = vld [vmem:[%s2384 + $0x28] sm:$0xff]
                %2397 = vst [vmem:[%s2385 + $0x48] sm:$0xff] %v2396
                %v2398 = vld [vmem:[%s2384 + $0x30] sm:$0xff]
                %2399 = vst [vmem:[%s2385 + $0x50] sm:$0xff] %v2398
                %v2400 = vld [vmem:[%s2384 + $0x38] sm:$0xff]
                %2401 = vst [vmem:[%s2385 + $0x58] sm:$0xff] %v2400
                %v2402 = vld [vmem:[%s2384 + $0x40] sm:$0xff]
                %2403 = vst [vmem:[%s2385 + $0x80] sm:$0xff] %v2402
                %v2404 = vld [vmem:[%s2384 + $0x48] sm:$0xff]
                %2405 = vst [vmem:[%s2385 + $0x88] sm:$0xff] %v2404
                %v2406 = vld [vmem:[%s2384 + $0x50] sm:$0xff]
                %2407 = vst [vmem:[%s2385 + $0x90] sm:$0xff] %v2406
                %v2408 = vld [vmem:[%s2384 + $0x58] sm:$0xff]
                %2409 = vst [vmem:[%s2385 + $0x98] sm:$0xff] %v2408
                %v2410 = vld [vmem:[%s2384 + $0x60] sm:$0xff]
                %2411 = vst [vmem:[%s2385 + $0xc0] sm:$0xff] %v2410
                %v2412 = vld [vmem:[%s2384 + $0x68] sm:$0xff]
                %2413 = vst [vmem:[%s2385 + $0xc8] sm:$0xff] %v2412
                %v2414 = vld [vmem:[%s2384 + $0x70] sm:$0xff]
                %2415 = vst [vmem:[%s2385 + $0xd0] sm:$0xff] %v2414
                %v2416 = vld [vmem:[%s2384 + $0x78] sm:$0xff]
                %2417 = vst [vmem:[%s2385 + $0xd8] sm:$0xff] %v2416
                %v2418 = vld [vmem:[%s2384 + $0x80] sm:$0xff]
                %2419 = vst [vmem:[%s2385 + $0x100] sm:$0xff] %v2418
                %v2420 = vld [vmem:[%s2384 + $0x88] sm:$0xff]
                %2421 = vst [vmem:[%s2385 + $0x108] sm:$0xff] %v2420
                %v2422 = vld [vmem:[%s2384 + $0x90] sm:$0xff]
                %2423 = vst [vmem:[%s2385 + $0x110] sm:$0xff] %v2422
                %v2424 = vld [vmem:[%s2384 + $0x98] sm:$0xff]
                %2425 = vst [vmem:[%s2385 + $0x118] sm:$0xff] %v2424
                %v2426 = vld [vmem:[%s2384 + $0xa0] sm:$0xff]
                %2427 = vst [vmem:[%s2385 + $0x140] sm:$0xff] %v2426
                %v2428 = vld [vmem:[%s2384 + $0xa8] sm:$0xff]
                %2429 = vst [vmem:[%s2385 + $0x148] sm:$0xff] %v2428
                %v2430 = vld [vmem:[%s2384 + $0xb0] sm:$0xff]
                %2431 = vst [vmem:[%s2385 + $0x150] sm:$0xff] %v2430
                %v2432 = vld [vmem:[%s2384 + $0xb8] sm:$0xff]
                %2433 = vst [vmem:[%s2385 + $0x158] sm:$0xff] %v2432
                %v2434 = vld [vmem:[%s2384 + $0xc0] sm:$0xff]
                %2435 = vst [vmem:[%s2385 + $0x180] sm:$0xff] %v2434
                %v2436 = vld [vmem:[%s2384 + $0xc8] sm:$0xff]
                %2437 = vst [vmem:[%s2385 + $0x188] sm:$0xff] %v2436
                %v2438 = vld [vmem:[%s2384 + $0xd0] sm:$0xff]
                %2439 = vst [vmem:[%s2385 + $0x190] sm:$0xff] %v2438
                %v2440 = vld [vmem:[%s2384 + $0xd8] sm:$0xff]
                %2441 = vst [vmem:[%s2385 + $0x198] sm:$0xff] %v2440
              $region84: #{run_prepared.1} parent=78 // loop_footer
                %s2383 = sadd.s32 1, %s2379
              $region85: #{run_prepared.1} parent=78 // loop_footer_branch
                %2378 = sbr.rel target = $region81
              $region86: #{run_prepared.1} parent=78 // loop_exit
                _
            $region79: #{run_prepared.1} parent=74 // pred_fallthru
              _
            // Predicated region
            $region87: #{run_prepared.1} parent=74 // pred_check
              _
            $region88: #{run_prepared.1} parent=74 // pred_check_branch
              %2443 = sbr.rel target = $region90
            $region89: #{run_prepared.1} parent=74 // pred_region
              _
            $region90: #{run_prepared.1} parent=74 // pred_fallthru
              _
          $region75: #{run_prepared.1} parent=70 // pred_fallthru
            _
          %2444 = vnop
        $region71: #{run_prepared.1} parent=58 // pred_fallthru
          _
      $region59: #{run_prepared.1} parent=5 // pred_fallthru
        _
      %p2445 = scmp.le.s32.totalorder 2, %s14
      // Predicated region
      $region91: #{run_prepared.1} parent=5 // pred_check
        %p2446 = pneg %p2445
      $region92: #{run_prepared.1} parent=5 // pred_check_branch
        %2448 = sbr.rel (%p2446) target = $region94
      $region93: #{run_prepared.1} parent=5 // pred_region
        %s2449 = ssub.s32 %s14, 2
        // Predicated region
        $region95: #{run_prepared.1} parent=93 // pred_check
          %p2450 = pneg %p168
        $region96: #{run_prepared.1} parent=93 // pred_check_branch
          %2452 = sbr.rel (%p2450) target = $region98
        $region97: #{run_prepared.1} parent=93 // pred_region
          %s2453 = sand.u32 %s153, 1
          %s2454 = sand.u32 %s153, 1
          %s2455 = smul.addr %s2454, 224
          %s2456 = scalar_lea.vmem [#allocation6], %s2455
        $region98: #{run_prepared.1} parent=93 // pred_fallthru
          _
      $region94: #{run_prepared.1} parent=5 // pred_fallthru
        _
    $region6: #{run_prepared.1} parent=1 // loop_footer
      %s18 = sadd.s32 1, %s14
    $region7: #{run_prepared.1} parent=1 // loop_footer_branch
      %13 = sbr.rel target = $region3
    $region8: #{run_prepared.1} parent=1 // loop_exit
      _
    %2457 = vsyncpa [#allocation4], 1
    %s2458 = scalar_lea.sflag [#allocation4], 1
    %2459 = vsyncpa %s2458, 1

</llo_original>
